<compile_context>
chip_gen: v5e
topology: v5e:2x2
jax: 0.10.0
libtpu: 0.0.40
codegen_flags: <defaults>
</compile_context>

<pallas_src>
import jax
import jax.numpy as jnp
from jax.experimental import pallas as pl
from jax.experimental.pallas import tpu as pltpu

# TODO(synk): AutoModelForCausalLM.from_pretrained(...) backbone is a checkpoint
# load with no clean Pallas equivalent; the kernel consumes synthetic
# "last hidden state" activations directly.

LN_EPS = 1e-5


def adapter_kernel(x_ref, w1_ref, b1_ref, w2_ref, b2_ref, g_ref, beta_ref, o_ref):
    # Hoist the small broadcast operands once (JAX does not CSE broadcasts).
    b1 = b1_ref[...]            # (1, H)  f32
    b2 = b2_ref[...]            # (1, P)  f32
    gamma = g_ref[...]          # (1, P)  f32
    beta = beta_ref[...]        # (1, P)  f32

    # In-kernel cast of the activation tile for the MXU (no wrapper-side HBM
    # round-trip); no-op if the upstream backbone already emits bf16.
    x_bf = x_ref[...].astype(jnp.bfloat16)

    # MLP: Linear -> ReLU -> Linear.  bf16 operands on the MXU fast path,
    # f32 accumulation; bias/ReLU/LayerNorm math stays f32 on the VPU.
    h = jnp.dot(x_bf, w1_ref[...], preferred_element_type=jnp.float32)
    h = jnp.maximum(h + b1, 0.0)                                   # (TM, H) f32
    y = jnp.dot(h.astype(jnp.bfloat16), w2_ref[...],
                preferred_element_type=jnp.float32) + b2           # (TM, P) f32

    # LayerNorm(y) over last dim (biased variance, matching torch.nn.LayerNorm),
    # fused with the residual add: out = y + (y - mean) * (inv * gamma) + beta.
    mean = jnp.mean(y, axis=-1, keepdims=True)
    yc = y - mean
    var = jnp.mean(yc * yc, axis=-1, keepdims=True)
    inv = jax.lax.rsqrt(var + LN_EPS)
    o_ref[...] = (y + yc * (inv * gamma) + beta).astype(o_ref.dtype)


def _round_up(x, m):
    return (x + m - 1) // m * m


def timer_adapter(x_bse, w1, b1, w2, b2, gamma, beta, *, tm=512, out_dtype=None):
    """x_bse: [B, S, E] activations; returns [B, S, P] (dtype = out_dtype or x dtype)."""
    B, S, E = x_bse.shape
    H = w1.shape[1]
    P = w2.shape[1]
    M = B * S
    out_dtype = x_bse.dtype if out_dtype is None else out_dtype

    # Row tile: keep it large (>=256 rows) so the MXU stays fed and the ~0.35us
    # per-step overhead is amortized, but prefer >= 4 grid steps when the row
    # count allows so each v7x TensorCore gets >= 2 steps of DMA/compute
    # overlap.  No padding: the last tile may be ragged (masked stores).
    tm = min(tm, _round_up(M, 8))
    if M >= 4 * 256 and pl.cdiv(M, tm) < 4:
        tm = max(256, _round_up(pl.cdiv(M, 4), 8))
    grid_m = pl.cdiv(M, tm)

    # x stays in its native dtype on HBM; the bf16 cast happens inside the
    # kernel on the tile (saves a full extra HBM round-trip of x).
    x2d = x_bse.reshape(M, E)

    # Weight casts are expected to be done once at parameter load (bf16 params
    # make these no-ops); kept here so the wrapper also accepts f32 params.
    w1_bf = w1.astype(jnp.bfloat16)
    w2_bf = w2.astype(jnp.bfloat16)
    b1_2d = b1.reshape(1, H).astype(jnp.float32)
    b2_2d = b2.reshape(1, P).astype(jnp.float32)
    g_2d = gamma.reshape(1, P).astype(jnp.float32)
    be_2d = beta.reshape(1, P).astype(jnp.float32)

    # Advisory cost estimate: two GEMMs dominate flops; HBM traffic is
    # x + resident weights/biases + output.
    bytes_accessed = (
        M * E * x2d.dtype.itemsize                    # activations
        + (E * H + H * P) * 2                         # bf16 weights
        + (H + 3 * P) * 4                             # f32 biases / gamma / beta
        + M * P * jnp.dtype(out_dtype).itemsize       # output
    )
    cost = pl.CostEstimate(
        flops=2 * M * E * H + 2 * M * H * P,
        transcendentals=M,                            # one rsqrt per row
        bytes_accessed=bytes_accessed,
    )

    out2d = pl.pallas_call(
        adapter_kernel,
        out_shape=jax.ShapeDtypeStruct((M, P), out_dtype),
        grid=(grid_m,),
        in_specs=[
            pl.BlockSpec((tm, E), lambda i: (i, 0)),   # x rows tile (native dtype)
            pl.BlockSpec((E, H), lambda i: (0, 0)),    # W1, resident (bf16)
            pl.BlockSpec((1, H), lambda i: (0, 0)),    # b1
            pl.BlockSpec((H, P), lambda i: (0, 0)),    # W2, resident (bf16)
            pl.BlockSpec((1, P), lambda i: (0, 0)),    # b2
            pl.BlockSpec((1, P), lambda i: (0, 0)),    # LN gamma
            pl.BlockSpec((1, P), lambda i: (0, 0)),    # LN beta
        ],
        out_specs=pl.BlockSpec((tm, P), lambda i: (i, 0)),  # P=128 lane-dense stores
        compiler_params=pltpu.CompilerParams(
            dimension_semantics=("parallel",),
            # ~6.5 MiB used at these sizes; 32 MiB keeps headroom and stays
            # within v5e's scoped default override and v7x's 64 MiB physical.
            vmem_limit_bytes=32 << 20,
        ),
        cost_estimate=cost,
    )(x2d, w1_bf, b1_2d, w2_bf, b2_2d, g_2d, be_2d)

    return out2d.reshape(B, S, P)


def reference_adapter(x, w1, b1, w2, b2, gamma, beta):
    h = jnp.maximum(x.astype(jnp.float32) @ w1 + b1, 0.0)
    y = h @ w2 + b2
    mean = jnp.mean(y, axis=-1, keepdims=True)
    var = jnp.mean((y - mean) ** 2, axis=-1, keepdims=True)
    ln = (y - mean) * jax.lax.rsqrt(var + LN_EPS) * gamma + beta
    return (y + ln).astype(x.dtype)


if __name__ == "__main__":
    # Shapes consistent with TimerEncoder (encoder_dim=1024 hard-coded) and
    # TimerAdapter(project_dim=128, hidden_dim=project_dim*2).
    B, S = 2, 512
    ENCODER_DIM = 1024
    PROJECT_DIM = 128
    HIDDEN_DIM = PROJECT_DIM * 2

    key = jax.random.PRNGKey(0)
    kx, k1, kb1, k2, kb2 = jax.random.split(key, 5)

    # Synthetic "last hidden state" from the (untranslated) backbone.
    x = jax.random.normal(kx, (B, S, ENCODER_DIM), dtype=jnp.float32)

    # Deterministic parameter init (Linear weights ~ N(0, 1/fan_in)).
    w1_f32 = jax.random.normal(k1, (ENCODER_DIM, HIDDEN_DIM), jnp.float32) / jnp.sqrt(ENCODER_DIM)
    b1 = jax.random.normal(kb1, (HIDDEN_DIM,), jnp.float32) * 0.01
    w2_f32 = jax.random.normal(k2, (HIDDEN_DIM, PROJECT_DIM), jnp.float32) / jnp.sqrt(HIDDEN_DIM)
    b2 = jax.random.normal(kb2, (PROJECT_DIM,), jnp.float32) * 0.01
    gamma = jnp.ones((PROJECT_DIM,), jnp.float32)
    beta = jnp.zeros((PROJECT_DIM,), jnp.float32)

    # Cast weights to bf16 once at "parameter load" (hoisted out of the call path).
    w1_p = w1_f32.astype(jnp.bfloat16)
    w2_p = w2_f32.astype(jnp.bfloat16)

    out = timer_adapter(x, w1_p, b1, w2_p, b2, gamma, beta)
    out = jax.block_until_ready(out)

    ref = reference_adapter(x, w1_f32, b1, w2_f32, b2, gamma, beta)
    assert out.shape == (B, S, PROJECT_DIM)
    # bf16 MXU operands vs f32 reference -> loosened tolerance (LN math is f32).
    assert jnp.allclose(out, ref, atol=5e-2, rtol=5e-2)

    print("KERNEL_OK")
</pallas_src>

<mosaic_0001>
module attributes {stable_mosaic.version = 11 : i64} {
  func.func @adapter_kernel(%arg0: i32, %arg1: memref<256x1024xf32, #tpu.memory_space<vmem>>, %arg2: memref<1024x256xbf16, #tpu.memory_space<vmem>>, %arg3: memref<1x256xf32, #tpu.memory_space<vmem>>, %arg4: memref<256x128xbf16, #tpu.memory_space<vmem>>, %arg5: memref<1x128xf32, #tpu.memory_space<vmem>>, %arg6: memref<1x128xf32, #tpu.memory_space<vmem>>, %arg7: memref<1x128xf32, #tpu.memory_space<vmem>>, %arg8: memref<256x128xf32, #tpu.memory_space<vmem>>) attributes {dimension_semantics = [#tpu.dimension_semantics<parallel>], iteration_bounds = array<i64: 4>, scalar_prefetch = 0 : i64, scratch_operands = 0 : i64, tpu.core_type = #tpu.core_type<tc>, window_params = [{transform_indices = @transform_0, window_bounds = array<i64: 256, 1024>}, {pipeline_mode = #tpu.pipeline_mode<synchronous>, transform_indices = @transform_1, window_bounds = array<i64: 1024, 256>}, {pipeline_mode = #tpu.pipeline_mode<synchronous>, transform_indices = @transform_2, window_bounds = array<i64: 1, 256>}, {pipeline_mode = #tpu.pipeline_mode<synchronous>, transform_indices = @transform_3, window_bounds = array<i64: 256, 128>}, {pipeline_mode = #tpu.pipeline_mode<synchronous>, transform_indices = @transform_4, window_bounds = array<i64: 1, 128>}, {pipeline_mode = #tpu.pipeline_mode<synchronous>, transform_indices = @transform_5, window_bounds = array<i64: 1, 128>}, {pipeline_mode = #tpu.pipeline_mode<synchronous>, transform_indices = @transform_6, window_bounds = array<i64: 1, 128>}, {transform_indices = @transform_7, window_bounds = array<i64: 256, 128>}]} {
    %c0 = arith.constant 0 : index
    %c0_0 = arith.constant 0 : index
    %0 = vector.load %arg3[%c0, %c0_0] : memref<1x256xf32, #tpu.memory_space<vmem>>, vector<1x256xf32>
    %c0_1 = arith.constant 0 : index
    %c0_2 = arith.constant 0 : index
    %1 = vector.load %arg5[%c0_1, %c0_2] : memref<1x128xf32, #tpu.memory_space<vmem>>, vector<1x128xf32>
    %c0_3 = arith.constant 0 : index
    %c0_4 = arith.constant 0 : index
    %2 = vector.load %arg6[%c0_3, %c0_4] : memref<1x128xf32, #tpu.memory_space<vmem>>, vector<1x128xf32>
    %c0_5 = arith.constant 0 : index
    %c0_6 = arith.constant 0 : index
    %3 = vector.load %arg7[%c0_5, %c0_6] : memref<1x128xf32, #tpu.memory_space<vmem>>, vector<1x128xf32>
    %c0_7 = arith.constant 0 : index
    %c0_8 = arith.constant 0 : index
    %4 = vector.load %arg1[%c0_7, %c0_8] : memref<256x1024xf32, #tpu.memory_space<vmem>>, vector<256x1024xf32>
    %5 = arith.truncf %4 : vector<256x1024xf32> to vector<256x1024xbf16>
    %c0_9 = arith.constant 0 : index
    %c0_10 = arith.constant 0 : index
    %6 = vector.load %arg2[%c0_9, %c0_10] : memref<1024x256xbf16, #tpu.memory_space<vmem>>, vector<1024x256xbf16>
    %cst = arith.constant dense<0.000000e+00> : vector<256x256xf32>
    %7 = tpu.matmul %5, %6, %cst {dimension_numbers = #tpu.dot_dimension_numbers<[1], [0], [0], [1], [0, 0, 1, 1], [], []>} : vector<256x1024xbf16>, vector<1024x256xbf16>, vector<256x256xf32> -> vector<256x256xf32>
    %8 = vector.broadcast %0 : vector<1x256xf32> to vector<256x256xf32>
    %9 = arith.addf %7, %8 : vector<256x256xf32>
    %cst_11 = arith.constant 0.000000e+00 : f32
    %10 = vector.broadcast %cst_11 : f32 to vector<256x256xf32>
    %11 = arith.maximumf %9, %10 : vector<256x256xf32>
    %12 = arith.truncf %11 : vector<256x256xf32> to vector<256x256xbf16>
    %c0_12 = arith.constant 0 : index
    %c0_13 = arith.constant 0 : index
    %13 = vector.load %arg4[%c0_12, %c0_13] : memref<256x128xbf16, #tpu.memory_space<vmem>>, vector<256x128xbf16>
    %cst_14 = arith.constant dense<0.000000e+00> : vector<256x128xf32>
    %14 = tpu.matmul %12, %13, %cst_14 {dimension_numbers = #tpu.dot_dimension_numbers<[1], [0], [0], [1], [0, 0, 1, 1], [], []>} : vector<256x256xbf16>, vector<256x128xbf16>, vector<256x128xf32> -> vector<256x128xf32>
    %15 = vector.broadcast %1 : vector<1x128xf32> to vector<256x128xf32>
    %16 = arith.addf %14, %15 : vector<256x128xf32>
    %cst_15 = arith.constant dense<0.000000e+00> : vector<256xf32>
    %17 = vector.multi_reduction <add>, %16, %cst_15 [1] : vector<256x128xf32> to vector<256xf32>
    %18 = vector.shape_cast %17 : vector<256xf32> to vector<256x1xf32>
    %cst_16 = arith.constant 1.280000e+02 : f32
    %19 = vector.broadcast %cst_16 : f32 to vector<256x1xf32>
    %20 = arith.divf %18, %19 : vector<256x1xf32>
    %21 = vector.broadcast %20 : vector<256x1xf32> to vector<256x128xf32>
    %22 = arith.subf %16, %21 : vector<256x128xf32>
    %23 = arith.mulf %22, %22 : vector<256x128xf32>
    %cst_17 = arith.constant dense<0.000000e+00> : vector<256xf32>
    %24 = vector.multi_reduction <add>, %23, %cst_17 [1] : vector<256x128xf32> to vector<256xf32>
    %25 = vector.shape_cast %24 : vector<256xf32> to vector<256x1xf32>
    %cst_18 = arith.constant 1.280000e+02 : f32
    %26 = vector.broadcast %cst_18 : f32 to vector<256x1xf32>
    %27 = arith.divf %25, %26 : vector<256x1xf32>
    %cst_19 = arith.constant 9.99999974E-6 : f32
    %28 = vector.broadcast %cst_19 : f32 to vector<256x1xf32>
    %29 = arith.addf %27, %28 : vector<256x1xf32>
    %30 = math.rsqrt %29 : vector<256x1xf32>
    %31 = vector.broadcast %30 : vector<256x1xf32> to vector<256x128xf32>
    %32 = vector.broadcast %2 : vector<1x128xf32> to vector<256x128xf32>
    %33 = arith.mulf %31, %32 : vector<256x128xf32>
    %34 = arith.mulf %22, %33 : vector<256x128xf32>
    %35 = arith.addf %16, %34 : vector<256x128xf32>
    %36 = vector.broadcast %3 : vector<1x128xf32> to vector<256x128xf32>
    %37 = arith.addf %35, %36 : vector<256x128xf32>
    %c0_20 = arith.constant 0 : index
    %c0_21 = arith.constant 0 : index
    %38 = vector.load %arg8[%c0_20, %c0_21] : memref<256x128xf32, #tpu.memory_space<vmem>>, vector<256x128xf32>
    tpu.vector_store %arg8[%c0_20, %c0_21], %37 {strides = array<i32>} : memref<256x128xf32, #tpu.memory_space<vmem>>, vector<256x128xf32>,
    return
  }
  func.func @transform_0(%arg0: i32) -> (i32, i32) {
    %c0_i32 = arith.constant 0 : i32
    %c0_i32_0 = arith.constant 0 : i32
    return %arg0, %c0_i32 : i32, i32
  }
  func.func @transform_1(%arg0: i32) -> (i32, i32) {
    %c0_i32 = arith.constant 0 : i32
    %c0_i32_0 = arith.constant 0 : i32
    %c0_i32_1 = arith.constant 0 : i32
    return %c0_i32, %c0_i32_0 : i32, i32
  }
  func.func @transform_2(%arg0: i32) -> (i32, i32) {
    %c0_i32 = arith.constant 0 : i32
    %c0_i32_0 = arith.constant 0 : i32
    %c0_i32_1 = arith.constant 0 : i32
    return %c0_i32, %c0_i32_0 : i32, i32
  }
  func.func @transform_3(%arg0: i32) -> (i32, i32) {
    %c0_i32 = arith.constant 0 : i32
    %c0_i32_0 = arith.constant 0 : i32
    %c0_i32_1 = arith.constant 0 : i32
    return %c0_i32, %c0_i32_0 : i32, i32
  }
  func.func @transform_4(%arg0: i32) -> (i32, i32) {
    %c0_i32 = arith.constant 0 : i32
    %c0_i32_0 = arith.constant 0 : i32
    %c0_i32_1 = arith.constant 0 : i32
    return %c0_i32, %c0_i32_0 : i32, i32
  }
  func.func @transform_5(%arg0: i32) -> (i32, i32) {
    %c0_i32 = arith.constant 0 : i32
    %c0_i32_0 = arith.constant 0 : i32
    %c0_i32_1 = arith.constant 0 : i32
    return %c0_i32, %c0_i32_0 : i32, i32
  }
  func.func @transform_6(%arg0: i32) -> (i32, i32) {
    %c0_i32 = arith.constant 0 : i32
    %c0_i32_0 = arith.constant 0 : i32
    %c0_i32_1 = arith.constant 0 : i32
    return %c0_i32, %c0_i32_0 : i32, i32
  }
  func.func @transform_7(%arg0: i32) -> (i32, i32) {
    %c0_i32 = arith.constant 0 : i32
    %c0_i32_0 = arith.constant 0 : i32
    return %arg0, %c0_i32 : i32, i32
  }
}

</mosaic_0001>

<llo_original>
// kernel: tpu_custom_call.1
$region0: #{tpu_custom_call.1}
  #allocation0 [shape = 'u32[]', space=smem, size = 0x4, offset = 0x4, fixed_abs, tag = 'smem constant byte address 0x4 - core index']
  #allocation1 [shape = 'u32[72,128]{1,0:T(1,128)}', space=vmem, size = 0x9000, scoped, tag = 'internal scratch']
  %s0 = inlined_call_operand.hbm [shape: f32[1024,1024], index: 0, kind: input, shape index: {}]
  %s1 = inlined_call_operand.hbm [shape: bf16[1024,256], index: 1, kind: input, shape index: {}]
  %s2 = inlined_call_operand.hbm [shape: f32[1,256], index: 2, kind: input, shape index: {}]
  %s3 = inlined_call_operand.hbm [shape: bf16[256,128], index: 3, kind: input, shape index: {}]
  %s4 = inlined_call_operand.hbm [shape: f32[1,128], index: 4, kind: input, shape index: {}]
  %s5 = inlined_call_operand.hbm [shape: f32[1,128], index: 5, kind: input, shape index: {}]
  %s6 = inlined_call_operand.hbm [shape: f32[1,128], index: 6, kind: input, shape index: {}]
  %s7 = inlined_call_operand.hbm [shape: f32[1024,128], index: 7, kind: output, shape index: {}]
  %s8 = sld [smem:[#allocation0]]
  $region89: #{tpu_custom_call.1} parent=0
    _
  %s10 = ssub.s32 1, %s8
  %s11 = scalar_select 0, %s10, %s8
  $region1: #{tpu_custom_call.1} parent=0
    #allocation2 [shape = 'u8[2097152]{0}', space=vmem, size = 0x200000, scoped, tag = 'input window, operand 0']
    #allocation3 [shape = 's32[2]{0}', space=sflag, size = 0x8, scoped, tag = 'scoped memory for tpu_custom_call.1']
    #allocation4 [shape = 's32[2]{0}', space=sflag, size = 0x8, scoped, tag = 'scoped memory for tpu_custom_call.1']
    #allocation5 [shape = 'u8[524288]{0}', space=vmem, size = 0x80000, scoped, tag = 'input window, operand 1, single buffered']
    #allocation6 [shape = 's32[1]{0}', space=sflag, size = 0x4, scoped, tag = 'scoped memory for tpu_custom_call.1']
    #allocation7 [shape = 'u8[1024]{0}', space=vmem, size = 0x400, scoped, tag = 'input window, operand 2, single buffered']
    #allocation8 [shape = 'u8[65536]{0}', space=vmem, size = 0x10000, scoped, tag = 'input window, operand 3, single buffered']
    #allocation9 [shape = 's32[1]{0}', space=sflag, size = 0x4, scoped, tag = 'scoped memory for tpu_custom_call.1']
    #allocation10 [shape = 'u8[512]{0}', space=vmem, size = 0x400, scoped, tag = 'input window, operand 4, single buffered']
    #allocation11 [shape = 'u8[512]{0}', space=vmem, size = 0x400, scoped, tag = 'input window, operand 5, single buffered']
    #allocation12 [shape = 's32[1]{0}', space=sflag, size = 0x4, scoped, tag = 'scoped memory for tpu_custom_call.1']
    #allocation13 [shape = 'u8[512]{0}', space=vmem, size = 0x400, scoped, tag = 'input window, operand 6, single buffered']
    #allocation14 [shape = 'u8[262144]{0}', space=vmem, size = 0x40000, scoped, tag = 'output window, operand 0']
    %12 = vsyncpa [#allocation3], 0
    %s13 = scalar_lea.sflag [#allocation3], 1
    %14 = vsyncpa %s13, 0
    %15 = vsyncpa [#allocation6], 0
    %16 = vsyncpa [#allocation9], 0
    %17 = vsyncpa [#allocation12], 0
    %18 = vsyncpa [#allocation4], 0
    %s19 = scalar_lea.sflag [#allocation4], 1
    %20 = vsyncpa %s19, 0
    loop: start=0, step=1, limit=6
    $region2: #{tpu_custom_call.1} parent=1 // loop_pre_header
      _
    $region3: #{tpu_custom_call.1} parent=1 // loop_header
      %s22 = sphi 0, %s26
      %p23 = scmp.ge.s32.totalorder %s22, 6
      %s32 = sphi 0, %s34
      %s35 = sphi 0, %s32
      %s36 = sphi 0, %s35
      %s52 = sphi 0, %s36
      %s56 = sphi 0, %s56
      %s58 = sphi 0, %s56
      %s59 = sphi 0, %s58
      %s73 = sphi 0, %s59
      %s77 = sphi 0, %s77
      %s79 = sphi 0, %s77
      %s80 = sphi 0, %s79
      %s94 = sphi 0, %s80
      %s98 = sphi 0, %s98
      %s100 = sphi 0, %s98
      %s101 = sphi 0, %s100
      %s115 = sphi 0, %s101
      %s119 = sphi 0, %s119
      %s121 = sphi 0, %s119
      %s122 = sphi 0, %s121
      %s136 = sphi 0, %s122
      %s140 = sphi 0, %s140
      %s142 = sphi 0, %s140
      %s143 = sphi 0, %s142
      %s157 = sphi 0, %s143
      %s161 = sphi 0, %s161
      %s163 = sphi 0, %s161
      %s164 = sphi 0, %s163
      %s178 = sphi 0, %s164
      %s184 = sphi 0, %s186
      %s187 = sphi 0, %s184
      %s188 = sphi 0, %s187
      %s204 = sphi 0, %s188
    $region4: #{tpu_custom_call.1} parent=1 // loop_header_branch
      %25 = sbr.rel (%p23) target = $region8
    $region5: #{tpu_custom_call.1} parent=1 // loop_body
      %s27 = ssub.s32 %s22, 1
      %s28 = ssub.s32 %s22, 2
      %s29 = sadd.s32 %s22, 1
      %s30 = ssub.s32 %s22, %s29
      %p31 = scmp.eq.s32.totalorder %s30, 0
      %s33 = sadd.s32 %s32, 1
      %s34 = scalar_select %p31, %s32, %s33
      %p37 = pneg %p31
      %p38 = scmp.eq.s32.totalorder %s22, 3
      %p39 = por %p37, %p38
      %p40 = scmp.ne.s32.totalorder %s32, %s35
      %p41 = scmp.eq.s32.totalorder %s22, 0
      %p42 = por %p40, %p41
      %p43 = scmp.ne.s32.totalorder %s32, %s35
      %p44 = scmp.eq.s32.totalorder %s27, 3
      %p45 = por %p43, %p44
      %p46 = scmp.ne.s32.totalorder %s35, %s36
      %p47 = scmp.eq.s32.totalorder %s27, 0
      %p48 = por %p46, %p47
      %p49 = scmp.ne.s32.totalorder %s35, %s36
      %p50 = scmp.eq.s32.totalorder %s28, 3
      %p51 = por %p49, %p50
      %p53 = scmp.ne.s32.totalorder %s36, %s52
      %p54 = scmp.eq.s32.totalorder %s28, 0
      %p55 = por %p53, %p54
      %s57 = sadd.s32 %s56, 1
      %p60 = scmp.eq.s32.totalorder %s22, 3
      %p61 = scmp.ne.s32.totalorder %s56, %s58
      %p62 = scmp.eq.s32.totalorder %s22, 0
      %p63 = por %p61, %p62
      %p64 = scmp.ne.s32.totalorder %s56, %s58
      %p65 = scmp.eq.s32.totalorder %s27, 3
      %p66 = por %p64, %p65
      %p67 = scmp.ne.s32.totalorder %s58, %s59
      %p68 = scmp.eq.s32.totalorder %s27, 0
      %p69 = por %p67, %p68
      %p70 = scmp.ne.s32.totalorder %s58, %s59
      %p71 = scmp.eq.s32.totalorder %s28, 3
      %p72 = por %p70, %p71
      %p74 = scmp.ne.s32.totalorder %s59, %s73
      %p75 = scmp.eq.s32.totalorder %s28, 0
      %p76 = por %p74, %p75
      %s78 = sadd.s32 %s77, 1
      %p81 = scmp.eq.s32.totalorder %s22, 3
      %p82 = scmp.ne.s32.totalorder %s77, %s79
      %p83 = scmp.eq.s32.totalorder %s22, 0
      %p84 = por %p82, %p83
      %p85 = scmp.ne.s32.totalorder %s77, %s79
      %p86 = scmp.eq.s32.totalorder %s27, 3
      %p87 = por %p85, %p86
      %p88 = scmp.ne.s32.totalorder %s79, %s80
      %p89 = scmp.eq.s32.totalorder %s27, 0
      %p90 = por %p88, %p89
      %p91 = scmp.ne.s32.totalorder %s79, %s80
      %p92 = scmp.eq.s32.totalorder %s28, 3
      %p93 = por %p91, %p92
      %p95 = scmp.ne.s32.totalorder %s80, %s94
      %p96 = scmp.eq.s32.totalorder %s28, 0
      %p97 = por %p95, %p96
      %s99 = sadd.s32 %s98, 1
      %p102 = scmp.eq.s32.totalorder %s22, 3
      %p103 = scmp.ne.s32.totalorder %s98, %s100
      %p104 = scmp.eq.s32.totalorder %s22, 0
      %p105 = por %p103, %p104
      %p106 = scmp.ne.s32.totalorder %s98, %s100
      %p107 = scmp.eq.s32.totalorder %s27, 3
      %p108 = por %p106, %p107
      %p109 = scmp.ne.s32.totalorder %s100, %s101
      %p110 = scmp.eq.s32.totalorder %s27, 0
      %p111 = por %p109, %p110
      %p112 = scmp.ne.s32.totalorder %s100, %s101
      %p113 = scmp.eq.s32.totalorder %s28, 3
      %p114 = por %p112, %p113
      %p116 = scmp.ne.s32.totalorder %s101, %s115
      %p117 = scmp.eq.s32.totalorder %s28, 0
      %p118 = por %p116, %p117
      %s120 = sadd.s32 %s119, 1
      %p123 = scmp.eq.s32.totalorder %s22, 3
      %p124 = scmp.ne.s32.totalorder %s119, %s121
      %p125 = scmp.eq.s32.totalorder %s22, 0
      %p126 = por %p124, %p125
      %p127 = scmp.ne.s32.totalorder %s119, %s121
      %p128 = scmp.eq.s32.totalorder %s27, 3
      %p129 = por %p127, %p128
      %p130 = scmp.ne.s32.totalorder %s121, %s122
      %p131 = scmp.eq.s32.totalorder %s27, 0
      %p132 = por %p130, %p131
      %p133 = scmp.ne.s32.totalorder %s121, %s122
      %p134 = scmp.eq.s32.totalorder %s28, 3
      %p135 = por %p133, %p134
      %p137 = scmp.ne.s32.totalorder %s122, %s136
      %p138 = scmp.eq.s32.totalorder %s28, 0
      %p139 = por %p137, %p138
      %s141 = sadd.s32 %s140, 1
      %p144 = scmp.eq.s32.totalorder %s22, 3
      %p145 = scmp.ne.s32.totalorder %s140, %s142
      %p146 = scmp.eq.s32.totalorder %s22, 0
      %p147 = por %p145, %p146
      %p148 = scmp.ne.s32.totalorder %s140, %s142
      %p149 = scmp.eq.s32.totalorder %s27, 3
      %p150 = por %p148, %p149
      %p151 = scmp.ne.s32.totalorder %s142, %s143
      %p152 = scmp.eq.s32.totalorder %s27, 0
      %p153 = por %p151, %p152
      %p154 = scmp.ne.s32.totalorder %s142, %s143
      %p155 = scmp.eq.s32.totalorder %s28, 3
      %p156 = por %p154, %p155
      %p158 = scmp.ne.s32.totalorder %s143, %s157
      %p159 = scmp.eq.s32.totalorder %s28, 0
      %p160 = por %p158, %p159
      %s162 = sadd.s32 %s161, 1
      %p165 = scmp.eq.s32.totalorder %s22, 3
      %p166 = scmp.ne.s32.totalorder %s161, %s163
      %p167 = scmp.eq.s32.totalorder %s22, 0
      %p168 = por %p166, %p167
      %p169 = scmp.ne.s32.totalorder %s161, %s163
      %p170 = scmp.eq.s32.totalorder %s27, 3
      %p171 = por %p169, %p170
      %p172 = scmp.ne.s32.totalorder %s163, %s164
      %p173 = scmp.eq.s32.totalorder %s27, 0
      %p174 = por %p172, %p173
      %p175 = scmp.ne.s32.totalorder %s163, %s164
      %p176 = scmp.eq.s32.totalorder %s28, 3
      %p177 = por %p175, %p176
      %p179 = scmp.ne.s32.totalorder %s164, %s178
      %p180 = scmp.eq.s32.totalorder %s28, 0
      %p181 = por %p179, %p180
      %s182 = ssub.s32 %s22, %s29
      %p183 = scmp.eq.s32.totalorder %s182, 0
      %s185 = sadd.s32 %s184, 1
      %s186 = scalar_select %p183, %s184, %s185
      %p189 = pneg %p183
      %p190 = scmp.eq.s32.totalorder %s22, 3
      %p191 = por %p189, %p190
      %p192 = scmp.ne.s32.totalorder %s184, %s187
      %p193 = scmp.eq.s32.totalorder %s22, 0
      %p194 = por %p192, %p193
      %p195 = scmp.ne.s32.totalorder %s184, %s187
      %p196 = scmp.eq.s32.totalorder %s27, 3
      %p197 = por %p195, %p196
      %p198 = scmp.ne.s32.totalorder %s187, %s188
      %p199 = scmp.eq.s32.totalorder %s27, 0
      %p200 = por %p198, %p199
      %p201 = scmp.ne.s32.totalorder %s187, %s188
      %p202 = scmp.eq.s32.totalorder %s28, 3
      %p203 = por %p201, %p202
      %p205 = scmp.ne.s32.totalorder %s188, %s204
      %p206 = scmp.eq.s32.totalorder %s28, 0
      %p207 = por %p205, %p206
      %p208 = scmp.le.s32.totalorder 1, %s22
      %p209 = scmp.lt.s32.totalorder %s22, 5
      %p210 = pnand %p208, %p209
      %p211 = pneg %p210
      // Predicated region
      $region9: #{tpu_custom_call.1} parent=5 // pred_check
        _
      $region10: #{tpu_custom_call.1} parent=5 // pred_check_branch
        %213 = sbr.rel (%p210) target = $region12
      $region11: #{tpu_custom_call.1} parent=5 // pred_region
        %s214 = ssub.s32 %s22, 1
        // Predicated region
        $region13: #{tpu_custom_call.1} parent=11 // pred_check
          %p215 = pneg %p69
        $region14: #{tpu_custom_call.1} parent=11 // pred_check_branch
          %217 = sbr.rel (%p215) target = $region16
        $region15: #{tpu_custom_call.1} parent=11 // pred_region
          %219 = vsyncadd [#allocation6], 0
          %s220 = sshll.u32 %s1, 4
          %s221 = int_to_ptr.hbm [resolvable:$true] %s220
          %s222 = sshll.u32 [#allocation5], 4
          %s223 = int_to_ptr.vmem [resolvable:$true] %s222
          %228 = dma.hbm_to_vmem [thread:$0]  %s221, 16384, %s223, [#allocation6], 128, 128, 8
        $region16: #{tpu_custom_call.1} parent=11 // pred_fallthru
          _
        // Predicated region
        $region17: #{tpu_custom_call.1} parent=11 // pred_check
          %p229 = pneg %p90
        $region18: #{tpu_custom_call.1} parent=11 // pred_check_branch
          %231 = sbr.rel (%p229) target = $region20
        $region19: #{tpu_custom_call.1} parent=11 // pred_region
          %233 = vsyncadd [#allocation6], 0
          %s235 = sshll.u32 %s2, 4
          %s236 = int_to_ptr.hbm [resolvable:$true] %s235
          %s237 = sshll.u32 [#allocation7], 4
          %s238 = int_to_ptr.vmem [resolvable:$true] %s237
          %240 = dma.hbm_to_vmem [thread:$0]  %s236, 32, %s238, [#allocation6]
        $region20: #{tpu_custom_call.1} parent=11 // pred_fallthru
          _
        // Predicated region
        $region21: #{tpu_custom_call.1} parent=11 // pred_check
          %p241 = pneg %p111
        $region22: #{tpu_custom_call.1} parent=11 // pred_check_branch
          %243 = sbr.rel (%p241) target = $region24
        $region23: #{tpu_custom_call.1} parent=11 // pred_region
          %245 = vsyncadd [#allocation9], 0
          %s246 = sshll.u32 %s3, 4
          %s247 = int_to_ptr.hbm [resolvable:$true] %s246
          %s248 = sshll.u32 [#allocation8], 4
          %s249 = int_to_ptr.vmem [resolvable:$true] %s248
          %254 = dma.hbm_to_vmem [thread:$0]  %s247, 2048, %s249, [#allocation9], 64, 64, 4
        $region24: #{tpu_custom_call.1} parent=11 // pred_fallthru
          _
        // Predicated region
        $region25: #{tpu_custom_call.1} parent=11 // pred_check
          %p255 = pneg %p132
        $region26: #{tpu_custom_call.1} parent=11 // pred_check_branch
          %257 = sbr.rel (%p255) target = $region28
        $region27: #{tpu_custom_call.1} parent=11 // pred_region
          %259 = vsyncadd [#allocation9], 0
          %s261 = sshll.u32 %s4, 4
          %s262 = int_to_ptr.hbm [resolvable:$true] %s261
          %s263 = sshll.u32 [#allocation10], 4
          %s264 = int_to_ptr.vmem [resolvable:$true] %s263
          %266 = dma.hbm_to_vmem [thread:$0]  %s262, 16, %s264, [#allocation9]
        $region28: #{tpu_custom_call.1} parent=11 // pred_fallthru
          _
        // Predicated region
        $region29: #{tpu_custom_call.1} parent=11 // pred_check
          %p267 = pneg %p153
        $region30: #{tpu_custom_call.1} parent=11 // pred_check_branch
          %269 = sbr.rel (%p267) target = $region32
        $region31: #{tpu_custom_call.1} parent=11 // pred_region
          %271 = vsyncadd [#allocation12], 0
          %s273 = sshll.u32 %s5, 4
          %s274 = int_to_ptr.hbm [resolvable:$true] %s273
          %s275 = sshll.u32 [#allocation11], 4
          %s276 = int_to_ptr.vmem [resolvable:$true] %s275
          %278 = dma.hbm_to_vmem [thread:$0]  %s274, 16, %s276, [#allocation12]
        $region32: #{tpu_custom_call.1} parent=11 // pred_fallthru
          _
        // Predicated region
        $region33: #{tpu_custom_call.1} parent=11 // pred_check
          %p279 = pneg %p174
        $region34: #{tpu_custom_call.1} parent=11 // pred_check_branch
          %281 = sbr.rel (%p279) target = $region36
        $region35: #{tpu_custom_call.1} parent=11 // pred_region
          %283 = vsyncadd [#allocation12], 0
          %s285 = sshll.u32 %s6, 4
          %s286 = int_to_ptr.hbm [resolvable:$true] %s285
          %s287 = sshll.u32 [#allocation13], 4
          %s288 = int_to_ptr.vmem [resolvable:$true] %s287
          %290 = dma.hbm_to_vmem [thread:$0]  %s286, 16, %s288, [#allocation12]
        $region36: #{tpu_custom_call.1} parent=11 // pred_fallthru
          _
      $region12: #{tpu_custom_call.1} parent=5 // pred_fallthru
        _
      %p291 = scmp.lt.s32.totalorder %s22, 4
      // Predicated region
      $region37: #{tpu_custom_call.1} parent=5 // pred_check
        %p292 = pneg %p291
      $region38: #{tpu_custom_call.1} parent=5 // pred_check_branch
        %294 = sbr.rel (%p292) target = $region40
      $region39: #{tpu_custom_call.1} parent=5 // pred_region
        // Predicated region
        $region41: #{tpu_custom_call.1} parent=39 // pred_check
          %p295 = pneg %p42
        $region42: #{tpu_custom_call.1} parent=39 // pred_check_branch
          %297 = sbr.rel (%p295) target = $region44
        $region43: #{tpu_custom_call.1} parent=39 // pred_region
          %s298 = sand.u32 %s32, 1
          %s299 = scalar_lea.sflag [#allocation3], %s298
          %s300 = sand.u32 %s32, 1
          %s301 = smul.addr %s300, 2048
          %s302 = scalar_lea.vmem [#allocation2], %s301
          %s303 = smul.u32 32, %s22
          %305 = vsyncadd %s299, 0
          %s306 = smul.addr %s303, 8
          %s307 = smul.addr %s306, 8
          %s308 = scalar_lea.hbm %s0, %s307
          %s309 = sshll.u32 %s308, 4
          %s310 = int_to_ptr.hbm [resolvable:$true] %s309
          %s311 = sshll.u32 %s302, 4
          %s312 = int_to_ptr.vmem [resolvable:$true] %s311
          %317 = dma.hbm_to_vmem [thread:$0]  %s310, 32768, %s312, %s299, 1024, 1024, 64
        $region44: #{tpu_custom_call.1} parent=39 // pred_fallthru
          _
      $region40: #{tpu_custom_call.1} parent=5 // pred_fallthru
        _
      %p318 = scmp.le.s32.totalorder 1, %s22
      %p319 = scmp.lt.s32.totalorder %s22, 5
      %p320 = pnand %p318, %p319
      %p321 = pneg %p320
      // Predicated region
      $region45: #{tpu_custom_call.1} parent=5 // pred_check
        _
      $region46: #{tpu_custom_call.1} parent=5 // pred_check_branch
        %323 = sbr.rel (%p320) target = $region48
      $region47: #{tpu_custom_call.1} parent=5 // pred_region
        %s324 = ssub.s32 %s22, 1
        %s325 = sand.u32 %s35, 1
        %s326 = scalar_lea.sflag [#allocation3], %s325
        %s327 = sand.u32 %s35, 1
        %s328 = smul.addr %s327, 2048
        %s329 = scalar_lea.vmem [#allocation2], %s328
        // Predicated region
        $region49: #{tpu_custom_call.1} parent=47 // pred_check
          %p330 = pneg %p48
        $region50: #{tpu_custom_call.1} parent=47 // pred_check_branch
          %332 = sbr.rel (%p330) target = $region52
        $region51: #{tpu_custom_call.1} parent=47 // pred_region
          %334 = dma.done %s326, 32768
        $region52: #{tpu_custom_call.1} parent=47 // pred_fallthru
          _
        // Predicated region
        $region53: #{tpu_custom_call.1} parent=47 // pred_check
          %p335 = pneg %p69
        $region54: #{tpu_custom_call.1} parent=47 // pred_check_branch
          %337 = sbr.rel (%p335) target = $region56
        $region55: #{tpu_custom_call.1} parent=47 // pred_region
          %339 = dma.done [#allocation6], 16384
        $region56: #{tpu_custom_call.1} parent=47 // pred_fallthru
          _
        // Predicated region
        $region57: #{tpu_custom_call.1} parent=47 // pred_check
          %p340 = pneg %p90
        $region58: #{tpu_custom_call.1} parent=47 // pred_check_branch
          %342 = sbr.rel (%p340) target = $region60
        $region59: #{tpu_custom_call.1} parent=47 // pred_region
          %344 = dma.done [#allocation6], 32
        $region60: #{tpu_custom_call.1} parent=47 // pred_fallthru
          _
        // Predicated region
        $region61: #{tpu_custom_call.1} parent=47 // pred_check
          %p345 = pneg %p111
        $region62: #{tpu_custom_call.1} parent=47 // pred_check_branch
          %347 = sbr.rel (%p345) target = $region64
        $region63: #{tpu_custom_call.1} parent=47 // pred_region
          %349 = dma.done [#allocation9], 2048
        $region64: #{tpu_custom_call.1} parent=47 // pred_fallthru
          _
        // Predicated region
        $region65: #{tpu_custom_call.1} parent=47 // pred_check
          %p350 = pneg %p132
        $region66: #{tpu_custom_call.1} parent=47 // pred_check_branch
          %352 = sbr.rel (%p350) target = $region68
        $region67: #{tpu_custom_call.1} parent=47 // pred_region
          %354 = dma.done [#allocation9], 16
        $region68: #{tpu_custom_call.1} parent=47 // pred_fallthru
          _
        // Predicated region
        $region69: #{tpu_custom_call.1} parent=47 // pred_check
          %p355 = pneg %p153
        $region70: #{tpu_custom_call.1} parent=47 // pred_check_branch
          %357 = sbr.rel (%p355) target = $region72
        $region71: #{tpu_custom_call.1} parent=47 // pred_region
          %359 = dma.done [#allocation12], 16
        $region72: #{tpu_custom_call.1} parent=47 // pred_fallthru
          _
        // Predicated region
        $region73: #{tpu_custom_call.1} parent=47 // pred_check
          %p360 = pneg %p174
        $region74: #{tpu_custom_call.1} parent=47 // pred_check_branch
          %362 = sbr.rel (%p360) target = $region76
        $region75: #{tpu_custom_call.1} parent=47 // pred_region
          %364 = dma.done [#allocation12], 16
        $region76: #{tpu_custom_call.1} parent=47 // pred_fallthru
          _
        %s365 = sand.u32 %s35, 1
        %s366 = scalar_lea.sflag [#allocation3], %s365
        %s367 = sand.u32 %s35, 1
        %s368 = smul.addr %s367, 2048
        %s369 = scalar_lea.vmem [#allocation2], %s368
        %p370 = pneg %p48
        %p371 = pneg %p45
        %p372 = pneg %p69
        %p373 = pneg %p66
        %p374 = pneg %p90
        %p375 = pneg %p87
        %p376 = pneg %p111
        %p377 = pneg %p108
        %p378 = pneg %p132
        %p379 = pneg %p129
        %p380 = pneg %p153
        %p381 = pneg %p150
        %p382 = pneg %p174
        %p383 = pneg %p171
        %p384 = pneg %p200
        %p385 = pneg %p197
        %s386 = sand.u32 %s187, 1
        %s387 = scalar_lea.sflag [#allocation4], %s386
        %s388 = sand.u32 %s187, 1
        %s389 = smul.addr %s388, 256
        %s390 = scalar_lea.vmem [#allocation14], %s389
        %s391 = smul.u32 32, %s27
        %s392 = smul.u32 32, %s27
        %v393 = vld [vmem:[#allocation7] sm:$0x3]
        %v394 = vld [vmem:[#allocation10] sm:$0x1]
        %v395 = vld [vmem:[#allocation11] sm:$0x1]
        %v396 = vld [vmem:[#allocation13] sm:$0x1]
        %v397 = vld [vmem:[%s329] sm:$0xff]
        %v398 = vld [vmem:[%s329 + $0x8] sm:$0xff]
        %v399 = vld [vmem:[%s329 + $0x10] sm:$0xff]
        %v400 = vld [vmem:[%s329 + $0x18] sm:$0xff]
        %v401 = vld [vmem:[%s329 + $0x20] sm:$0xff]
        %v402 = vld [vmem:[%s329 + $0x28] sm:$0xff]
        %v403 = vld [vmem:[%s329 + $0x30] sm:$0xff]
        %v404 = vld [vmem:[%s329 + $0x38] sm:$0xff]
        %v405 = vld [vmem:[%s329 + $0x40] sm:$0xff]
        %v406 = vld [vmem:[%s329 + $0x48] sm:$0xff]
        %v407 = vld [vmem:[%s329 + $0x50] sm:$0xff]
        %v408 = vld [vmem:[%s329 + $0x58] sm:$0xff]
        %v409 = vld [vmem:[%s329 + $0x60] sm:$0xff]
        %v410 = vld [vmem:[%s329 + $0x68] sm:$0xff]
        %v411 = vld [vmem:[%s329 + $0x70] sm:$0xff]
        %v412 = vld [vmem:[%s329 + $0x78] sm:$0xff]
        %v413 = vld [vmem:[%s329 + $0x80] sm:$0xff]
        %v414 = vld [vmem:[%s329 + $0x88] sm:$0xff]
        %v415 = vld [vmem:[%s329 + $0x90] sm:$0xff]
        %v416 = vld [vmem:[%s329 + $0x98] sm:$0xff]
        %v417 = vld [vmem:[%s329 + $0xa0] sm:$0xff]
        %v418 = vld [vmem:[%s329 + $0xa8] sm:$0xff]
        %v419 = vld [vmem:[%s329 + $0xb0] sm:$0xff]
        %v420 = vld [vmem:[%s329 + $0xb8] sm:$0xff]
        %v421 = vld [vmem:[%s329 + $0xc0] sm:$0xff]
        %v422 = vld [vmem:[%s329 + $0xc8] sm:$0xff]
        %v423 = vld [vmem:[%s329 + $0xd0] sm:$0xff]
        %v424 = vld [vmem:[%s329 + $0xd8] sm:$0xff]
        %v425 = vld [vmem:[%s329 + $0xe0] sm:$0xff]
        %v426 = vld [vmem:[%s329 + $0xe8] sm:$0xff]
        %v427 = vld [vmem:[%s329 + $0xf0] sm:$0xff]
        %v428 = vld [vmem:[%s329 + $0xf8] sm:$0xff]
        %v429 = vld [vmem:[%s329 + $0x100] sm:$0xff]
        %v430 = vld [vmem:[%s329 + $0x108] sm:$0xff]
        %v431 = vld [vmem:[%s329 + $0x110] sm:$0xff]
        %v432 = vld [vmem:[%s329 + $0x118] sm:$0xff]
        %v433 = vld [vmem:[%s329 + $0x120] sm:$0xff]
        %v434 = vld [vmem:[%s329 + $0x128] sm:$0xff]
        %v435 = vld [vmem:[%s329 + $0x130] sm:$0xff]
        %v436 = vld [vmem:[%s329 + $0x138] sm:$0xff]
        %v437 = vld [vmem:[%s329 + $0x140] sm:$0xff]
        %v438 = vld [vmem:[%s329 + $0x148] sm:$0xff]
        %v439 = vld [vmem:[%s329 + $0x150] sm:$0xff]
        %v440 = vld [vmem:[%s329 + $0x158] sm:$0xff]
        %v441 = vld [vmem:[%s329 + $0x160] sm:$0xff]
        %v442 = vld [vmem:[%s329 + $0x168] sm:$0xff]
        %v443 = vld [vmem:[%s329 + $0x170] sm:$0xff]
        %v444 = vld [vmem:[%s329 + $0x178] sm:$0xff]
        %v445 = vld [vmem:[%s329 + $0x180] sm:$0xff]
        %v446 = vld [vmem:[%s329 + $0x188] sm:$0xff]
        %v447 = vld [vmem:[%s329 + $0x190] sm:$0xff]
        %v448 = vld [vmem:[%s329 + $0x198] sm:$0xff]
        %v449 = vld [vmem:[%s329 + $0x1a0] sm:$0xff]
        %v450 = vld [vmem:[%s329 + $0x1a8] sm:$0xff]
        %v451 = vld [vmem:[%s329 + $0x1b0] sm:$0xff]
        %v452 = vld [vmem:[%s329 + $0x1b8] sm:$0xff]
        %v453 = vld [vmem:[%s329 + $0x1c0] sm:$0xff]
        %v454 = vld [vmem:[%s329 + $0x1c8] sm:$0xff]
        %v455 = vld [vmem:[%s329 + $0x1d0] sm:$0xff]
        %v456 = vld [vmem:[%s329 + $0x1d8] sm:$0xff]
        %v457 = vld [vmem:[%s329 + $0x1e0] sm:$0xff]
        %v458 = vld [vmem:[%s329 + $0x1e8] sm:$0xff]
        %v459 = vld [vmem:[%s329 + $0x1f0] sm:$0xff]
        %v460 = vld [vmem:[%s329 + $0x1f8] sm:$0xff]
        %v461 = vld [vmem:[%s329 + $0x200] sm:$0xff]
        %v462 = vld [vmem:[%s329 + $0x208] sm:$0xff]
        %v463 = vld [vmem:[%s329 + $0x210] sm:$0xff]
        %v464 = vld [vmem:[%s329 + $0x218] sm:$0xff]
        %v465 = vld [vmem:[%s329 + $0x220] sm:$0xff]
        %v466 = vld [vmem:[%s329 + $0x228] sm:$0xff]
        %v467 = vld [vmem:[%s329 + $0x230] sm:$0xff]
        %v468 = vld [vmem:[%s329 + $0x238] sm:$0xff]
        %v469 = vld [vmem:[%s329 + $0x240] sm:$0xff]
        %v470 = vld [vmem:[%s329 + $0x248] sm:$0xff]
        %v471 = vld [vmem:[%s329 + $0x250] sm:$0xff]
        %v472 = vld [vmem:[%s329 + $0x258] sm:$0xff]
        %v473 = vld [vmem:[%s329 + $0x260] sm:$0xff]
        %v474 = vld [vmem:[%s329 + $0x268] sm:$0xff]
        %v475 = vld [vmem:[%s329 + $0x270] sm:$0xff]
        %v476 = vld [vmem:[%s329 + $0x278] sm:$0xff]
        %v477 = vld [vmem:[%s329 + $0x280] sm:$0xff]
        %v478 = vld [vmem:[%s329 + $0x288] sm:$0xff]
        %v479 = vld [vmem:[%s329 + $0x290] sm:$0xff]
        %v480 = vld [vmem:[%s329 + $0x298] sm:$0xff]
        %v481 = vld [vmem:[%s329 + $0x2a0] sm:$0xff]
        %v482 = vld [vmem:[%s329 + $0x2a8] sm:$0xff]
        %v483 = vld [vmem:[%s329 + $0x2b0] sm:$0xff]
        %v484 = vld [vmem:[%s329 + $0x2b8] sm:$0xff]
        %v485 = vld [vmem:[%s329 + $0x2c0] sm:$0xff]
        %v486 = vld [vmem:[%s329 + $0x2c8] sm:$0xff]
        %v487 = vld [vmem:[%s329 + $0x2d0] sm:$0xff]
        %v488 = vld [vmem:[%s329 + $0x2d8] sm:$0xff]
        %v489 = vld [vmem:[%s329 + $0x2e0] sm:$0xff]
        %v490 = vld [vmem:[%s329 + $0x2e8] sm:$0xff]
        %v491 = vld [vmem:[%s329 + $0x2f0] sm:$0xff]
        %v492 = vld [vmem:[%s329 + $0x2f8] sm:$0xff]
        %v493 = vld [vmem:[%s329 + $0x300] sm:$0xff]
        %v494 = vld [vmem:[%s329 + $0x308] sm:$0xff]
        %v495 = vld [vmem:[%s329 + $0x310] sm:$0xff]
        %v496 = vld [vmem:[%s329 + $0x318] sm:$0xff]
        %v497 = vld [vmem:[%s329 + $0x320] sm:$0xff]
        %v498 = vld [vmem:[%s329 + $0x328] sm:$0xff]
        %v499 = vld [vmem:[%s329 + $0x330] sm:$0xff]
        %v500 = vld [vmem:[%s329 + $0x338] sm:$0xff]
        %v501 = vld [vmem:[%s329 + $0x340] sm:$0xff]
        %v502 = vld [vmem:[%s329 + $0x348] sm:$0xff]
        %v503 = vld [vmem:[%s329 + $0x350] sm:$0xff]
        %v504 = vld [vmem:[%s329 + $0x358] sm:$0xff]
        %v505 = vld [vmem:[%s329 + $0x360] sm:$0xff]
        %v506 = vld [vmem:[%s329 + $0x368] sm:$0xff]
        %v507 = vld [vmem:[%s329 + $0x370] sm:$0xff]
        %v508 = vld [vmem:[%s329 + $0x378] sm:$0xff]
        %v509 = vld [vmem:[%s329 + $0x380] sm:$0xff]
        %v510 = vld [vmem:[%s329 + $0x388] sm:$0xff]
        %v511 = vld [vmem:[%s329 + $0x390] sm:$0xff]
        %v512 = vld [vmem:[%s329 + $0x398] sm:$0xff]
        %v513 = vld [vmem:[%s329 + $0x3a0] sm:$0xff]
        %v514 = vld [vmem:[%s329 + $0x3a8] sm:$0xff]
        %v515 = vld [vmem:[%s329 + $0x3b0] sm:$0xff]
        %v516 = vld [vmem:[%s329 + $0x3b8] sm:$0xff]
        %v517 = vld [vmem:[%s329 + $0x3c0] sm:$0xff]
        %v518 = vld [vmem:[%s329 + $0x3c8] sm:$0xff]
        %v519 = vld [vmem:[%s329 + $0x3d0] sm:$0xff]
        %v520 = vld [vmem:[%s329 + $0x3d8] sm:$0xff]
        %v521 = vld [vmem:[%s329 + $0x3e0] sm:$0xff]
        %v522 = vld [vmem:[%s329 + $0x3e8] sm:$0xff]
        %v523 = vld [vmem:[%s329 + $0x3f0] sm:$0xff]
        %v524 = vld [vmem:[%s329 + $0x3f8] sm:$0xff]
        %v525 = vld [vmem:[%s329 + $0x400] sm:$0xff]
        %v526 = vld [vmem:[%s329 + $0x408] sm:$0xff]
        %v527 = vld [vmem:[%s329 + $0x410] sm:$0xff]
        %v528 = vld [vmem:[%s329 + $0x418] sm:$0xff]
        %v529 = vld [vmem:[%s329 + $0x420] sm:$0xff]
        %v530 = vld [vmem:[%s329 + $0x428] sm:$0xff]
        %v531 = vld [vmem:[%s329 + $0x430] sm:$0xff]
        %v532 = vld [vmem:[%s329 + $0x438] sm:$0xff]
        %v533 = vld [vmem:[%s329 + $0x440] sm:$0xff]
        %v534 = vld [vmem:[%s329 + $0x448] sm:$0xff]
        %v535 = vld [vmem:[%s329 + $0x450] sm:$0xff]
        %v536 = vld [vmem:[%s329 + $0x458] sm:$0xff]
        %v537 = vld [vmem:[%s329 + $0x460] sm:$0xff]
        %v538 = vld [vmem:[%s329 + $0x468] sm:$0xff]
        %v539 = vld [vmem:[%s329 + $0x470] sm:$0xff]
        %v540 = vld [vmem:[%s329 + $0x478] sm:$0xff]
        %v541 = vld [vmem:[%s329 + $0x480] sm:$0xff]
        %v542 = vld [vmem:[%s329 + $0x488] sm:$0xff]
        %v543 = vld [vmem:[%s329 + $0x490] sm:$0xff]
        %v544 = vld [vmem:[%s329 + $0x498] sm:$0xff]
        %v545 = vld [vmem:[%s329 + $0x4a0] sm:$0xff]
        %v546 = vld [vmem:[%s329 + $0x4a8] sm:$0xff]
        %v547 = vld [vmem:[%s329 + $0x4b0] sm:$0xff]
        %v548 = vld [vmem:[%s329 + $0x4b8] sm:$0xff]
        %v549 = vld [vmem:[%s329 + $0x4c0] sm:$0xff]
        %v550 = vld [vmem:[%s329 + $0x4c8] sm:$0xff]
        %v551 = vld [vmem:[%s329 + $0x4d0] sm:$0xff]
        %v552 = vld [vmem:[%s329 + $0x4d8] sm:$0xff]
        %v553 = vld [vmem:[%s329 + $0x4e0] sm:$0xff]
        %v554 = vld [vmem:[%s329 + $0x4e8] sm:$0xff]
        %v555 = vld [vmem:[%s329 + $0x4f0] sm:$0xff]
        %v556 = vld [vmem:[%s329 + $0x4f8] sm:$0xff]
        %v557 = vld [vmem:[%s329 + $0x500] sm:$0xff]
        %v558 = vld [vmem:[%s329 + $0x508] sm:$0xff]
        %v559 = vld [vmem:[%s329 + $0x510] sm:$0xff]
        %v560 = vld [vmem:[%s329 + $0x518] sm:$0xff]
        %v561 = vld [vmem:[%s329 + $0x520] sm:$0xff]
        %v562 = vld [vmem:[%s329 + $0x528] sm:$0xff]
        %v563 = vld [vmem:[%s329 + $0x530] sm:$0xff]
        %v564 = vld [vmem:[%s329 + $0x538] sm:$0xff]
        %v565 = vld [vmem:[%s329 + $0x540] sm:$0xff]
        %v566 = vld [vmem:[%s329 + $0x548] sm:$0xff]
        %v567 = vld [vmem:[%s329 + $0x550] sm:$0xff]
        %v568 = vld [vmem:[%s329 + $0x558] sm:$0xff]
        %v569 = vld [vmem:[%s329 + $0x560] sm:$0xff]
        %v570 = vld [vmem:[%s329 + $0x568] sm:$0xff]
        %v571 = vld [vmem:[%s329 + $0x570] sm:$0xff]
        %v572 = vld [vmem:[%s329 + $0x578] sm:$0xff]
        %v573 = vld [vmem:[%s329 + $0x580] sm:$0xff]
        %v574 = vld [vmem:[%s329 + $0x588] sm:$0xff]
        %v575 = vld [vmem:[%s329 + $0x590] sm:$0xff]
        %v576 = vld [vmem:[%s329 + $0x598] sm:$0xff]
        %v577 = vld [vmem:[%s329 + $0x5a0] sm:$0xff]
        %v578 = vld [vmem:[%s329 + $0x5a8] sm:$0xff]
        %v579 = vld [vmem:[%s329 + $0x5b0] sm:$0xff]
        %v580 = vld [vmem:[%s329 + $0x5b8] sm:$0xff]
        %v581 = vld [vmem:[%s329 + $0x5c0] sm:$0xff]
        %v582 = vld [vmem:[%s329 + $0x5c8] sm:$0xff]
        %v583 = vld [vmem:[%s329 + $0x5d0] sm:$0xff]
        %v584 = vld [vmem:[%s329 + $0x5d8] sm:$0xff]
        %v585 = vld [vmem:[%s329 + $0x5e0] sm:$0xff]
        %v586 = vld [vmem:[%s329 + $0x5e8] sm:$0xff]
        %v587 = vld [vmem:[%s329 + $0x5f0] sm:$0xff]
        %v588 = vld [vmem:[%s329 + $0x5f8] sm:$0xff]
        %v589 = vld [vmem:[%s329 + $0x600] sm:$0xff]
        %v590 = vld [vmem:[%s329 + $0x608] sm:$0xff]
        %v591 = vld [vmem:[%s329 + $0x610] sm:$0xff]
        %v592 = vld [vmem:[%s329 + $0x618] sm:$0xff]
        %v593 = vld [vmem:[%s329 + $0x620] sm:$0xff]
        %v594 = vld [vmem:[%s329 + $0x628] sm:$0xff]
        %v595 = vld [vmem:[%s329 + $0x630] sm:$0xff]
        %v596 = vld [vmem:[%s329 + $0x638] sm:$0xff]
        %v597 = vld [vmem:[%s329 + $0x640] sm:$0xff]
        %v598 = vld [vmem:[%s329 + $0x648] sm:$0xff]
        %v599 = vld [vmem:[%s329 + $0x650] sm:$0xff]
        %v600 = vld [vmem:[%s329 + $0x658] sm:$0xff]
        %v601 = vld [vmem:[%s329 + $0x660] sm:$0xff]
        %v602 = vld [vmem:[%s329 + $0x668] sm:$0xff]
        %v603 = vld [vmem:[%s329 + $0x670] sm:$0xff]
        %v604 = vld [vmem:[%s329 + $0x678] sm:$0xff]
        %v605 = vld [vmem:[%s329 + $0x680] sm:$0xff]
        %v606 = vld [vmem:[%s329 + $0x688] sm:$0xff]
        %v607 = vld [vmem:[%s329 + $0x690] sm:$0xff]
        %v608 = vld [vmem:[%s329 + $0x698] sm:$0xff]
        %v609 = vld [vmem:[%s329 + $0x6a0] sm:$0xff]
        %v610 = vld [vmem:[%s329 + $0x6a8] sm:$0xff]
        %v611 = vld [vmem:[%s329 + $0x6b0] sm:$0xff]
        %v612 = vld [vmem:[%s329 + $0x6b8] sm:$0xff]
        %v613 = vld [vmem:[%s329 + $0x6c0] sm:$0xff]
        %v614 = vld [vmem:[%s329 + $0x6c8] sm:$0xff]
        %v615 = vld [vmem:[%s329 + $0x6d0] sm:$0xff]
        %v616 = vld [vmem:[%s329 + $0x6d8] sm:$0xff]
        %v617 = vld [vmem:[%s329 + $0x6e0] sm:$0xff]
        %v618 = vld [vmem:[%s329 + $0x6e8] sm:$0xff]
        %v619 = vld [vmem:[%s329 + $0x6f0] sm:$0xff]
        %v620 = vld [vmem:[%s329 + $0x6f8] sm:$0xff]
        %v621 = vld [vmem:[%s329 + $0x700] sm:$0xff]
        %v622 = vld [vmem:[%s329 + $0x708] sm:$0xff]
        %v623 = vld [vmem:[%s329 + $0x710] sm:$0xff]
        %v624 = vld [vmem:[%s329 + $0x718] sm:$0xff]
        %v625 = vld [vmem:[%s329 + $0x720] sm:$0xff]
        %v626 = vld [vmem:[%s329 + $0x728] sm:$0xff]
        %v627 = vld [vmem:[%s329 + $0x730] sm:$0xff]
        %v628 = vld [vmem:[%s329 + $0x738] sm:$0xff]
        %v629 = vld [vmem:[%s329 + $0x740] sm:$0xff]
        %v630 = vld [vmem:[%s329 + $0x748] sm:$0xff]
        %v631 = vld [vmem:[%s329 + $0x750] sm:$0xff]
        %v632 = vld [vmem:[%s329 + $0x758] sm:$0xff]
        %v633 = vld [vmem:[%s329 + $0x760] sm:$0xff]
        %v634 = vld [vmem:[%s329 + $0x768] sm:$0xff]
        %v635 = vld [vmem:[%s329 + $0x770] sm:$0xff]
        %v636 = vld [vmem:[%s329 + $0x778] sm:$0xff]
        %v637 = vld [vmem:[%s329 + $0x780] sm:$0xff]
        %v638 = vld [vmem:[%s329 + $0x788] sm:$0xff]
        %v639 = vld [vmem:[%s329 + $0x790] sm:$0xff]
        %v640 = vld [vmem:[%s329 + $0x798] sm:$0xff]
        %v641 = vld [vmem:[%s329 + $0x7a0] sm:$0xff]
        %v642 = vld [vmem:[%s329 + $0x7a8] sm:$0xff]
        %v643 = vld [vmem:[%s329 + $0x7b0] sm:$0xff]
        %v644 = vld [vmem:[%s329 + $0x7b8] sm:$0xff]
        %v645 = vld [vmem:[%s329 + $0x7c0] sm:$0xff]
        %v646 = vld [vmem:[%s329 + $0x7c8] sm:$0xff]
        %v647 = vld [vmem:[%s329 + $0x7d0] sm:$0xff]
        %v648 = vld [vmem:[%s329 + $0x7d8] sm:$0xff]
        %v649 = vld [vmem:[%s329 + $0x7e0] sm:$0xff]
        %v650 = vld [vmem:[%s329 + $0x7e8] sm:$0xff]
        %v651 = vld [vmem:[%s329 + $0x7f0] sm:$0xff]
        %v652 = vld [vmem:[%s329 + $0x7f8] sm:$0xff]
        %v653 = vpack.c.bf16 %v405, %v397
        %v654 = vpack.c.bf16 %v406, %v398
        %v655 = vpack.c.bf16 %v407, %v399
        %v656 = vpack.c.bf16 %v408, %v400
        %v657 = vpack.c.bf16 %v409, %v401
        %v658 = vpack.c.bf16 %v410, %v402
        %v659 = vpack.c.bf16 %v411, %v403
        %v660 = vpack.c.bf16 %v412, %v404
        %v661 = vpack.c.bf16 %v421, %v413
        %v662 = vpack.c.bf16 %v422, %v414
        %v663 = vpack.c.bf16 %v423, %v415
        %v664 = vpack.c.bf16 %v424, %v416
        %v665 = vpack.c.bf16 %v425, %v417
        %v666 = vpack.c.bf16 %v426, %v418
        %v667 = vpack.c.bf16 %v427, %v419
        %v668 = vpack.c.bf16 %v428, %v420
        %v669 = vpack.c.bf16 %v437, %v429
        %v670 = vpack.c.bf16 %v438, %v430
        %v671 = vpack.c.bf16 %v439, %v431
        %v672 = vpack.c.bf16 %v440, %v432
        %v673 = vpack.c.bf16 %v441, %v433
        %v674 = vpack.c.bf16 %v442, %v434
        %v675 = vpack.c.bf16 %v443, %v435
        %v676 = vpack.c.bf16 %v444, %v436
        %v677 = vpack.c.bf16 %v453, %v445
        %v678 = vpack.c.bf16 %v454, %v446
        %v679 = vpack.c.bf16 %v455, %v447
        %v680 = vpack.c.bf16 %v456, %v448
        %v681 = vpack.c.bf16 %v457, %v449
        %v682 = vpack.c.bf16 %v458, %v450
        %v683 = vpack.c.bf16 %v459, %v451
        %v684 = vpack.c.bf16 %v460, %v452
        %v685 = vpack.c.bf16 %v469, %v461
        %v686 = vpack.c.bf16 %v470, %v462
        %v687 = vpack.c.bf16 %v471, %v463
        %v688 = vpack.c.bf16 %v472, %v464
        %v689 = vpack.c.bf16 %v473, %v465
        %v690 = vpack.c.bf16 %v474, %v466
        %v691 = vpack.c.bf16 %v475, %v467
        %v692 = vpack.c.bf16 %v476, %v468
        %v693 = vpack.c.bf16 %v485, %v477
        %v694 = vpack.c.bf16 %v486, %v478
        %v695 = vpack.c.bf16 %v487, %v479
        %v696 = vpack.c.bf16 %v488, %v480
        %v697 = vpack.c.bf16 %v489, %v481
        %v698 = vpack.c.bf16 %v490, %v482
        %v699 = vpack.c.bf16 %v491, %v483
        %v700 = vpack.c.bf16 %v492, %v484
        %v701 = vpack.c.bf16 %v501, %v493
        %v702 = vpack.c.bf16 %v502, %v494
        %v703 = vpack.c.bf16 %v503, %v495
        %v704 = vpack.c.bf16 %v504, %v496
        %v705 = vpack.c.bf16 %v505, %v497
        %v706 = vpack.c.bf16 %v506, %v498
        %v707 = vpack.c.bf16 %v507, %v499
        %v708 = vpack.c.bf16 %v508, %v500
        %v709 = vpack.c.bf16 %v517, %v509
        %v710 = vpack.c.bf16 %v518, %v510
        %v711 = vpack.c.bf16 %v519, %v511
        %v712 = vpack.c.bf16 %v520, %v512
        %v713 = vpack.c.bf16 %v521, %v513
        %v714 = vpack.c.bf16 %v522, %v514
        %v715 = vpack.c.bf16 %v523, %v515
        %v716 = vpack.c.bf16 %v524, %v516
        %v717 = vpack.c.bf16 %v533, %v525
        %v718 = vpack.c.bf16 %v534, %v526
        %v719 = vpack.c.bf16 %v535, %v527
        %v720 = vpack.c.bf16 %v536, %v528
        %v721 = vpack.c.bf16 %v537, %v529
        %v722 = vpack.c.bf16 %v538, %v530
        %v723 = vpack.c.bf16 %v539, %v531
        %v724 = vpack.c.bf16 %v540, %v532
        %v725 = vpack.c.bf16 %v549, %v541
        %v726 = vpack.c.bf16 %v550, %v542
        %v727 = vpack.c.bf16 %v551, %v543
        %v728 = vpack.c.bf16 %v552, %v544
        %v729 = vpack.c.bf16 %v553, %v545
        %v730 = vpack.c.bf16 %v554, %v546
        %v731 = vpack.c.bf16 %v555, %v547
        %v732 = vpack.c.bf16 %v556, %v548
        %v733 = vpack.c.bf16 %v565, %v557
        %v734 = vpack.c.bf16 %v566, %v558
        %v735 = vpack.c.bf16 %v567, %v559
        %v736 = vpack.c.bf16 %v568, %v560
        %v737 = vpack.c.bf16 %v569, %v561
        %v738 = vpack.c.bf16 %v570, %v562
        %v739 = vpack.c.bf16 %v571, %v563
        %v740 = vpack.c.bf16 %v572, %v564
        %v741 = vpack.c.bf16 %v581, %v573
        %v742 = vpack.c.bf16 %v582, %v574
        %v743 = vpack.c.bf16 %v583, %v575
        %v744 = vpack.c.bf16 %v584, %v576
        %v745 = vpack.c.bf16 %v585, %v577
        %v746 = vpack.c.bf16 %v586, %v578
        %v747 = vpack.c.bf16 %v587, %v579
        %v748 = vpack.c.bf16 %v588, %v580
        %v749 = vpack.c.bf16 %v597, %v589
        %v750 = vpack.c.bf16 %v598, %v590
        %v751 = vpack.c.bf16 %v599, %v591
        %v752 = vpack.c.bf16 %v600, %v592
        %v753 = vpack.c.bf16 %v601, %v593
        %v754 = vpack.c.bf16 %v602, %v594
        %v755 = vpack.c.bf16 %v603, %v595
        %v756 = vpack.c.bf16 %v604, %v596
        %v757 = vpack.c.bf16 %v613, %v605
        %v758 = vpack.c.bf16 %v614, %v606
        %v759 = vpack.c.bf16 %v615, %v607
        %v760 = vpack.c.bf16 %v616, %v608
        %v761 = vpack.c.bf16 %v617, %v609
        %v762 = vpack.c.bf16 %v618, %v610
        %v763 = vpack.c.bf16 %v619, %v611
        %v764 = vpack.c.bf16 %v620, %v612
        %v765 = vpack.c.bf16 %v629, %v621
        %v766 = vpack.c.bf16 %v630, %v622
        %v767 = vpack.c.bf16 %v631, %v623
        %v768 = vpack.c.bf16 %v632, %v624
        %v769 = vpack.c.bf16 %v633, %v625
        %v770 = vpack.c.bf16 %v634, %v626
        %v771 = vpack.c.bf16 %v635, %v627
        %v772 = vpack.c.bf16 %v636, %v628
        %v773 = vpack.c.bf16 %v645, %v637
        %v774 = vpack.c.bf16 %v646, %v638
        %v775 = vpack.c.bf16 %v647, %v639
        %v776 = vpack.c.bf16 %v648, %v640
        %v777 = vpack.c.bf16 %v649, %v641
        %v778 = vpack.c.bf16 %v650, %v642
        %v779 = vpack.c.bf16 %v651, %v643
        %v780 = vpack.c.bf16 %v652, %v644
        %v781 = vld [vmem:[#allocation5] sm:$0xff]
        %v782 = vld [vmem:[#allocation5 + $0x8] sm:$0xff]
        %v783 = vld [vmem:[#allocation5 + $0x10] sm:$0xff]
        %v784 = vld [vmem:[#allocation5 + $0x18] sm:$0xff]
        %v785 = vld [vmem:[#allocation5 + $0x20] sm:$0xff]
        %v786 = vld [vmem:[#allocation5 + $0x28] sm:$0xff]
        %v787 = vld [vmem:[#allocation5 + $0x30] sm:$0xff]
        %v788 = vld [vmem:[#allocation5 + $0x38] sm:$0xff]
        %v789 = vld [vmem:[#allocation5 + $0x40] sm:$0xff]
        %v790 = vld [vmem:[#allocation5 + $0x48] sm:$0xff]
        %v791 = vld [vmem:[#allocation5 + $0x50] sm:$0xff]
        %v792 = vld [vmem:[#allocation5 + $0x58] sm:$0xff]
        %v793 = vld [vmem:[#allocation5 + $0x60] sm:$0xff]
        %v794 = vld [vmem:[#allocation5 + $0x68] sm:$0xff]
        %v795 = vld [vmem:[#allocation5 + $0x70] sm:$0xff]
        %v796 = vld [vmem:[#allocation5 + $0x78] sm:$0xff]
        %v797 = vld [vmem:[#allocation5 + $0x80] sm:$0xff]
        %v798 = vld [vmem:[#allocation5 + $0x88] sm:$0xff]
        %v799 = vld [vmem:[#allocation5 + $0x90] sm:$0xff]
        %v800 = vld [vmem:[#allocation5 + $0x98] sm:$0xff]
        %v801 = vld [vmem:[#allocation5 + $0xa0] sm:$0xff]
        %v802 = vld [vmem:[#allocation5 + $0xa8] sm:$0xff]
        %v803 = vld [vmem:[#allocation5 + $0xb0] sm:$0xff]
        %v804 = vld [vmem:[#allocation5 + $0xb8] sm:$0xff]
        %v805 = vld [vmem:[#allocation5 + $0xc0] sm:$0xff]
        %v806 = vld [vmem:[#allocation5 + $0xc8] sm:$0xff]
        %v807 = vld [vmem:[#allocation5 + $0xd0] sm:$0xff]
        %v808 = vld [vmem:[#allocation5 + $0xd8] sm:$0xff]
        %v809 = vld [vmem:[#allocation5 + $0xe0] sm:$0xff]
        %v810 = vld [vmem:[#allocation5 + $0xe8] sm:$0xff]
        %v811 = vld [vmem:[#allocation5 + $0xf0] sm:$0xff]
        %v812 = vld [vmem:[#allocation5 + $0xf8] sm:$0xff]
        %v813 = vld [vmem:[#allocation5 + $0x100] sm:$0xff]
        %v814 = vld [vmem:[#allocation5 + $0x108] sm:$0xff]
        %v815 = vld [vmem:[#allocation5 + $0x110] sm:$0xff]
        %v816 = vld [vmem:[#allocation5 + $0x118] sm:$0xff]
        %v817 = vld [vmem:[#allocation5 + $0x120] sm:$0xff]
        %v818 = vld [vmem:[#allocation5 + $0x128] sm:$0xff]
        %v819 = vld [vmem:[#allocation5 + $0x130] sm:$0xff]
        %v820 = vld [vmem:[#allocation5 + $0x138] sm:$0xff]
        %v821 = vld [vmem:[#allocation5 + $0x140] sm:$0xff]
        %v822 = vld [vmem:[#allocation5 + $0x148] sm:$0xff]
        %v823 = vld [vmem:[#allocation5 + $0x150] sm:$0xff]
        %v824 = vld [vmem:[#allocation5 + $0x158] sm:$0xff]
        %v825 = vld [vmem:[#allocation5 + $0x160] sm:$0xff]
        %v826 = vld [vmem:[#allocation5 + $0x168] sm:$0xff]
        %v827 = vld [vmem:[#allocation5 + $0x170] sm:$0xff]
        %v828 = vld [vmem:[#allocation5 + $0x178] sm:$0xff]
        %v829 = vld [vmem:[#allocation5 + $0x180] sm:$0xff]
        %v830 = vld [vmem:[#allocation5 + $0x188] sm:$0xff]
        %v831 = vld [vmem:[#allocation5 + $0x190] sm:$0xff]
        %v832 = vld [vmem:[#allocation5 + $0x198] sm:$0xff]
        %v833 = vld [vmem:[#allocation5 + $0x1a0] sm:$0xff]
        %v834 = vld [vmem:[#allocation5 + $0x1a8] sm:$0xff]
        %v835 = vld [vmem:[#allocation5 + $0x1b0] sm:$0xff]
        %v836 = vld [vmem:[#allocation5 + $0x1b8] sm:$0xff]
        %v837 = vld [vmem:[#allocation5 + $0x1c0] sm:$0xff]
        %v838 = vld [vmem:[#allocation5 + $0x1c8] sm:$0xff]
        %v839 = vld [vmem:[#allocation5 + $0x1d0] sm:$0xff]
        %v840 = vld [vmem:[#allocation5 + $0x1d8] sm:$0xff]
        %v841 = vld [vmem:[#allocation5 + $0x1e0] sm:$0xff]
        %v842 = vld [vmem:[#allocation5 + $0x1e8] sm:$0xff]
        %v843 = vld [vmem:[#allocation5 + $0x1f0] sm:$0xff]
        %v844 = vld [vmem:[#allocation5 + $0x1f8] sm:$0xff]
        %v845 = vld [vmem:[#allocation5 + $0x200] sm:$0xff]
        %v846 = vld [vmem:[#allocation5 + $0x208] sm:$0xff]
        %v847 = vld [vmem:[#allocation5 + $0x210] sm:$0xff]
        %v848 = vld [vmem:[#allocation5 + $0x218] sm:$0xff]
        %v849 = vld [vmem:[#allocation5 + $0x220] sm:$0xff]
        %v850 = vld [vmem:[#allocation5 + $0x228] sm:$0xff]
        %v851 = vld [vmem:[#allocation5 + $0x230] sm:$0xff]
        %v852 = vld [vmem:[#allocation5 + $0x238] sm:$0xff]
        %v853 = vld [vmem:[#allocation5 + $0x240] sm:$0xff]
        %v854 = vld [vmem:[#allocation5 + $0x248] sm:$0xff]
        %v855 = vld [vmem:[#allocation5 + $0x250] sm:$0xff]
        %v856 = vld [vmem:[#allocation5 + $0x258] sm:$0xff]
        %v857 = vld [vmem:[#allocation5 + $0x260] sm:$0xff]
        %v858 = vld [vmem:[#allocation5 + $0x268] sm:$0xff]
        %v859 = vld [vmem:[#allocation5 + $0x270] sm:$0xff]
        %v860 = vld [vmem:[#allocation5 + $0x278] sm:$0xff]
        %v861 = vld [vmem:[#allocation5 + $0x280] sm:$0xff]
        %v862 = vld [vmem:[#allocation5 + $0x288] sm:$0xff]
        %v863 = vld [vmem:[#allocation5 + $0x290] sm:$0xff]
        %v864 = vld [vmem:[#allocation5 + $0x298] sm:$0xff]
        %v865 = vld [vmem:[#allocation5 + $0x2a0] sm:$0xff]
        %v866 = vld [vmem:[#allocation5 + $0x2a8] sm:$0xff]
        %v867 = vld [vmem:[#allocation5 + $0x2b0] sm:$0xff]
        %v868 = vld [vmem:[#allocation5 + $0x2b8] sm:$0xff]
        %v869 = vld [vmem:[#allocation5 + $0x2c0] sm:$0xff]
        %v870 = vld [vmem:[#allocation5 + $0x2c8] sm:$0xff]
        %v871 = vld [vmem:[#allocation5 + $0x2d0] sm:$0xff]
        %v872 = vld [vmem:[#allocation5 + $0x2d8] sm:$0xff]
        %v873 = vld [vmem:[#allocation5 + $0x2e0] sm:$0xff]
        %v874 = vld [vmem:[#allocation5 + $0x2e8] sm:$0xff]
        %v875 = vld [vmem:[#allocation5 + $0x2f0] sm:$0xff]
        %v876 = vld [vmem:[#allocation5 + $0x2f8] sm:$0xff]
        %v877 = vld [vmem:[#allocation5 + $0x300] sm:$0xff]
        %v878 = vld [vmem:[#allocation5 + $0x308] sm:$0xff]
        %v879 = vld [vmem:[#allocation5 + $0x310] sm:$0xff]
        %v880 = vld [vmem:[#allocation5 + $0x318] sm:$0xff]
        %v881 = vld [vmem:[#allocation5 + $0x320] sm:$0xff]
        %v882 = vld [vmem:[#allocation5 + $0x328] sm:$0xff]
        %v883 = vld [vmem:[#allocation5 + $0x330] sm:$0xff]
        %v884 = vld [vmem:[#allocation5 + $0x338] sm:$0xff]
        %v885 = vld [vmem:[#allocation5 + $0x340] sm:$0xff]
        %v886 = vld [vmem:[#allocation5 + $0x348] sm:$0xff]
        %v887 = vld [vmem:[#allocation5 + $0x350] sm:$0xff]
        %v888 = vld [vmem:[#allocation5 + $0x358] sm:$0xff]
        %v889 = vld [vmem:[#allocation5 + $0x360] sm:$0xff]
        %v890 = vld [vmem:[#allocation5 + $0x368] sm:$0xff]
        %v891 = vld [vmem:[#allocation5 + $0x370] sm:$0xff]
        %v892 = vld [vmem:[#allocation5 + $0x378] sm:$0xff]
        %v893 = vld [vmem:[#allocation5 + $0x380] sm:$0xff]
        %v894 = vld [vmem:[#allocation5 + $0x388] sm:$0xff]
        %v895 = vld [vmem:[#allocation5 + $0x390] sm:$0xff]
        %v896 = vld [vmem:[#allocation5 + $0x398] sm:$0xff]
        %v897 = vld [vmem:[#allocation5 + $0x3a0] sm:$0xff]
        %v898 = vld [vmem:[#allocation5 + $0x3a8] sm:$0xff]
        %v899 = vld [vmem:[#allocation5 + $0x3b0] sm:$0xff]
        %v900 = vld [vmem:[#allocation5 + $0x3b8] sm:$0xff]
        %v901 = vld [vmem:[#allocation5 + $0x3c0] sm:$0xff]
        %v902 = vld [vmem:[#allocation5 + $0x3c8] sm:$0xff]
        %v903 = vld [vmem:[#allocation5 + $0x3d0] sm:$0xff]
        %v904 = vld [vmem:[#allocation5 + $0x3d8] sm:$0xff]
        %v905 = vld [vmem:[#allocation5 + $0x3e0] sm:$0xff]
        %v906 = vld [vmem:[#allocation5 + $0x3e8] sm:$0xff]
        %v907 = vld [vmem:[#allocation5 + $0x3f0] sm:$0xff]
        %v908 = vld [vmem:[#allocation5 + $0x3f8] sm:$0xff]
        %v910 = vperm.slane %v393, 0
        %v911 = vperm.slane %v393, 1
        %v1042 = vunpack.c.l.b16 %v781
        %v1043 = vunpack.c.h.b16 %v781
        %v1044 = vunpack.c.l.b16 %v782
        %v1045 = vunpack.c.h.b16 %v782
        %v1046 = vunpack.c.l.b16 %v783
        %v1047 = vunpack.c.h.b16 %v783
        %v1048 = vunpack.c.l.b16 %v784
        %v1049 = vunpack.c.h.b16 %v784
        %v1050 = vunpack.c.l.b16 %v785
        %v1051 = vunpack.c.h.b16 %v785
        %v1052 = vunpack.c.l.b16 %v786
        %v1053 = vunpack.c.h.b16 %v786
        %v1054 = vunpack.c.l.b16 %v787
        %v1055 = vunpack.c.h.b16 %v787
        %v1056 = vunpack.c.l.b16 %v788
        %v1057 = vunpack.c.h.b16 %v788
        %v1058 = vunpack.c.l.b16 %v789
        %v1059 = vunpack.c.h.b16 %v789
        %v1060 = vunpack.c.l.b16 %v790
        %v1061 = vunpack.c.h.b16 %v790
        %v1062 = vunpack.c.l.b16 %v791
        %v1063 = vunpack.c.h.b16 %v791
        %v1064 = vunpack.c.l.b16 %v792
        %v1065 = vunpack.c.h.b16 %v792
        %v1066 = vunpack.c.l.b16 %v793
        %v1067 = vunpack.c.h.b16 %v793
        %v1068 = vunpack.c.l.b16 %v794
        %v1069 = vunpack.c.h.b16 %v794
        %v1070 = vunpack.c.l.b16 %v795
        %v1071 = vunpack.c.h.b16 %v795
        %v1072 = vunpack.c.l.b16 %v796
        %v1073 = vunpack.c.h.b16 %v796
        %v1074 = vunpack.c.l.b16 %v797
        %v1075 = vunpack.c.h.b16 %v797
        %v1076 = vunpack.c.l.b16 %v798
        %v1077 = vunpack.c.h.b16 %v798
        %v1078 = vunpack.c.l.b16 %v799
        %v1079 = vunpack.c.h.b16 %v799
        %v1080 = vunpack.c.l.b16 %v800
        %v1081 = vunpack.c.h.b16 %v800
        %v1082 = vunpack.c.l.b16 %v801
        %v1083 = vunpack.c.h.b16 %v801
        %v1084 = vunpack.c.l.b16 %v802
        %v1085 = vunpack.c.h.b16 %v802
        %v1086 = vunpack.c.l.b16 %v803
        %v1087 = vunpack.c.h.b16 %v803
        %v1088 = vunpack.c.l.b16 %v804
        %v1089 = vunpack.c.h.b16 %v804
        %v1090 = vunpack.c.l.b16 %v805
        %v1091 = vunpack.c.h.b16 %v805
        %v1092 = vunpack.c.l.b16 %v806
        %v1093 = vunpack.c.h.b16 %v806
        %v1094 = vunpack.c.l.b16 %v807
        %v1095 = vunpack.c.h.b16 %v807
        %v1096 = vunpack.c.l.b16 %v808
        %v1097 = vunpack.c.h.b16 %v808
        %v1098 = vunpack.c.l.b16 %v809
        %v1099 = vunpack.c.h.b16 %v809
        %v1100 = vunpack.c.l.b16 %v810
        %v1101 = vunpack.c.h.b16 %v810
        %v1102 = vunpack.c.l.b16 %v811
        %v1103 = vunpack.c.h.b16 %v811
        %v1104 = vunpack.c.l.b16 %v812
        %v1105 = vunpack.c.h.b16 %v812
        %v1106 = vunpack.c.l.b16 %v813
        %v1107 = vunpack.c.h.b16 %v813
        %v1108 = vunpack.c.l.b16 %v814
        %v1109 = vunpack.c.h.b16 %v814
        %v1110 = vunpack.c.l.b16 %v815
        %v1111 = vunpack.c.h.b16 %v815
        %v1112 = vunpack.c.l.b16 %v816
        %v1113 = vunpack.c.h.b16 %v816
        %v1114 = vunpack.c.l.b16 %v817
        %v1115 = vunpack.c.h.b16 %v817
        %v1116 = vunpack.c.l.b16 %v818
        %v1117 = vunpack.c.h.b16 %v818
        %v1118 = vunpack.c.l.b16 %v819
        %v1119 = vunpack.c.h.b16 %v819
        %v1120 = vunpack.c.l.b16 %v820
        %v1121 = vunpack.c.h.b16 %v820
        %v1122 = vunpack.c.l.b16 %v821
        %v1123 = vunpack.c.h.b16 %v821
        %v1124 = vunpack.c.l.b16 %v822
        %v1125 = vunpack.c.h.b16 %v822
        %v1126 = vunpack.c.l.b16 %v823
        %v1127 = vunpack.c.h.b16 %v823
        %v1128 = vunpack.c.l.b16 %v824
        %v1129 = vunpack.c.h.b16 %v824
        %v1130 = vunpack.c.l.b16 %v825
        %v1131 = vunpack.c.h.b16 %v825
        %v1132 = vunpack.c.l.b16 %v826
        %v1133 = vunpack.c.h.b16 %v826
        %v1134 = vunpack.c.l.b16 %v827
        %v1135 = vunpack.c.h.b16 %v827
        %v1136 = vunpack.c.l.b16 %v828
        %v1137 = vunpack.c.h.b16 %v828
        %v1138 = vunpack.c.l.b16 %v829
        %v1139 = vunpack.c.h.b16 %v829
        %v1140 = vunpack.c.l.b16 %v830
        %v1141 = vunpack.c.h.b16 %v830
        %v1142 = vunpack.c.l.b16 %v831
        %v1143 = vunpack.c.h.b16 %v831
        %v1144 = vunpack.c.l.b16 %v832
        %v1145 = vunpack.c.h.b16 %v832
        %v1146 = vunpack.c.l.b16 %v833
        %v1147 = vunpack.c.h.b16 %v833
        %v1148 = vunpack.c.l.b16 %v834
        %v1149 = vunpack.c.h.b16 %v834
        %v1150 = vunpack.c.l.b16 %v835
        %v1151 = vunpack.c.h.b16 %v835
        %v1152 = vunpack.c.l.b16 %v836
        %v1153 = vunpack.c.h.b16 %v836
        %v1154 = vunpack.c.l.b16 %v837
        %v1155 = vunpack.c.h.b16 %v837
        %v1156 = vunpack.c.l.b16 %v838
        %v1157 = vunpack.c.h.b16 %v838
        %v1158 = vunpack.c.l.b16 %v839
        %v1159 = vunpack.c.h.b16 %v839
        %v1160 = vunpack.c.l.b16 %v840
        %v1161 = vunpack.c.h.b16 %v840
        %v1162 = vunpack.c.l.b16 %v841
        %v1163 = vunpack.c.h.b16 %v841
        %v1164 = vunpack.c.l.b16 %v842
        %v1165 = vunpack.c.h.b16 %v842
        %v1166 = vunpack.c.l.b16 %v843
        %v1167 = vunpack.c.h.b16 %v843
        %v1168 = vunpack.c.l.b16 %v844
        %v1169 = vunpack.c.h.b16 %v844
        %v1170 = vunpack.c.l.b16 %v845
        %v1171 = vunpack.c.h.b16 %v845
        %v1172 = vunpack.c.l.b16 %v846
        %v1173 = vunpack.c.h.b16 %v846
        %v1174 = vunpack.c.l.b16 %v847
        %v1175 = vunpack.c.h.b16 %v847
        %v1176 = vunpack.c.l.b16 %v848
        %v1177 = vunpack.c.h.b16 %v848
        %v1178 = vunpack.c.l.b16 %v849
        %v1179 = vunpack.c.h.b16 %v849
        %v1180 = vunpack.c.l.b16 %v850
        %v1181 = vunpack.c.h.b16 %v850
        %v1182 = vunpack.c.l.b16 %v851
        %v1183 = vunpack.c.h.b16 %v851
        %v1184 = vunpack.c.l.b16 %v852
        %v1185 = vunpack.c.h.b16 %v852
        %v1186 = vunpack.c.l.b16 %v853
        %v1187 = vunpack.c.h.b16 %v853
        %v1188 = vunpack.c.l.b16 %v854
        %v1189 = vunpack.c.h.b16 %v854
        %v1190 = vunpack.c.l.b16 %v855
        %v1191 = vunpack.c.h.b16 %v855
        %v1192 = vunpack.c.l.b16 %v856
        %v1193 = vunpack.c.h.b16 %v856
        %v1194 = vunpack.c.l.b16 %v857
        %v1195 = vunpack.c.h.b16 %v857
        %v1196 = vunpack.c.l.b16 %v858
        %v1197 = vunpack.c.h.b16 %v858
        %v1198 = vunpack.c.l.b16 %v859
        %v1199 = vunpack.c.h.b16 %v859
        %v1200 = vunpack.c.l.b16 %v860
        %v1201 = vunpack.c.h.b16 %v860
        %v1202 = vunpack.c.l.b16 %v861
        %v1203 = vunpack.c.h.b16 %v861
        %v1204 = vunpack.c.l.b16 %v862
        %v1205 = vunpack.c.h.b16 %v862
        %v1206 = vunpack.c.l.b16 %v863
        %v1207 = vunpack.c.h.b16 %v863
        %v1208 = vunpack.c.l.b16 %v864
        %v1209 = vunpack.c.h.b16 %v864
        %v1210 = vunpack.c.l.b16 %v865
        %v1211 = vunpack.c.h.b16 %v865
        %v1212 = vunpack.c.l.b16 %v866
        %v1213 = vunpack.c.h.b16 %v866
        %v1214 = vunpack.c.l.b16 %v867
        %v1215 = vunpack.c.h.b16 %v867
        %v1216 = vunpack.c.l.b16 %v868
        %v1217 = vunpack.c.h.b16 %v868
        %v1218 = vunpack.c.l.b16 %v869
        %v1219 = vunpack.c.h.b16 %v869
        %v1220 = vunpack.c.l.b16 %v870
        %v1221 = vunpack.c.h.b16 %v870
        %v1222 = vunpack.c.l.b16 %v871
        %v1223 = vunpack.c.h.b16 %v871
        %v1224 = vunpack.c.l.b16 %v872
        %v1225 = vunpack.c.h.b16 %v872
        %v1226 = vunpack.c.l.b16 %v873
        %v1227 = vunpack.c.h.b16 %v873
        %v1228 = vunpack.c.l.b16 %v874
        %v1229 = vunpack.c.h.b16 %v874
        %v1230 = vunpack.c.l.b16 %v875
        %v1231 = vunpack.c.h.b16 %v875
        %v1232 = vunpack.c.l.b16 %v876
        %v1233 = vunpack.c.h.b16 %v876
        %v1234 = vunpack.c.l.b16 %v877
        %v1235 = vunpack.c.h.b16 %v877
        %v1236 = vunpack.c.l.b16 %v878
        %v1237 = vunpack.c.h.b16 %v878
        %v1238 = vunpack.c.l.b16 %v879
        %v1239 = vunpack.c.h.b16 %v879
        %v1240 = vunpack.c.l.b16 %v880
        %v1241 = vunpack.c.h.b16 %v880
        %v1242 = vunpack.c.l.b16 %v881
        %v1243 = vunpack.c.h.b16 %v881
        %v1244 = vunpack.c.l.b16 %v882
        %v1245 = vunpack.c.h.b16 %v882
        %v1246 = vunpack.c.l.b16 %v883
        %v1247 = vunpack.c.h.b16 %v883
        %v1248 = vunpack.c.l.b16 %v884
        %v1249 = vunpack.c.h.b16 %v884
        %v1250 = vunpack.c.l.b16 %v885
        %v1251 = vunpack.c.h.b16 %v885
        %v1252 = vunpack.c.l.b16 %v886
        %v1253 = vunpack.c.h.b16 %v886
        %v1254 = vunpack.c.l.b16 %v887
        %v1255 = vunpack.c.h.b16 %v887
        %v1256 = vunpack.c.l.b16 %v888
        %v1257 = vunpack.c.h.b16 %v888
        %v1258 = vunpack.c.l.b16 %v889
        %v1259 = vunpack.c.h.b16 %v889
        %v1260 = vunpack.c.l.b16 %v890
        %v1261 = vunpack.c.h.b16 %v890
        %v1262 = vunpack.c.l.b16 %v891
        %v1263 = vunpack.c.h.b16 %v891
        %v1264 = vunpack.c.l.b16 %v892
        %v1265 = vunpack.c.h.b16 %v892
        %v1266 = vunpack.c.l.b16 %v893
        %v1267 = vunpack.c.h.b16 %v893
        %v1268 = vunpack.c.l.b16 %v894
        %v1269 = vunpack.c.h.b16 %v894
        %v1270 = vunpack.c.l.b16 %v895
        %v1271 = vunpack.c.h.b16 %v895
        %v1272 = vunpack.c.l.b16 %v896
        %v1273 = vunpack.c.h.b16 %v896
        %v1274 = vunpack.c.l.b16 %v897
        %v1275 = vunpack.c.h.b16 %v897
        %v1276 = vunpack.c.l.b16 %v898
        %v1277 = vunpack.c.h.b16 %v898
        %v1278 = vunpack.c.l.b16 %v899
        %v1279 = vunpack.c.h.b16 %v899
        %v1280 = vunpack.c.l.b16 %v900
        %v1281 = vunpack.c.h.b16 %v900
        %v1282 = vunpack.c.l.b16 %v901
        %v1283 = vunpack.c.h.b16 %v901
        %v1284 = vunpack.c.l.b16 %v902
        %v1285 = vunpack.c.h.b16 %v902
        %v1286 = vunpack.c.l.b16 %v903
        %v1287 = vunpack.c.h.b16 %v903
        %v1288 = vunpack.c.l.b16 %v904
        %v1289 = vunpack.c.h.b16 %v904
        %v1290 = vunpack.c.l.b16 %v905
        %v1291 = vunpack.c.h.b16 %v905
        %v1292 = vunpack.c.l.b16 %v906
        %v1293 = vunpack.c.h.b16 %v906
        %v1294 = vunpack.c.l.b16 %v907
        %v1295 = vunpack.c.h.b16 %v907
        %v1296 = vunpack.c.l.b16 %v908
        %v1297 = vunpack.c.h.b16 %v908
        %v1298 = vpack.c.b16 %v1044, %v1042
        %v1299 = vpack.c.b16 %v1045, %v1043
        %v1300 = vpack.c.b16 %v1048, %v1046
        %v1301 = vpack.c.b16 %v1049, %v1047
        %v1302 = vpack.c.b16 %v1052, %v1050
        %v1303 = vpack.c.b16 %v1053, %v1051
        %v1304 = vpack.c.b16 %v1056, %v1054
        %v1305 = vpack.c.b16 %v1057, %v1055
        %v1306 = vpack.c.b16 %v1060, %v1058
        %v1307 = vpack.c.b16 %v1061, %v1059
        %v1308 = vpack.c.b16 %v1064, %v1062
        %v1309 = vpack.c.b16 %v1065, %v1063
        %v1310 = vpack.c.b16 %v1068, %v1066
        %v1311 = vpack.c.b16 %v1069, %v1067
        %v1312 = vpack.c.b16 %v1072, %v1070
        %v1313 = vpack.c.b16 %v1073, %v1071
        %v1314 = vpack.c.b16 %v1076, %v1074
        %v1315 = vpack.c.b16 %v1077, %v1075
        %v1316 = vpack.c.b16 %v1080, %v1078
        %v1317 = vpack.c.b16 %v1081, %v1079
        %v1318 = vpack.c.b16 %v1084, %v1082
        %v1319 = vpack.c.b16 %v1085, %v1083
        %v1320 = vpack.c.b16 %v1088, %v1086
        %v1321 = vpack.c.b16 %v1089, %v1087
        %v1322 = vpack.c.b16 %v1092, %v1090
        %v1323 = vpack.c.b16 %v1093, %v1091
        %v1324 = vpack.c.b16 %v1096, %v1094
        %v1325 = vpack.c.b16 %v1097, %v1095
        %v1326 = vpack.c.b16 %v1100, %v1098
        %v1327 = vpack.c.b16 %v1101, %v1099
        %v1328 = vpack.c.b16 %v1104, %v1102
        %v1329 = vpack.c.b16 %v1105, %v1103
        %v1330 = vpack.c.b16 %v1108, %v1106
        %v1331 = vpack.c.b16 %v1109, %v1107
        %v1332 = vpack.c.b16 %v1112, %v1110
        %v1333 = vpack.c.b16 %v1113, %v1111
        %v1334 = vpack.c.b16 %v1116, %v1114
        %v1335 = vpack.c.b16 %v1117, %v1115
        %v1336 = vpack.c.b16 %v1120, %v1118
        %v1337 = vpack.c.b16 %v1121, %v1119
        %v1338 = vpack.c.b16 %v1124, %v1122
        %v1339 = vpack.c.b16 %v1125, %v1123
        %v1340 = vpack.c.b16 %v1128, %v1126
        %v1341 = vpack.c.b16 %v1129, %v1127
        %v1342 = vpack.c.b16 %v1132, %v1130
        %v1343 = vpack.c.b16 %v1133, %v1131
        %v1344 = vpack.c.b16 %v1136, %v1134
        %v1345 = vpack.c.b16 %v1137, %v1135
        %v1346 = vpack.c.b16 %v1140, %v1138
        %v1347 = vpack.c.b16 %v1141, %v1139
        %v1348 = vpack.c.b16 %v1144, %v1142
        %v1349 = vpack.c.b16 %v1145, %v1143
        %v1350 = vpack.c.b16 %v1148, %v1146
        %v1351 = vpack.c.b16 %v1149, %v1147
        %v1352 = vpack.c.b16 %v1152, %v1150
        %v1353 = vpack.c.b16 %v1153, %v1151
        %v1354 = vpack.c.b16 %v1156, %v1154
        %v1355 = vpack.c.b16 %v1157, %v1155
        %v1356 = vpack.c.b16 %v1160, %v1158
        %v1357 = vpack.c.b16 %v1161, %v1159
        %v1358 = vpack.c.b16 %v1164, %v1162
        %v1359 = vpack.c.b16 %v1165, %v1163
        %v1360 = vpack.c.b16 %v1168, %v1166
        %v1361 = vpack.c.b16 %v1169, %v1167
        %v1362 = vpack.c.b16 %v1172, %v1170
        %v1363 = vpack.c.b16 %v1173, %v1171
        %v1364 = vpack.c.b16 %v1176, %v1174
        %v1365 = vpack.c.b16 %v1177, %v1175
        %v1366 = vpack.c.b16 %v1180, %v1178
        %v1367 = vpack.c.b16 %v1181, %v1179
        %v1368 = vpack.c.b16 %v1184, %v1182
        %v1369 = vpack.c.b16 %v1185, %v1183
        %v1370 = vpack.c.b16 %v1188, %v1186
        %v1371 = vpack.c.b16 %v1189, %v1187
        %v1372 = vpack.c.b16 %v1192, %v1190
        %v1373 = vpack.c.b16 %v1193, %v1191
        %v1374 = vpack.c.b16 %v1196, %v1194
        %v1375 = vpack.c.b16 %v1197, %v1195
        %v1376 = vpack.c.b16 %v1200, %v1198
        %v1377 = vpack.c.b16 %v1201, %v1199
        %v1378 = vpack.c.b16 %v1204, %v1202
        %v1379 = vpack.c.b16 %v1205, %v1203
        %v1380 = vpack.c.b16 %v1208, %v1206
        %v1381 = vpack.c.b16 %v1209, %v1207
        %v1382 = vpack.c.b16 %v1212, %v1210
        %v1383 = vpack.c.b16 %v1213, %v1211
        %v1384 = vpack.c.b16 %v1216, %v1214
        %v1385 = vpack.c.b16 %v1217, %v1215
        %v1386 = vpack.c.b16 %v1220, %v1218
        %v1387 = vpack.c.b16 %v1221, %v1219
        %v1388 = vpack.c.b16 %v1224, %v1222
        %v1389 = vpack.c.b16 %v1225, %v1223
        %v1390 = vpack.c.b16 %v1228, %v1226
        %v1391 = vpack.c.b16 %v1229, %v1227
        %v1392 = vpack.c.b16 %v1232, %v1230
        %v1393 = vpack.c.b16 %v1233, %v1231
        %v1394 = vpack.c.b16 %v1236, %v1234
        %v1395 = vpack.c.b16 %v1237, %v1235
        %v1396 = vpack.c.b16 %v1240, %v1238
        %v1397 = vpack.c.b16 %v1241, %v1239
        %v1398 = vpack.c.b16 %v1244, %v1242
        %v1399 = vpack.c.b16 %v1245, %v1243
        %v1400 = vpack.c.b16 %v1248, %v1246
        %v1401 = vpack.c.b16 %v1249, %v1247
        %v1402 = vpack.c.b16 %v1252, %v1250
        %v1403 = vpack.c.b16 %v1253, %v1251
        %v1404 = vpack.c.b16 %v1256, %v1254
        %v1405 = vpack.c.b16 %v1257, %v1255
        %v1406 = vpack.c.b16 %v1260, %v1258
        %v1407 = vpack.c.b16 %v1261, %v1259
        %v1408 = vpack.c.b16 %v1264, %v1262
        %v1409 = vpack.c.b16 %v1265, %v1263
        %v1410 = vpack.c.b16 %v1268, %v1266
        %v1411 = vpack.c.b16 %v1269, %v1267
        %v1412 = vpack.c.b16 %v1272, %v1270
        %v1413 = vpack.c.b16 %v1273, %v1271
        %v1414 = vpack.c.b16 %v1276, %v1274
        %v1415 = vpack.c.b16 %v1277, %v1275
        %v1416 = vpack.c.b16 %v1280, %v1278
        %v1417 = vpack.c.b16 %v1281, %v1279
        %v1418 = vpack.c.b16 %v1284, %v1282
        %v1419 = vpack.c.b16 %v1285, %v1283
        %v1420 = vpack.c.b16 %v1288, %v1286
        %v1421 = vpack.c.b16 %v1289, %v1287
        %v1422 = vpack.c.b16 %v1292, %v1290
        %v1423 = vpack.c.b16 %v1293, %v1291
        %v1424 = vpack.c.b16 %v1296, %v1294
        %v1425 = vpack.c.b16 %v1297, %v1295
        %1554 = vmatpush.bf16.msra.mxu0 %v1312
        %1555 = vmatpush.bf16.msra.mxu0 %v1310
        %1556 = vmatpush.bf16.msra.mxu0 %v1308
        %1557 = vmatpush.bf16.msra.mxu0 %v1306
        %1558 = vmatpush.bf16.msra.mxu0 %v1304
        %1559 = vmatpush.bf16.msra.mxu0 %v1302
        %1560 = vmatpush.bf16.msra.mxu0 %v1300
        %1561 = vmatpush.bf16.msra.mxu0 %v1298
        %1562 = vmatmul.bf16.gmra.mxu0 %v653
        %v1563 = vpop.f32.mrf.mxu0
        %v1564 = vadd.f32 %v910, %v1563
        %v1565 = vpop.f32.mrf.mxu0
        %v1566 = vadd.f32 %v910, %v1565
        %1567 = vmatmul.bf16.gmra.mxu0 %v661
        %v1568 = vpop.f32.mrf.mxu0
        %v1569 = vadd.f32 %v910, %v1568
        %v1570 = vpop.f32.mrf.mxu0
        %v1571 = vadd.f32 %v910, %v1570
        %1572 = vmatmul.bf16.gmra.mxu0 %v669
        %v1573 = vpop.f32.mrf.mxu0
        %v1574 = vadd.f32 %v910, %v1573
        %v1575 = vpop.f32.mrf.mxu0
        %v1576 = vadd.f32 %v910, %v1575
        %1577 = vmatmul.bf16.gmra.mxu0 %v677
        %v1578 = vpop.f32.mrf.mxu0
        %v1579 = vadd.f32 %v910, %v1578
        %v1580 = vpop.f32.mrf.mxu0
        %v1581 = vadd.f32 %v910, %v1580
        %1582 = vmatmul.bf16.gmra.mxu0 %v685
        %v1583 = vpop.f32.mrf.mxu0
        %v1584 = vadd.f32 %v910, %v1583
        %v1585 = vpop.f32.mrf.mxu0
        %v1586 = vadd.f32 %v910, %v1585
        %1587 = vmatmul.bf16.gmra.mxu0 %v693
        %v1588 = vpop.f32.mrf.mxu0
        %v1589 = vadd.f32 %v910, %v1588
        %v1590 = vpop.f32.mrf.mxu0
        %v1591 = vadd.f32 %v910, %v1590
        %1592 = vmatmul.bf16.gmra.mxu0 %v701
        %v1593 = vpop.f32.mrf.mxu0
        %v1594 = vadd.f32 %v910, %v1593
        %v1595 = vpop.f32.mrf.mxu0
        %v1596 = vadd.f32 %v910, %v1595
        %1597 = vmatmul.bf16.gmra.mxu0 %v709
        %v1598 = vpop.f32.mrf.mxu0
        %v1599 = vadd.f32 %v910, %v1598
        %v1600 = vpop.f32.mrf.mxu0
        %v1601 = vadd.f32 %v910, %v1600
        %1602 = vmatmul.bf16.gmra.mxu0 %v717
        %v1603 = vpop.f32.mrf.mxu0
        %v1604 = vadd.f32 %v910, %v1603
        %v1605 = vpop.f32.mrf.mxu0
        %v1606 = vadd.f32 %v910, %v1605
        %1607 = vmatmul.bf16.gmra.mxu0 %v725
        %v1608 = vpop.f32.mrf.mxu0
        %v1609 = vadd.f32 %v910, %v1608
        %v1610 = vpop.f32.mrf.mxu0
        %v1611 = vadd.f32 %v910, %v1610
        %1612 = vmatmul.bf16.gmra.mxu0 %v733
        %v1613 = vpop.f32.mrf.mxu0
        %v1614 = vadd.f32 %v910, %v1613
        %v1615 = vpop.f32.mrf.mxu0
        %v1616 = vadd.f32 %v910, %v1615
        %1617 = vmatmul.bf16.gmra.mxu0 %v741
        %v1618 = vpop.f32.mrf.mxu0
        %v1619 = vadd.f32 %v910, %v1618
        %v1620 = vpop.f32.mrf.mxu0
        %v1621 = vadd.f32 %v910, %v1620
        %1622 = vmatmul.bf16.gmra.mxu0 %v749
        %v1623 = vpop.f32.mrf.mxu0
        %v1624 = vadd.f32 %v910, %v1623
        %v1625 = vpop.f32.mrf.mxu0
        %v1626 = vadd.f32 %v910, %v1625
        %1627 = vmatmul.bf16.gmra.mxu0 %v757
        %v1628 = vpop.f32.mrf.mxu0
        %v1629 = vadd.f32 %v910, %v1628
        %v1630 = vpop.f32.mrf.mxu0
        %v1631 = vadd.f32 %v910, %v1630
        %1632 = vmatmul.bf16.gmra.mxu0 %v765
        %v1633 = vpop.f32.mrf.mxu0
        %v1634 = vadd.f32 %v910, %v1633
        %v1635 = vpop.f32.mrf.mxu0
        %v1636 = vadd.f32 %v910, %v1635
        %1637 = vmatmul.bf16.gmra.mxu0 %v773
        %v1638 = vpop.f32.mrf.mxu0
        %v1639 = vadd.f32 %v910, %v1638
        %v1640 = vpop.f32.mrf.mxu0
        %v1641 = vadd.f32 %v910, %v1640
        %1642 = vdwg.mxu0
        %1643 = vmatpush.bf16.msra.mxu0 %v1328
        %1644 = vmatpush.bf16.msra.mxu0 %v1326
        %1645 = vmatpush.bf16.msra.mxu0 %v1324
        %1646 = vmatpush.bf16.msra.mxu0 %v1322
        %1647 = vmatpush.bf16.msra.mxu0 %v1320
        %1648 = vmatpush.bf16.msra.mxu0 %v1318
        %1649 = vmatpush.bf16.msra.mxu0 %v1316
        %1650 = vmatpush.bf16.msra.mxu0 %v1314
        %1651 = vmatmul.bf16.gmra.mxu0 %v654
        %v1652 = vpop.f32.mrf.mxu0
        %v1653 = vadd.f32 %v1564, %v1652
        %v1654 = vpop.f32.mrf.mxu0
        %v1655 = vadd.f32 %v1566, %v1654
        %1656 = vmatmul.bf16.gmra.mxu0 %v662
        %v1657 = vpop.f32.mrf.mxu0
        %v1658 = vadd.f32 %v1569, %v1657
        %v1659 = vpop.f32.mrf.mxu0
        %v1660 = vadd.f32 %v1571, %v1659
        %1661 = vmatmul.bf16.gmra.mxu0 %v670
        %v1662 = vpop.f32.mrf.mxu0
        %v1663 = vadd.f32 %v1574, %v1662
        %v1664 = vpop.f32.mrf.mxu0
        %v1665 = vadd.f32 %v1576, %v1664
        %1666 = vmatmul.bf16.gmra.mxu0 %v678
        %v1667 = vpop.f32.mrf.mxu0
        %v1668 = vadd.f32 %v1579, %v1667
        %v1669 = vpop.f32.mrf.mxu0
        %v1670 = vadd.f32 %v1581, %v1669
        %1671 = vmatmul.bf16.gmra.mxu0 %v686
        %v1672 = vpop.f32.mrf.mxu0
        %v1673 = vadd.f32 %v1584, %v1672
        %v1674 = vpop.f32.mrf.mxu0
        %v1675 = vadd.f32 %v1586, %v1674
        %1676 = vmatmul.bf16.gmra.mxu0 %v694
        %v1677 = vpop.f32.mrf.mxu0
        %v1678 = vadd.f32 %v1589, %v1677
        %v1679 = vpop.f32.mrf.mxu0
        %v1680 = vadd.f32 %v1591, %v1679
        %1681 = vmatmul.bf16.gmra.mxu0 %v702
        %v1682 = vpop.f32.mrf.mxu0
        %v1683 = vadd.f32 %v1594, %v1682
        %v1684 = vpop.f32.mrf.mxu0
        %v1685 = vadd.f32 %v1596, %v1684
        %1686 = vmatmul.bf16.gmra.mxu0 %v710
        %v1687 = vpop.f32.mrf.mxu0
        %v1688 = vadd.f32 %v1599, %v1687
        %v1689 = vpop.f32.mrf.mxu0
        %v1690 = vadd.f32 %v1601, %v1689
        %1691 = vmatmul.bf16.gmra.mxu0 %v718
        %v1692 = vpop.f32.mrf.mxu0
        %v1693 = vadd.f32 %v1604, %v1692
        %v1694 = vpop.f32.mrf.mxu0
        %v1695 = vadd.f32 %v1606, %v1694
        %1696 = vmatmul.bf16.gmra.mxu0 %v726
        %v1697 = vpop.f32.mrf.mxu0
        %v1698 = vadd.f32 %v1609, %v1697
        %v1699 = vpop.f32.mrf.mxu0
        %v1700 = vadd.f32 %v1611, %v1699
        %1701 = vmatmul.bf16.gmra.mxu0 %v734
        %v1702 = vpop.f32.mrf.mxu0
        %v1703 = vadd.f32 %v1614, %v1702
        %v1704 = vpop.f32.mrf.mxu0
        %v1705 = vadd.f32 %v1616, %v1704
        %1706 = vmatmul.bf16.gmra.mxu0 %v742
        %v1707 = vpop.f32.mrf.mxu0
        %v1708 = vadd.f32 %v1619, %v1707
        %v1709 = vpop.f32.mrf.mxu0
        %v1710 = vadd.f32 %v1621, %v1709
        %1711 = vmatmul.bf16.gmra.mxu0 %v750
        %v1712 = vpop.f32.mrf.mxu0
        %v1713 = vadd.f32 %v1624, %v1712
        %v1714 = vpop.f32.mrf.mxu0
        %v1715 = vadd.f32 %v1626, %v1714
        %1716 = vmatmul.bf16.gmra.mxu0 %v758
        %v1717 = vpop.f32.mrf.mxu0
        %v1718 = vadd.f32 %v1629, %v1717
        %v1719 = vpop.f32.mrf.mxu0
        %v1720 = vadd.f32 %v1631, %v1719
        %1721 = vmatmul.bf16.gmra.mxu0 %v766
        %v1722 = vpop.f32.mrf.mxu0
        %v1723 = vadd.f32 %v1634, %v1722
        %v1724 = vpop.f32.mrf.mxu0
        %v1725 = vadd.f32 %v1636, %v1724
        %1726 = vmatmul.bf16.gmra.mxu0 %v774
        %v1727 = vpop.f32.mrf.mxu0
        %v1728 = vadd.f32 %v1639, %v1727
        %v1729 = vpop.f32.mrf.mxu0
        %v1730 = vadd.f32 %v1641, %v1729
        %1731 = vdwg.mxu0
        %1732 = vmatpush.bf16.msra.mxu0 %v1344
        %1733 = vmatpush.bf16.msra.mxu0 %v1342
        %1734 = vmatpush.bf16.msra.mxu0 %v1340
        %1735 = vmatpush.bf16.msra.mxu0 %v1338
        %1736 = vmatpush.bf16.msra.mxu0 %v1336
        %1737 = vmatpush.bf16.msra.mxu0 %v1334
        %1738 = vmatpush.bf16.msra.mxu0 %v1332
        %1739 = vmatpush.bf16.msra.mxu0 %v1330
        %1740 = vmatmul.bf16.gmra.mxu0 %v655
        %v1741 = vpop.f32.mrf.mxu0
        %v1742 = vadd.f32 %v1653, %v1741
        %v1743 = vpop.f32.mrf.mxu0
        %v1744 = vadd.f32 %v1655, %v1743
        %1745 = vmatmul.bf16.gmra.mxu0 %v663
        %v1746 = vpop.f32.mrf.mxu0
        %v1747 = vadd.f32 %v1658, %v1746
        %v1748 = vpop.f32.mrf.mxu0
        %v1749 = vadd.f32 %v1660, %v1748
        %1750 = vmatmul.bf16.gmra.mxu0 %v671
        %v1751 = vpop.f32.mrf.mxu0
        %v1752 = vadd.f32 %v1663, %v1751
        %v1753 = vpop.f32.mrf.mxu0
        %v1754 = vadd.f32 %v1665, %v1753
        %1755 = vmatmul.bf16.gmra.mxu0 %v679
        %v1756 = vpop.f32.mrf.mxu0
        %v1757 = vadd.f32 %v1668, %v1756
        %v1758 = vpop.f32.mrf.mxu0
        %v1759 = vadd.f32 %v1670, %v1758
        %1760 = vmatmul.bf16.gmra.mxu0 %v687
        %v1761 = vpop.f32.mrf.mxu0
        %v1762 = vadd.f32 %v1673, %v1761
        %v1763 = vpop.f32.mrf.mxu0
        %v1764 = vadd.f32 %v1675, %v1763
        %1765 = vmatmul.bf16.gmra.mxu0 %v695
        %v1766 = vpop.f32.mrf.mxu0
        %v1767 = vadd.f32 %v1678, %v1766
        %v1768 = vpop.f32.mrf.mxu0
        %v1769 = vadd.f32 %v1680, %v1768
        %1770 = vmatmul.bf16.gmra.mxu0 %v703
        %v1771 = vpop.f32.mrf.mxu0
        %v1772 = vadd.f32 %v1683, %v1771
        %v1773 = vpop.f32.mrf.mxu0
        %v1774 = vadd.f32 %v1685, %v1773
        %1775 = vmatmul.bf16.gmra.mxu0 %v711
        %v1776 = vpop.f32.mrf.mxu0
        %v1777 = vadd.f32 %v1688, %v1776
        %v1778 = vpop.f32.mrf.mxu0
        %v1779 = vadd.f32 %v1690, %v1778
        %1780 = vmatmul.bf16.gmra.mxu0 %v719
        %v1781 = vpop.f32.mrf.mxu0
        %v1782 = vadd.f32 %v1693, %v1781
        %v1783 = vpop.f32.mrf.mxu0
        %v1784 = vadd.f32 %v1695, %v1783
        %1785 = vmatmul.bf16.gmra.mxu0 %v727
        %v1786 = vpop.f32.mrf.mxu0
        %v1787 = vadd.f32 %v1698, %v1786
        %v1788 = vpop.f32.mrf.mxu0
        %v1789 = vadd.f32 %v1700, %v1788
        %1790 = vmatmul.bf16.gmra.mxu0 %v735
        %v1791 = vpop.f32.mrf.mxu0
        %v1792 = vadd.f32 %v1703, %v1791
        %v1793 = vpop.f32.mrf.mxu0
        %v1794 = vadd.f32 %v1705, %v1793
        %1795 = vmatmul.bf16.gmra.mxu0 %v743
        %v1796 = vpop.f32.mrf.mxu0
        %v1797 = vadd.f32 %v1708, %v1796
        %v1798 = vpop.f32.mrf.mxu0
        %v1799 = vadd.f32 %v1710, %v1798
        %1800 = vmatmul.bf16.gmra.mxu0 %v751
        %v1801 = vpop.f32.mrf.mxu0
        %v1802 = vadd.f32 %v1713, %v1801
        %v1803 = vpop.f32.mrf.mxu0
        %v1804 = vadd.f32 %v1715, %v1803
        %1805 = vmatmul.bf16.gmra.mxu0 %v759
        %v1806 = vpop.f32.mrf.mxu0
        %v1807 = vadd.f32 %v1718, %v1806
        %v1808 = vpop.f32.mrf.mxu0
        %v1809 = vadd.f32 %v1720, %v1808
        %1810 = vmatmul.bf16.gmra.mxu0 %v767
        %v1811 = vpop.f32.mrf.mxu0
        %v1812 = vadd.f32 %v1723, %v1811
        %v1813 = vpop.f32.mrf.mxu0
        %v1814 = vadd.f32 %v1725, %v1813
        %1815 = vmatmul.bf16.gmra.mxu0 %v775
        %v1816 = vpop.f32.mrf.mxu0
        %v1817 = vadd.f32 %v1728, %v1816
        %v1818 = vpop.f32.mrf.mxu0
        %v1819 = vadd.f32 %v1730, %v1818
        %1820 = vdwg.mxu0
        %1821 = vmatpush.bf16.msra.mxu0 %v1360
        %1822 = vmatpush.bf16.msra.mxu0 %v1358
        %1823 = vmatpush.bf16.msra.mxu0 %v1356
        %1824 = vmatpush.bf16.msra.mxu0 %v1354
        %1825 = vmatpush.bf16.msra.mxu0 %v1352
        %1826 = vmatpush.bf16.msra.mxu0 %v1350
        %1827 = vmatpush.bf16.msra.mxu0 %v1348
        %1828 = vmatpush.bf16.msra.mxu0 %v1346
        %1829 = vmatmul.bf16.gmra.mxu0 %v656
        %v1830 = vpop.f32.mrf.mxu0
        %v1831 = vadd.f32 %v1742, %v1830
        %v1832 = vpop.f32.mrf.mxu0
        %v1833 = vadd.f32 %v1744, %v1832
        %1834 = vmatmul.bf16.gmra.mxu0 %v664
        %v1835 = vpop.f32.mrf.mxu0
        %v1836 = vadd.f32 %v1747, %v1835
        %v1837 = vpop.f32.mrf.mxu0
        %v1838 = vadd.f32 %v1749, %v1837
        %1839 = vmatmul.bf16.gmra.mxu0 %v672
        %v1840 = vpop.f32.mrf.mxu0
        %v1841 = vadd.f32 %v1752, %v1840
        %v1842 = vpop.f32.mrf.mxu0
        %v1843 = vadd.f32 %v1754, %v1842
        %1844 = vmatmul.bf16.gmra.mxu0 %v680
        %v1845 = vpop.f32.mrf.mxu0
        %v1846 = vadd.f32 %v1757, %v1845
        %v1847 = vpop.f32.mrf.mxu0
        %v1848 = vadd.f32 %v1759, %v1847
        %1849 = vmatmul.bf16.gmra.mxu0 %v688
        %v1850 = vpop.f32.mrf.mxu0
        %v1851 = vadd.f32 %v1762, %v1850
        %v1852 = vpop.f32.mrf.mxu0
        %v1853 = vadd.f32 %v1764, %v1852
        %1854 = vmatmul.bf16.gmra.mxu0 %v696
        %v1855 = vpop.f32.mrf.mxu0
        %v1856 = vadd.f32 %v1767, %v1855
        %v1857 = vpop.f32.mrf.mxu0
        %v1858 = vadd.f32 %v1769, %v1857
        %1859 = vmatmul.bf16.gmra.mxu0 %v704
        %v1860 = vpop.f32.mrf.mxu0
        %v1861 = vadd.f32 %v1772, %v1860
        %v1862 = vpop.f32.mrf.mxu0
        %v1863 = vadd.f32 %v1774, %v1862
        %1864 = vmatmul.bf16.gmra.mxu0 %v712
        %v1865 = vpop.f32.mrf.mxu0
        %v1866 = vadd.f32 %v1777, %v1865
        %v1867 = vpop.f32.mrf.mxu0
        %v1868 = vadd.f32 %v1779, %v1867
        %1869 = vmatmul.bf16.gmra.mxu0 %v720
        %v1870 = vpop.f32.mrf.mxu0
        %v1871 = vadd.f32 %v1782, %v1870
        %v1872 = vpop.f32.mrf.mxu0
        %v1873 = vadd.f32 %v1784, %v1872
        %1874 = vmatmul.bf16.gmra.mxu0 %v728
        %v1875 = vpop.f32.mrf.mxu0
        %v1876 = vadd.f32 %v1787, %v1875
        %v1877 = vpop.f32.mrf.mxu0
        %v1878 = vadd.f32 %v1789, %v1877
        %1879 = vmatmul.bf16.gmra.mxu0 %v736
        %v1880 = vpop.f32.mrf.mxu0
        %v1881 = vadd.f32 %v1792, %v1880
        %v1882 = vpop.f32.mrf.mxu0
        %v1883 = vadd.f32 %v1794, %v1882
        %1884 = vmatmul.bf16.gmra.mxu0 %v744
        %v1885 = vpop.f32.mrf.mxu0
        %v1886 = vadd.f32 %v1797, %v1885
        %v1887 = vpop.f32.mrf.mxu0
        %v1888 = vadd.f32 %v1799, %v1887
        %1889 = vmatmul.bf16.gmra.mxu0 %v752
        %v1890 = vpop.f32.mrf.mxu0
        %v1891 = vadd.f32 %v1802, %v1890
        %v1892 = vpop.f32.mrf.mxu0
        %v1893 = vadd.f32 %v1804, %v1892
        %1894 = vmatmul.bf16.gmra.mxu0 %v760
        %v1895 = vpop.f32.mrf.mxu0
        %v1896 = vadd.f32 %v1807, %v1895
        %v1897 = vpop.f32.mrf.mxu0
        %v1898 = vadd.f32 %v1809, %v1897
        %1899 = vmatmul.bf16.gmra.mxu0 %v768
        %v1900 = vpop.f32.mrf.mxu0
        %v1901 = vadd.f32 %v1812, %v1900
        %v1902 = vpop.f32.mrf.mxu0
        %v1903 = vadd.f32 %v1814, %v1902
        %1904 = vmatmul.bf16.gmra.mxu0 %v776
        %v1905 = vpop.f32.mrf.mxu0
        %v1906 = vadd.f32 %v1817, %v1905
        %v1907 = vpop.f32.mrf.mxu0
        %v1908 = vadd.f32 %v1819, %v1907
        %1909 = vdwg.mxu0
        %1910 = vmatpush.bf16.msra.mxu0 %v1376
        %1911 = vmatpush.bf16.msra.mxu0 %v1374
        %1912 = vmatpush.bf16.msra.mxu0 %v1372
        %1913 = vmatpush.bf16.msra.mxu0 %v1370
        %1914 = vmatpush.bf16.msra.mxu0 %v1368
        %1915 = vmatpush.bf16.msra.mxu0 %v1366
        %1916 = vmatpush.bf16.msra.mxu0 %v1364
        %1917 = vmatpush.bf16.msra.mxu0 %v1362
        %1918 = vmatmul.bf16.gmra.mxu0 %v657
        %v1919 = vpop.f32.mrf.mxu0
        %v1920 = vadd.f32 %v1831, %v1919
        %v1921 = vpop.f32.mrf.mxu0
        %v1922 = vadd.f32 %v1833, %v1921
        %1923 = vmatmul.bf16.gmra.mxu0 %v665
        %v1924 = vpop.f32.mrf.mxu0
        %v1925 = vadd.f32 %v1836, %v1924
        %v1926 = vpop.f32.mrf.mxu0
        %v1927 = vadd.f32 %v1838, %v1926
        %1928 = vmatmul.bf16.gmra.mxu0 %v673
        %v1929 = vpop.f32.mrf.mxu0
        %v1930 = vadd.f32 %v1841, %v1929
        %v1931 = vpop.f32.mrf.mxu0
        %v1932 = vadd.f32 %v1843, %v1931
        %1933 = vmatmul.bf16.gmra.mxu0 %v681
        %v1934 = vpop.f32.mrf.mxu0
        %v1935 = vadd.f32 %v1846, %v1934
        %v1936 = vpop.f32.mrf.mxu0
        %v1937 = vadd.f32 %v1848, %v1936
        %1938 = vmatmul.bf16.gmra.mxu0 %v689
        %v1939 = vpop.f32.mrf.mxu0
        %v1940 = vadd.f32 %v1851, %v1939
        %v1941 = vpop.f32.mrf.mxu0
        %v1942 = vadd.f32 %v1853, %v1941
        %1943 = vmatmul.bf16.gmra.mxu0 %v697
        %v1944 = vpop.f32.mrf.mxu0
        %v1945 = vadd.f32 %v1856, %v1944
        %v1946 = vpop.f32.mrf.mxu0
        %v1947 = vadd.f32 %v1858, %v1946
        %1948 = vmatmul.bf16.gmra.mxu0 %v705
        %v1949 = vpop.f32.mrf.mxu0
        %v1950 = vadd.f32 %v1861, %v1949
        %v1951 = vpop.f32.mrf.mxu0
        %v1952 = vadd.f32 %v1863, %v1951
        %1953 = vmatmul.bf16.gmra.mxu0 %v713
        %v1954 = vpop.f32.mrf.mxu0
        %v1955 = vadd.f32 %v1866, %v1954
        %v1956 = vpop.f32.mrf.mxu0
        %v1957 = vadd.f32 %v1868, %v1956
        %1958 = vmatmul.bf16.gmra.mxu0 %v721
        %v1959 = vpop.f32.mrf.mxu0
        %v1960 = vadd.f32 %v1871, %v1959
        %v1961 = vpop.f32.mrf.mxu0
        %v1962 = vadd.f32 %v1873, %v1961
        %1963 = vmatmul.bf16.gmra.mxu0 %v729
        %v1964 = vpop.f32.mrf.mxu0
        %v1965 = vadd.f32 %v1876, %v1964
        %v1966 = vpop.f32.mrf.mxu0
        %v1967 = vadd.f32 %v1878, %v1966
        %1968 = vmatmul.bf16.gmra.mxu0 %v737
        %v1969 = vpop.f32.mrf.mxu0
        %v1970 = vadd.f32 %v1881, %v1969
        %v1971 = vpop.f32.mrf.mxu0
        %v1972 = vadd.f32 %v1883, %v1971
        %1973 = vmatmul.bf16.gmra.mxu0 %v745
        %v1974 = vpop.f32.mrf.mxu0
        %v1975 = vadd.f32 %v1886, %v1974
        %v1976 = vpop.f32.mrf.mxu0
        %v1977 = vadd.f32 %v1888, %v1976
        %1978 = vmatmul.bf16.gmra.mxu0 %v753
        %v1979 = vpop.f32.mrf.mxu0
        %v1980 = vadd.f32 %v1891, %v1979
        %v1981 = vpop.f32.mrf.mxu0
        %v1982 = vadd.f32 %v1893, %v1981
        %1983 = vmatmul.bf16.gmra.mxu0 %v761
        %v1984 = vpop.f32.mrf.mxu0
        %v1985 = vadd.f32 %v1896, %v1984
        %v1986 = vpop.f32.mrf.mxu0
        %v1987 = vadd.f32 %v1898, %v1986
        %1988 = vmatmul.bf16.gmra.mxu0 %v769
        %v1989 = vpop.f32.mrf.mxu0
        %v1990 = vadd.f32 %v1901, %v1989
        %v1991 = vpop.f32.mrf.mxu0
        %v1992 = vadd.f32 %v1903, %v1991
        %1993 = vmatmul.bf16.gmra.mxu0 %v777
        %v1994 = vpop.f32.mrf.mxu0
        %v1995 = vadd.f32 %v1906, %v1994
        %v1996 = vpop.f32.mrf.mxu0
        %v1997 = vadd.f32 %v1908, %v1996
        %1998 = vdwg.mxu0
        %1999 = vmatpush.bf16.msra.mxu0 %v1392
        %2000 = vmatpush.bf16.msra.mxu0 %v1390
        %2001 = vmatpush.bf16.msra.mxu0 %v1388
        %2002 = vmatpush.bf16.msra.mxu0 %v1386
        %2003 = vmatpush.bf16.msra.mxu0 %v1384
        %2004 = vmatpush.bf16.msra.mxu0 %v1382
        %2005 = vmatpush.bf16.msra.mxu0 %v1380
        %2006 = vmatpush.bf16.msra.mxu0 %v1378
        %2007 = vmatmul.bf16.gmra.mxu0 %v658
        %v2008 = vpop.f32.mrf.mxu0
        %v2009 = vadd.f32 %v1920, %v2008
        %v2010 = vpop.f32.mrf.mxu0
        %v2011 = vadd.f32 %v1922, %v2010
        %2012 = vmatmul.bf16.gmra.mxu0 %v666
        %v2013 = vpop.f32.mrf.mxu0
        %v2014 = vadd.f32 %v1925, %v2013
        %v2015 = vpop.f32.mrf.mxu0
        %v2016 = vadd.f32 %v1927, %v2015
        %2017 = vmatmul.bf16.gmra.mxu0 %v674
        %v2018 = vpop.f32.mrf.mxu0
        %v2019 = vadd.f32 %v1930, %v2018
        %v2020 = vpop.f32.mrf.mxu0
        %v2021 = vadd.f32 %v1932, %v2020
        %2022 = vmatmul.bf16.gmra.mxu0 %v682
        %v2023 = vpop.f32.mrf.mxu0
        %v2024 = vadd.f32 %v1935, %v2023
        %v2025 = vpop.f32.mrf.mxu0
        %v2026 = vadd.f32 %v1937, %v2025
        %2027 = vmatmul.bf16.gmra.mxu0 %v690
        %v2028 = vpop.f32.mrf.mxu0
        %v2029 = vadd.f32 %v1940, %v2028
        %v2030 = vpop.f32.mrf.mxu0
        %v2031 = vadd.f32 %v1942, %v2030
        %2032 = vmatmul.bf16.gmra.mxu0 %v698
        %v2033 = vpop.f32.mrf.mxu0
        %v2034 = vadd.f32 %v1945, %v2033
        %v2035 = vpop.f32.mrf.mxu0
        %v2036 = vadd.f32 %v1947, %v2035
        %2037 = vmatmul.bf16.gmra.mxu0 %v706
        %v2038 = vpop.f32.mrf.mxu0
        %v2039 = vadd.f32 %v1950, %v2038
        %v2040 = vpop.f32.mrf.mxu0
        %v2041 = vadd.f32 %v1952, %v2040
        %2042 = vmatmul.bf16.gmra.mxu0 %v714
        %v2043 = vpop.f32.mrf.mxu0
        %v2044 = vadd.f32 %v1955, %v2043
        %v2045 = vpop.f32.mrf.mxu0
        %v2046 = vadd.f32 %v1957, %v2045
        %2047 = vmatmul.bf16.gmra.mxu0 %v722
        %v2048 = vpop.f32.mrf.mxu0
        %v2049 = vadd.f32 %v1960, %v2048
        %v2050 = vpop.f32.mrf.mxu0
        %v2051 = vadd.f32 %v1962, %v2050
        %2052 = vmatmul.bf16.gmra.mxu0 %v730
        %v2053 = vpop.f32.mrf.mxu0
        %v2054 = vadd.f32 %v1965, %v2053
        %v2055 = vpop.f32.mrf.mxu0
        %v2056 = vadd.f32 %v1967, %v2055
        %2057 = vmatmul.bf16.gmra.mxu0 %v738
        %v2058 = vpop.f32.mrf.mxu0
        %v2059 = vadd.f32 %v1970, %v2058
        %v2060 = vpop.f32.mrf.mxu0
        %v2061 = vadd.f32 %v1972, %v2060
        %2062 = vmatmul.bf16.gmra.mxu0 %v746
        %v2063 = vpop.f32.mrf.mxu0
        %v2064 = vadd.f32 %v1975, %v2063
        %v2065 = vpop.f32.mrf.mxu0
        %v2066 = vadd.f32 %v1977, %v2065
        %2067 = vmatmul.bf16.gmra.mxu0 %v754
        %v2068 = vpop.f32.mrf.mxu0
        %v2069 = vadd.f32 %v1980, %v2068
        %v2070 = vpop.f32.mrf.mxu0
        %v2071 = vadd.f32 %v1982, %v2070
        %2072 = vmatmul.bf16.gmra.mxu0 %v762
        %v2073 = vpop.f32.mrf.mxu0
        %v2074 = vadd.f32 %v1985, %v2073
        %v2075 = vpop.f32.mrf.mxu0
        %v2076 = vadd.f32 %v1987, %v2075
        %2077 = vmatmul.bf16.gmra.mxu0 %v770
        %v2078 = vpop.f32.mrf.mxu0
        %v2079 = vadd.f32 %v1990, %v2078
        %v2080 = vpop.f32.mrf.mxu0
        %v2081 = vadd.f32 %v1992, %v2080
        %2082 = vmatmul.bf16.gmra.mxu0 %v778
        %v2083 = vpop.f32.mrf.mxu0
        %v2084 = vadd.f32 %v1995, %v2083
        %v2085 = vpop.f32.mrf.mxu0
        %v2086 = vadd.f32 %v1997, %v2085
        %2087 = vdwg.mxu0
        %2088 = vmatpush.bf16.msra.mxu0 %v1408
        %2089 = vmatpush.bf16.msra.mxu0 %v1406
        %2090 = vmatpush.bf16.msra.mxu0 %v1404
        %2091 = vmatpush.bf16.msra.mxu0 %v1402
        %2092 = vmatpush.bf16.msra.mxu0 %v1400
        %2093 = vmatpush.bf16.msra.mxu0 %v1398
        %2094 = vmatpush.bf16.msra.mxu0 %v1396
        %2095 = vmatpush.bf16.msra.mxu0 %v1394
        %2096 = vmatmul.bf16.gmra.mxu0 %v659
        %v2097 = vpop.f32.mrf.mxu0
        %v2098 = vadd.f32 %v2009, %v2097
        %v2099 = vpop.f32.mrf.mxu0
        %v2100 = vadd.f32 %v2011, %v2099
        %2101 = vmatmul.bf16.gmra.mxu0 %v667
        %v2102 = vpop.f32.mrf.mxu0
        %v2103 = vadd.f32 %v2014, %v2102
        %v2104 = vpop.f32.mrf.mxu0
        %v2105 = vadd.f32 %v2016, %v2104
        %2106 = vmatmul.bf16.gmra.mxu0 %v675
        %v2107 = vpop.f32.mrf.mxu0
        %v2108 = vadd.f32 %v2019, %v2107
        %v2109 = vpop.f32.mrf.mxu0
        %v2110 = vadd.f32 %v2021, %v2109
        %2111 = vmatmul.bf16.gmra.mxu0 %v683
        %v2112 = vpop.f32.mrf.mxu0
        %v2113 = vadd.f32 %v2024, %v2112
        %v2114 = vpop.f32.mrf.mxu0
        %v2115 = vadd.f32 %v2026, %v2114
        %2116 = vmatmul.bf16.gmra.mxu0 %v691
        %v2117 = vpop.f32.mrf.mxu0
        %v2118 = vadd.f32 %v2029, %v2117
        %v2119 = vpop.f32.mrf.mxu0
        %v2120 = vadd.f32 %v2031, %v2119
        %2121 = vmatmul.bf16.gmra.mxu0 %v699
        %v2122 = vpop.f32.mrf.mxu0
        %v2123 = vadd.f32 %v2034, %v2122
        %v2124 = vpop.f32.mrf.mxu0
        %v2125 = vadd.f32 %v2036, %v2124
        %2126 = vmatmul.bf16.gmra.mxu0 %v707
        %v2127 = vpop.f32.mrf.mxu0
        %v2128 = vadd.f32 %v2039, %v2127
        %v2129 = vpop.f32.mrf.mxu0
        %v2130 = vadd.f32 %v2041, %v2129
        %2131 = vmatmul.bf16.gmra.mxu0 %v715
        %v2132 = vpop.f32.mrf.mxu0
        %v2133 = vadd.f32 %v2044, %v2132
        %v2134 = vpop.f32.mrf.mxu0
        %v2135 = vadd.f32 %v2046, %v2134
        %2136 = vmatmul.bf16.gmra.mxu0 %v723
        %v2137 = vpop.f32.mrf.mxu0
        %v2138 = vadd.f32 %v2049, %v2137
        %v2139 = vpop.f32.mrf.mxu0
        %v2140 = vadd.f32 %v2051, %v2139
        %2141 = vmatmul.bf16.gmra.mxu0 %v731
        %v2142 = vpop.f32.mrf.mxu0
        %v2143 = vadd.f32 %v2054, %v2142
        %v2144 = vpop.f32.mrf.mxu0
        %v2145 = vadd.f32 %v2056, %v2144
        %2146 = vmatmul.bf16.gmra.mxu0 %v739
        %v2147 = vpop.f32.mrf.mxu0
        %v2148 = vadd.f32 %v2059, %v2147
        %v2149 = vpop.f32.mrf.mxu0
        %v2150 = vadd.f32 %v2061, %v2149
        %2151 = vmatmul.bf16.gmra.mxu0 %v747
        %v2152 = vpop.f32.mrf.mxu0
        %v2153 = vadd.f32 %v2064, %v2152
        %v2154 = vpop.f32.mrf.mxu0
        %v2155 = vadd.f32 %v2066, %v2154
        %2156 = vmatmul.bf16.gmra.mxu0 %v755
        %v2157 = vpop.f32.mrf.mxu0
        %v2158 = vadd.f32 %v2069, %v2157
        %v2159 = vpop.f32.mrf.mxu0
        %v2160 = vadd.f32 %v2071, %v2159
        %2161 = vmatmul.bf16.gmra.mxu0 %v763
        %v2162 = vpop.f32.mrf.mxu0
        %v2163 = vadd.f32 %v2074, %v2162
        %v2164 = vpop.f32.mrf.mxu0
        %v2165 = vadd.f32 %v2076, %v2164
        %2166 = vmatmul.bf16.gmra.mxu0 %v771
        %v2167 = vpop.f32.mrf.mxu0
        %v2168 = vadd.f32 %v2079, %v2167
        %v2169 = vpop.f32.mrf.mxu0
        %v2170 = vadd.f32 %v2081, %v2169
        %2171 = vmatmul.bf16.gmra.mxu0 %v779
        %v2172 = vpop.f32.mrf.mxu0
        %v2173 = vadd.f32 %v2084, %v2172
        %v2174 = vpop.f32.mrf.mxu0
        %v2175 = vadd.f32 %v2086, %v2174
        %2176 = vdwg.mxu0
        %2177 = vmatpush.bf16.msra.mxu0 %v1424
        %2178 = vmatpush.bf16.msra.mxu0 %v1422
        %2179 = vmatpush.bf16.msra.mxu0 %v1420
        %2180 = vmatpush.bf16.msra.mxu0 %v1418
        %2181 = vmatpush.bf16.msra.mxu0 %v1416
        %2182 = vmatpush.bf16.msra.mxu0 %v1414
        %2183 = vmatpush.bf16.msra.mxu0 %v1412
        %2184 = vmatpush.bf16.msra.mxu0 %v1410
        %2185 = vmatmul.bf16.gmra.mxu0 %v660
        %v2186 = vpop.f32.mrf.mxu0
        %v2187 = vadd.f32 %v2098, %v2186
        %v2188 = vpop.f32.mrf.mxu0
        %v2189 = vadd.f32 %v2100, %v2188
        %2190 = vmatmul.bf16.gmra.mxu0 %v668
        %v2191 = vpop.f32.mrf.mxu0
        %v2192 = vadd.f32 %v2103, %v2191
        %v2193 = vpop.f32.mrf.mxu0
        %v2194 = vadd.f32 %v2105, %v2193
        %2195 = vmatmul.bf16.gmra.mxu0 %v676
        %v2196 = vpop.f32.mrf.mxu0
        %v2197 = vadd.f32 %v2108, %v2196
        %v2198 = vpop.f32.mrf.mxu0
        %v2199 = vadd.f32 %v2110, %v2198
        %2200 = vmatmul.bf16.gmra.mxu0 %v684
        %v2201 = vpop.f32.mrf.mxu0
        %v2202 = vadd.f32 %v2113, %v2201
        %v2203 = vpop.f32.mrf.mxu0
        %v2204 = vadd.f32 %v2115, %v2203
        %2205 = vmatmul.bf16.gmra.mxu0 %v692
        %v2206 = vpop.f32.mrf.mxu0
        %v2207 = vadd.f32 %v2118, %v2206
        %v2208 = vpop.f32.mrf.mxu0
        %v2209 = vadd.f32 %v2120, %v2208
        %2210 = vmatmul.bf16.gmra.mxu0 %v700
        %v2211 = vpop.f32.mrf.mxu0
        %v2212 = vadd.f32 %v2123, %v2211
        %v2213 = vpop.f32.mrf.mxu0
        %v2214 = vadd.f32 %v2125, %v2213
        %2215 = vmatmul.bf16.gmra.mxu0 %v708
        %v2216 = vpop.f32.mrf.mxu0
        %v2217 = vadd.f32 %v2128, %v2216
        %v2218 = vpop.f32.mrf.mxu0
        %v2219 = vadd.f32 %v2130, %v2218
        %2220 = vmatmul.bf16.gmra.mxu0 %v716
        %v2221 = vpop.f32.mrf.mxu0
        %v2222 = vadd.f32 %v2133, %v2221
        %v2223 = vpop.f32.mrf.mxu0
        %v2224 = vadd.f32 %v2135, %v2223
        %2225 = vmatmul.bf16.gmra.mxu0 %v724
        %v2226 = vpop.f32.mrf.mxu0
        %v2227 = vadd.f32 %v2138, %v2226
        %v2228 = vpop.f32.mrf.mxu0
        %v2229 = vadd.f32 %v2140, %v2228
        %2230 = vmatmul.bf16.gmra.mxu0 %v732
        %v2231 = vpop.f32.mrf.mxu0
        %v2232 = vadd.f32 %v2143, %v2231
        %v2233 = vpop.f32.mrf.mxu0
        %v2234 = vadd.f32 %v2145, %v2233
        %2235 = vmatmul.bf16.gmra.mxu0 %v740
        %v2236 = vpop.f32.mrf.mxu0
        %v2237 = vadd.f32 %v2148, %v2236
        %v2238 = vpop.f32.mrf.mxu0
        %v2239 = vadd.f32 %v2150, %v2238
        %2240 = vmatmul.bf16.gmra.mxu0 %v748
        %v2241 = vpop.f32.mrf.mxu0
        %v2242 = vadd.f32 %v2153, %v2241
        %v2243 = vpop.f32.mrf.mxu0
        %v2244 = vadd.f32 %v2155, %v2243
        %2245 = vmatmul.bf16.gmra.mxu0 %v756
        %v2246 = vpop.f32.mrf.mxu0
        %v2247 = vadd.f32 %v2158, %v2246
        %v2248 = vpop.f32.mrf.mxu0
        %v2249 = vadd.f32 %v2160, %v2248
        %2250 = vmatmul.bf16.gmra.mxu0 %v764
        %v2251 = vpop.f32.mrf.mxu0
        %v2252 = vadd.f32 %v2163, %v2251
        %v2253 = vpop.f32.mrf.mxu0
        %v2254 = vadd.f32 %v2165, %v2253
        %2255 = vmatmul.bf16.gmra.mxu0 %v772
        %v2256 = vpop.f32.mrf.mxu0
        %v2257 = vadd.f32 %v2168, %v2256
        %v2258 = vpop.f32.mrf.mxu0
        %v2259 = vadd.f32 %v2170, %v2258
        %2260 = vmatmul.bf16.gmra.mxu0 %v780
        %v2261 = vpop.f32.mrf.mxu0
        %v2262 = vadd.f32 %v2173, %v2261
        %v2263 = vpop.f32.mrf.mxu0
        %v2264 = vadd.f32 %v2175, %v2263
        %2265 = vdwg.mxu0
        %2266 = vmatpush.bf16.msra.mxu0 %v1313
        %2267 = vmatpush.bf16.msra.mxu0 %v1311
        %2268 = vmatpush.bf16.msra.mxu0 %v1309
        %2269 = vmatpush.bf16.msra.mxu0 %v1307
        %2270 = vmatpush.bf16.msra.mxu0 %v1305
        %2271 = vmatpush.bf16.msra.mxu0 %v1303
        %2272 = vmatpush.bf16.msra.mxu0 %v1301
        %2273 = vmatpush.bf16.msra.mxu0 %v1299
        %2274 = vmatmul.bf16.gmra.mxu0 %v653
        %v2275 = vpop.f32.mrf.mxu0
        %v2276 = vadd.f32 %v911, %v2275
        %v2277 = vpop.f32.mrf.mxu0
        %v2278 = vadd.f32 %v911, %v2277
        %2279 = vmatmul.bf16.gmra.mxu0 %v661
        %v2280 = vpop.f32.mrf.mxu0
        %v2281 = vadd.f32 %v911, %v2280
        %v2282 = vpop.f32.mrf.mxu0
        %v2283 = vadd.f32 %v911, %v2282
        %2284 = vmatmul.bf16.gmra.mxu0 %v669
        %v2285 = vpop.f32.mrf.mxu0
        %v2286 = vadd.f32 %v911, %v2285
        %v2287 = vpop.f32.mrf.mxu0
        %v2288 = vadd.f32 %v911, %v2287
        %2289 = vmatmul.bf16.gmra.mxu0 %v677
        %v2290 = vpop.f32.mrf.mxu0
        %v2291 = vadd.f32 %v911, %v2290
        %v2292 = vpop.f32.mrf.mxu0
        %v2293 = vadd.f32 %v911, %v2292
        %2294 = vmatmul.bf16.gmra.mxu0 %v685
        %v2295 = vpop.f32.mrf.mxu0
        %v2296 = vadd.f32 %v911, %v2295
        %v2297 = vpop.f32.mrf.mxu0
        %v2298 = vadd.f32 %v911, %v2297
        %2299 = vmatmul.bf16.gmra.mxu0 %v693
        %v2300 = vpop.f32.mrf.mxu0
        %v2301 = vadd.f32 %v911, %v2300
        %v2302 = vpop.f32.mrf.mxu0
        %v2303 = vadd.f32 %v911, %v2302
        %2304 = vmatmul.bf16.gmra.mxu0 %v701
        %v2305 = vpop.f32.mrf.mxu0
        %v2306 = vadd.f32 %v911, %v2305
        %v2307 = vpop.f32.mrf.mxu0
        %v2308 = vadd.f32 %v911, %v2307
        %2309 = vmatmul.bf16.gmra.mxu0 %v709
        %v2310 = vpop.f32.mrf.mxu0
        %v2311 = vadd.f32 %v911, %v2310
        %v2312 = vpop.f32.mrf.mxu0
        %v2313 = vadd.f32 %v911, %v2312
        %2314 = vmatmul.bf16.gmra.mxu0 %v717
        %v2315 = vpop.f32.mrf.mxu0
        %v2316 = vadd.f32 %v911, %v2315
        %v2317 = vpop.f32.mrf.mxu0
        %v2318 = vadd.f32 %v911, %v2317
        %2319 = vmatmul.bf16.gmra.mxu0 %v725
        %v2320 = vpop.f32.mrf.mxu0
        %v2321 = vadd.f32 %v911, %v2320
        %v2322 = vpop.f32.mrf.mxu0
        %v2323 = vadd.f32 %v911, %v2322
        %2324 = vmatmul.bf16.gmra.mxu0 %v733
        %v2325 = vpop.f32.mrf.mxu0
        %v2326 = vadd.f32 %v911, %v2325
        %v2327 = vpop.f32.mrf.mxu0
        %v2328 = vadd.f32 %v911, %v2327
        %2329 = vmatmul.bf16.gmra.mxu0 %v741
        %v2330 = vpop.f32.mrf.mxu0
        %v2331 = vadd.f32 %v911, %v2330
        %v2332 = vpop.f32.mrf.mxu0
        %v2333 = vadd.f32 %v911, %v2332
        %2334 = vmatmul.bf16.gmra.mxu0 %v749
        %v2335 = vpop.f32.mrf.mxu0
        %v2336 = vadd.f32 %v911, %v2335
        %v2337 = vpop.f32.mrf.mxu0
        %v2338 = vadd.f32 %v911, %v2337
        %2339 = vmatmul.bf16.gmra.mxu0 %v757
        %v2340 = vpop.f32.mrf.mxu0
        %v2341 = vadd.f32 %v911, %v2340
        %v2342 = vpop.f32.mrf.mxu0
        %v2343 = vadd.f32 %v911, %v2342
        %2344 = vmatmul.bf16.gmra.mxu0 %v765
        %v2345 = vpop.f32.mrf.mxu0
        %v2346 = vadd.f32 %v911, %v2345
        %v2347 = vpop.f32.mrf.mxu0
        %v2348 = vadd.f32 %v911, %v2347
        %2349 = vmatmul.bf16.gmra.mxu0 %v773
        %v2350 = vpop.f32.mrf.mxu0
        %v2351 = vadd.f32 %v911, %v2350
        %v2352 = vpop.f32.mrf.mxu0
        %v2353 = vadd.f32 %v911, %v2352
        %2354 = vdwg.mxu0
        %2355 = vmatpush.bf16.msra.mxu0 %v1329
        %2356 = vmatpush.bf16.msra.mxu0 %v1327
        %2357 = vmatpush.bf16.msra.mxu0 %v1325
        %2358 = vmatpush.bf16.msra.mxu0 %v1323
        %2359 = vmatpush.bf16.msra.mxu0 %v1321
        %2360 = vmatpush.bf16.msra.mxu0 %v1319
        %2361 = vmatpush.bf16.msra.mxu0 %v1317
        %2362 = vmatpush.bf16.msra.mxu0 %v1315
        %2363 = vmatmul.bf16.gmra.mxu0 %v654
        %v2364 = vpop.f32.mrf.mxu0
        %v2365 = vadd.f32 %v2276, %v2364
        %v2366 = vpop.f32.mrf.mxu0
        %v2367 = vadd.f32 %v2278, %v2366
        %2368 = vmatmul.bf16.gmra.mxu0 %v662
        %v2369 = vpop.f32.mrf.mxu0
        %v2370 = vadd.f32 %v2281, %v2369
        %v2371 = vpop.f32.mrf.mxu0
        %v2372 = vadd.f32 %v2283, %v2371
        %2373 = vmatmul.bf16.gmra.mxu0 %v670
        %v2374 = vpop.f32.mrf.mxu0
        %v2375 = vadd.f32 %v2286, %v2374
        %v2376 = vpop.f32.mrf.mxu0
        %v2377 = vadd.f32 %v2288, %v2376
        %2378 = vmatmul.bf16.gmra.mxu0 %v678
        %v2379 = vpop.f32.mrf.mxu0
        %v2380 = vadd.f32 %v2291, %v2379
        %v2381 = vpop.f32.mrf.mxu0
        %v2382 = vadd.f32 %v2293, %v2381
        %2383 = vmatmul.bf16.gmra.mxu0 %v686
        %v2384 = vpop.f32.mrf.mxu0
        %v2385 = vadd.f32 %v2296, %v2384
        %v2386 = vpop.f32.mrf.mxu0
        %v2387 = vadd.f32 %v2298, %v2386
        %2388 = vmatmul.bf16.gmra.mxu0 %v694
        %v2389 = vpop.f32.mrf.mxu0
        %v2390 = vadd.f32 %v2301, %v2389
        %v2391 = vpop.f32.mrf.mxu0
        %v2392 = vadd.f32 %v2303, %v2391
        %2393 = vmatmul.bf16.gmra.mxu0 %v702
        %v2394 = vpop.f32.mrf.mxu0
        %v2395 = vadd.f32 %v2306, %v2394
        %v2396 = vpop.f32.mrf.mxu0
        %v2397 = vadd.f32 %v2308, %v2396
        %2398 = vmatmul.bf16.gmra.mxu0 %v710
        %v2399 = vpop.f32.mrf.mxu0
        %v2400 = vadd.f32 %v2311, %v2399
        %v2401 = vpop.f32.mrf.mxu0
        %v2402 = vadd.f32 %v2313, %v2401
        %2403 = vmatmul.bf16.gmra.mxu0 %v718
        %v2404 = vpop.f32.mrf.mxu0
        %v2405 = vadd.f32 %v2316, %v2404
        %v2406 = vpop.f32.mrf.mxu0
        %v2407 = vadd.f32 %v2318, %v2406
        %2408 = vmatmul.bf16.gmra.mxu0 %v726
        %v2409 = vpop.f32.mrf.mxu0
        %v2410 = vadd.f32 %v2321, %v2409
        %v2411 = vpop.f32.mrf.mxu0
        %v2412 = vadd.f32 %v2323, %v2411
        %2413 = vmatmul.bf16.gmra.mxu0 %v734
        %v2414 = vpop.f32.mrf.mxu0
        %v2415 = vadd.f32 %v2326, %v2414
        %v2416 = vpop.f32.mrf.mxu0
        %v2417 = vadd.f32 %v2328, %v2416
        %2418 = vmatmul.bf16.gmra.mxu0 %v742
        %v2419 = vpop.f32.mrf.mxu0
        %v2420 = vadd.f32 %v2331, %v2419
        %v2421 = vpop.f32.mrf.mxu0
        %v2422 = vadd.f32 %v2333, %v2421
        %2423 = vmatmul.bf16.gmra.mxu0 %v750
        %v2424 = vpop.f32.mrf.mxu0
        %v2425 = vadd.f32 %v2336, %v2424
        %v2426 = vpop.f32.mrf.mxu0
        %v2427 = vadd.f32 %v2338, %v2426
        %2428 = vmatmul.bf16.gmra.mxu0 %v758
        %v2429 = vpop.f32.mrf.mxu0
        %v2430 = vadd.f32 %v2341, %v2429
        %v2431 = vpop.f32.mrf.mxu0
        %v2432 = vadd.f32 %v2343, %v2431
        %2433 = vmatmul.bf16.gmra.mxu0 %v766
        %v2434 = vpop.f32.mrf.mxu0
        %v2435 = vadd.f32 %v2346, %v2434
        %v2436 = vpop.f32.mrf.mxu0
        %v2437 = vadd.f32 %v2348, %v2436
        %2438 = vmatmul.bf16.gmra.mxu0 %v774
        %v2439 = vpop.f32.mrf.mxu0
        %v2440 = vadd.f32 %v2351, %v2439
        %v2441 = vpop.f32.mrf.mxu0
        %v2442 = vadd.f32 %v2353, %v2441
        %2443 = vdwg.mxu0
        %2444 = vmatpush.bf16.msra.mxu0 %v1345
        %2445 = vmatpush.bf16.msra.mxu0 %v1343
        %2446 = vmatpush.bf16.msra.mxu0 %v1341
        %2447 = vmatpush.bf16.msra.mxu0 %v1339
        %2448 = vmatpush.bf16.msra.mxu0 %v1337
        %2449 = vmatpush.bf16.msra.mxu0 %v1335
        %2450 = vmatpush.bf16.msra.mxu0 %v1333
        %2451 = vmatpush.bf16.msra.mxu0 %v1331
        %2452 = vmatmul.bf16.gmra.mxu0 %v655
        %v2453 = vpop.f32.mrf.mxu0
        %v2454 = vadd.f32 %v2365, %v2453
        %v2455 = vpop.f32.mrf.mxu0
        %v2456 = vadd.f32 %v2367, %v2455
        %2457 = vmatmul.bf16.gmra.mxu0 %v663
        %v2458 = vpop.f32.mrf.mxu0
        %v2459 = vadd.f32 %v2370, %v2458
        %v2460 = vpop.f32.mrf.mxu0
        %v2461 = vadd.f32 %v2372, %v2460
        %2462 = vmatmul.bf16.gmra.mxu0 %v671
        %v2463 = vpop.f32.mrf.mxu0
        %v2464 = vadd.f32 %v2375, %v2463
        %v2465 = vpop.f32.mrf.mxu0
        %v2466 = vadd.f32 %v2377, %v2465
        %2467 = vmatmul.bf16.gmra.mxu0 %v679
        %v2468 = vpop.f32.mrf.mxu0
        %v2469 = vadd.f32 %v2380, %v2468
        %v2470 = vpop.f32.mrf.mxu0
        %v2471 = vadd.f32 %v2382, %v2470
        %2472 = vmatmul.bf16.gmra.mxu0 %v687
        %v2473 = vpop.f32.mrf.mxu0
        %v2474 = vadd.f32 %v2385, %v2473
        %v2475 = vpop.f32.mrf.mxu0
        %v2476 = vadd.f32 %v2387, %v2475
        %2477 = vmatmul.bf16.gmra.mxu0 %v695
        %v2478 = vpop.f32.mrf.mxu0
        %v2479 = vadd.f32 %v2390, %v2478
        %v2480 = vpop.f32.mrf.mxu0
        %v2481 = vadd.f32 %v2392, %v2480
        %2482 = vmatmul.bf16.gmra.mxu0 %v703
        %v2483 = vpop.f32.mrf.mxu0
        %v2484 = vadd.f32 %v2395, %v2483
        %v2485 = vpop.f32.mrf.mxu0
        %v2486 = vadd.f32 %v2397, %v2485
        %2487 = vmatmul.bf16.gmra.mxu0 %v711
        %v2488 = vpop.f32.mrf.mxu0
        %v2489 = vadd.f32 %v2400, %v2488
        %v2490 = vpop.f32.mrf.mxu0
        %v2491 = vadd.f32 %v2402, %v2490
        %2492 = vmatmul.bf16.gmra.mxu0 %v719
        %v2493 = vpop.f32.mrf.mxu0
        %v2494 = vadd.f32 %v2405, %v2493
        %v2495 = vpop.f32.mrf.mxu0
        %v2496 = vadd.f32 %v2407, %v2495
        %2497 = vmatmul.bf16.gmra.mxu0 %v727
        %v2498 = vpop.f32.mrf.mxu0
        %v2499 = vadd.f32 %v2410, %v2498
        %v2500 = vpop.f32.mrf.mxu0
        %v2501 = vadd.f32 %v2412, %v2500
        %2502 = vmatmul.bf16.gmra.mxu0 %v735
        %v2503 = vpop.f32.mrf.mxu0
        %v2504 = vadd.f32 %v2415, %v2503
        %v2505 = vpop.f32.mrf.mxu0
        %v2506 = vadd.f32 %v2417, %v2505
        %2507 = vmatmul.bf16.gmra.mxu0 %v743
        %v2508 = vpop.f32.mrf.mxu0
        %v2509 = vadd.f32 %v2420, %v2508
        %v2510 = vpop.f32.mrf.mxu0
        %v2511 = vadd.f32 %v2422, %v2510
        %2512 = vmatmul.bf16.gmra.mxu0 %v751
        %v2513 = vpop.f32.mrf.mxu0
        %v2514 = vadd.f32 %v2425, %v2513
        %v2515 = vpop.f32.mrf.mxu0
        %v2516 = vadd.f32 %v2427, %v2515
        %2517 = vmatmul.bf16.gmra.mxu0 %v759
        %v2518 = vpop.f32.mrf.mxu0
        %v2519 = vadd.f32 %v2430, %v2518
        %v2520 = vpop.f32.mrf.mxu0
        %v2521 = vadd.f32 %v2432, %v2520
        %2522 = vmatmul.bf16.gmra.mxu0 %v767
        %v2523 = vpop.f32.mrf.mxu0
        %v2524 = vadd.f32 %v2435, %v2523
        %v2525 = vpop.f32.mrf.mxu0
        %v2526 = vadd.f32 %v2437, %v2525
        %2527 = vmatmul.bf16.gmra.mxu0 %v775
        %v2528 = vpop.f32.mrf.mxu0
        %v2529 = vadd.f32 %v2440, %v2528
        %v2530 = vpop.f32.mrf.mxu0
        %v2531 = vadd.f32 %v2442, %v2530
        %2532 = vdwg.mxu0
        %2533 = vmatpush.bf16.msra.mxu0 %v1361
        %2534 = vmatpush.bf16.msra.mxu0 %v1359
        %2535 = vmatpush.bf16.msra.mxu0 %v1357
        %2536 = vmatpush.bf16.msra.mxu0 %v1355
        %2537 = vmatpush.bf16.msra.mxu0 %v1353
        %2538 = vmatpush.bf16.msra.mxu0 %v1351
        %2539 = vmatpush.bf16.msra.mxu0 %v1349
        %2540 = vmatpush.bf16.msra.mxu0 %v1347
        %2541 = vmatmul.bf16.gmra.mxu0 %v656
        %v2542 = vpop.f32.mrf.mxu0
        %v2543 = vadd.f32 %v2454, %v2542
        %v2544 = vpop.f32.mrf.mxu0
        %v2545 = vadd.f32 %v2456, %v2544
        %2546 = vmatmul.bf16.gmra.mxu0 %v664
        %v2547 = vpop.f32.mrf.mxu0
        %v2548 = vadd.f32 %v2459, %v2547
        %v2549 = vpop.f32.mrf.mxu0
        %v2550 = vadd.f32 %v2461, %v2549
        %2551 = vmatmul.bf16.gmra.mxu0 %v672
        %v2552 = vpop.f32.mrf.mxu0
        %v2553 = vadd.f32 %v2464, %v2552
        %v2554 = vpop.f32.mrf.mxu0
        %v2555 = vadd.f32 %v2466, %v2554
        %2556 = vmatmul.bf16.gmra.mxu0 %v680
        %v2557 = vpop.f32.mrf.mxu0
        %v2558 = vadd.f32 %v2469, %v2557
        %v2559 = vpop.f32.mrf.mxu0
        %v2560 = vadd.f32 %v2471, %v2559
        %2561 = vmatmul.bf16.gmra.mxu0 %v688
        %v2562 = vpop.f32.mrf.mxu0
        %v2563 = vadd.f32 %v2474, %v2562
        %v2564 = vpop.f32.mrf.mxu0
        %v2565 = vadd.f32 %v2476, %v2564
        %2566 = vmatmul.bf16.gmra.mxu0 %v696
        %v2567 = vpop.f32.mrf.mxu0
        %v2568 = vadd.f32 %v2479, %v2567
        %v2569 = vpop.f32.mrf.mxu0
        %v2570 = vadd.f32 %v2481, %v2569
        %2571 = vmatmul.bf16.gmra.mxu0 %v704
        %v2572 = vpop.f32.mrf.mxu0
        %v2573 = vadd.f32 %v2484, %v2572
        %v2574 = vpop.f32.mrf.mxu0
        %v2575 = vadd.f32 %v2486, %v2574
        %2576 = vmatmul.bf16.gmra.mxu0 %v712
        %v2577 = vpop.f32.mrf.mxu0
        %v2578 = vadd.f32 %v2489, %v2577
        %v2579 = vpop.f32.mrf.mxu0
        %v2580 = vadd.f32 %v2491, %v2579
        %2581 = vmatmul.bf16.gmra.mxu0 %v720
        %v2582 = vpop.f32.mrf.mxu0
        %v2583 = vadd.f32 %v2494, %v2582
        %v2584 = vpop.f32.mrf.mxu0
        %v2585 = vadd.f32 %v2496, %v2584
        %2586 = vmatmul.bf16.gmra.mxu0 %v728
        %v2587 = vpop.f32.mrf.mxu0
        %v2588 = vadd.f32 %v2499, %v2587
        %v2589 = vpop.f32.mrf.mxu0
        %v2590 = vadd.f32 %v2501, %v2589
        %2591 = vmatmul.bf16.gmra.mxu0 %v736
        %v2592 = vpop.f32.mrf.mxu0
        %v2593 = vadd.f32 %v2504, %v2592
        %v2594 = vpop.f32.mrf.mxu0
        %v2595 = vadd.f32 %v2506, %v2594
        %2596 = vmatmul.bf16.gmra.mxu0 %v744
        %v2597 = vpop.f32.mrf.mxu0
        %v2598 = vadd.f32 %v2509, %v2597
        %v2599 = vpop.f32.mrf.mxu0
        %v2600 = vadd.f32 %v2511, %v2599
        %2601 = vmatmul.bf16.gmra.mxu0 %v752
        %v2602 = vpop.f32.mrf.mxu0
        %v2603 = vadd.f32 %v2514, %v2602
        %v2604 = vpop.f32.mrf.mxu0
        %v2605 = vadd.f32 %v2516, %v2604
        %2606 = vmatmul.bf16.gmra.mxu0 %v760
        %v2607 = vpop.f32.mrf.mxu0
        %v2608 = vadd.f32 %v2519, %v2607
        %v2609 = vpop.f32.mrf.mxu0
        %v2610 = vadd.f32 %v2521, %v2609
        %2611 = vmatmul.bf16.gmra.mxu0 %v768
        %v2612 = vpop.f32.mrf.mxu0
        %v2613 = vadd.f32 %v2524, %v2612
        %v2614 = vpop.f32.mrf.mxu0
        %v2615 = vadd.f32 %v2526, %v2614
        %2616 = vmatmul.bf16.gmra.mxu0 %v776
        %v2617 = vpop.f32.mrf.mxu0
        %v2618 = vadd.f32 %v2529, %v2617
        %v2619 = vpop.f32.mrf.mxu0
        %v2620 = vadd.f32 %v2531, %v2619
        %2621 = vdwg.mxu0
        %2622 = vmatpush.bf16.msra.mxu0 %v1377
        %2623 = vmatpush.bf16.msra.mxu0 %v1375
        %2624 = vmatpush.bf16.msra.mxu0 %v1373
        %2625 = vmatpush.bf16.msra.mxu0 %v1371
        %2626 = vmatpush.bf16.msra.mxu0 %v1369
        %2627 = vmatpush.bf16.msra.mxu0 %v1367
        %2628 = vmatpush.bf16.msra.mxu0 %v1365
        %2629 = vmatpush.bf16.msra.mxu0 %v1363
        %2630 = vmatmul.bf16.gmra.mxu0 %v657
        %v2631 = vpop.f32.mrf.mxu0
        %v2632 = vadd.f32 %v2543, %v2631
        %v2633 = vpop.f32.mrf.mxu0
        %v2634 = vadd.f32 %v2545, %v2633
        %2635 = vmatmul.bf16.gmra.mxu0 %v665
        %v2636 = vpop.f32.mrf.mxu0
        %v2637 = vadd.f32 %v2548, %v2636
        %v2638 = vpop.f32.mrf.mxu0
        %v2639 = vadd.f32 %v2550, %v2638
        %2640 = vmatmul.bf16.gmra.mxu0 %v673
        %v2641 = vpop.f32.mrf.mxu0
        %v2642 = vadd.f32 %v2553, %v2641
        %v2643 = vpop.f32.mrf.mxu0
        %v2644 = vadd.f32 %v2555, %v2643
        %2645 = vmatmul.bf16.gmra.mxu0 %v681
        %v2646 = vpop.f32.mrf.mxu0
        %v2647 = vadd.f32 %v2558, %v2646
        %v2648 = vpop.f32.mrf.mxu0
        %v2649 = vadd.f32 %v2560, %v2648
        %2650 = vmatmul.bf16.gmra.mxu0 %v689
        %v2651 = vpop.f32.mrf.mxu0
        %v2652 = vadd.f32 %v2563, %v2651
        %v2653 = vpop.f32.mrf.mxu0
        %v2654 = vadd.f32 %v2565, %v2653
        %2655 = vmatmul.bf16.gmra.mxu0 %v697
        %v2656 = vpop.f32.mrf.mxu0
        %v2657 = vadd.f32 %v2568, %v2656
        %v2658 = vpop.f32.mrf.mxu0
        %v2659 = vadd.f32 %v2570, %v2658
        %2660 = vmatmul.bf16.gmra.mxu0 %v705
        %v2661 = vpop.f32.mrf.mxu0
        %v2662 = vadd.f32 %v2573, %v2661
        %v2663 = vpop.f32.mrf.mxu0
        %v2664 = vadd.f32 %v2575, %v2663
        %2665 = vmatmul.bf16.gmra.mxu0 %v713
        %v2666 = vpop.f32.mrf.mxu0
        %v2667 = vadd.f32 %v2578, %v2666
        %v2668 = vpop.f32.mrf.mxu0
        %v2669 = vadd.f32 %v2580, %v2668
        %2670 = vmatmul.bf16.gmra.mxu0 %v721
        %v2671 = vpop.f32.mrf.mxu0
        %v2672 = vadd.f32 %v2583, %v2671
        %v2673 = vpop.f32.mrf.mxu0
        %v2674 = vadd.f32 %v2585, %v2673
        %2675 = vmatmul.bf16.gmra.mxu0 %v729
        %v2676 = vpop.f32.mrf.mxu0
        %v2677 = vadd.f32 %v2588, %v2676
        %v2678 = vpop.f32.mrf.mxu0
        %v2679 = vadd.f32 %v2590, %v2678
        %2680 = vmatmul.bf16.gmra.mxu0 %v737
        %v2681 = vpop.f32.mrf.mxu0
        %v2682 = vadd.f32 %v2593, %v2681
        %v2683 = vpop.f32.mrf.mxu0
        %v2684 = vadd.f32 %v2595, %v2683
        %2685 = vmatmul.bf16.gmra.mxu0 %v745
        %v2686 = vpop.f32.mrf.mxu0
        %v2687 = vadd.f32 %v2598, %v2686
        %v2688 = vpop.f32.mrf.mxu0
        %v2689 = vadd.f32 %v2600, %v2688
        %2690 = vmatmul.bf16.gmra.mxu0 %v753
        %v2691 = vpop.f32.mrf.mxu0
        %v2692 = vadd.f32 %v2603, %v2691
        %v2693 = vpop.f32.mrf.mxu0
        %v2694 = vadd.f32 %v2605, %v2693
        %2695 = vmatmul.bf16.gmra.mxu0 %v761
        %v2696 = vpop.f32.mrf.mxu0
        %v2697 = vadd.f32 %v2608, %v2696
        %v2698 = vpop.f32.mrf.mxu0
        %v2699 = vadd.f32 %v2610, %v2698
        %2700 = vmatmul.bf16.gmra.mxu0 %v769
        %v2701 = vpop.f32.mrf.mxu0
        %v2702 = vadd.f32 %v2613, %v2701
        %v2703 = vpop.f32.mrf.mxu0
        %v2704 = vadd.f32 %v2615, %v2703
        %2705 = vmatmul.bf16.gmra.mxu0 %v777
        %v2706 = vpop.f32.mrf.mxu0
        %v2707 = vadd.f32 %v2618, %v2706
        %v2708 = vpop.f32.mrf.mxu0
        %v2709 = vadd.f32 %v2620, %v2708
        %2710 = vdwg.mxu0
        %2711 = vmatpush.bf16.msra.mxu0 %v1393
        %2712 = vmatpush.bf16.msra.mxu0 %v1391
        %2713 = vmatpush.bf16.msra.mxu0 %v1389
        %2714 = vmatpush.bf16.msra.mxu0 %v1387
        %2715 = vmatpush.bf16.msra.mxu0 %v1385
        %2716 = vmatpush.bf16.msra.mxu0 %v1383
        %2717 = vmatpush.bf16.msra.mxu0 %v1381
        %2718 = vmatpush.bf16.msra.mxu0 %v1379
        %2719 = vmatmul.bf16.gmra.mxu0 %v658
        %v2720 = vpop.f32.mrf.mxu0
        %v2721 = vadd.f32 %v2632, %v2720
        %v2722 = vpop.f32.mrf.mxu0
        %v2723 = vadd.f32 %v2634, %v2722
        %2724 = vmatmul.bf16.gmra.mxu0 %v666
        %v2725 = vpop.f32.mrf.mxu0
        %v2726 = vadd.f32 %v2637, %v2725
        %v2727 = vpop.f32.mrf.mxu0
        %v2728 = vadd.f32 %v2639, %v2727
        %2729 = vmatmul.bf16.gmra.mxu0 %v674
        %v2730 = vpop.f32.mrf.mxu0
        %v2731 = vadd.f32 %v2642, %v2730
        %v2732 = vpop.f32.mrf.mxu0
        %v2733 = vadd.f32 %v2644, %v2732
        %2734 = vmatmul.bf16.gmra.mxu0 %v682
        %v2735 = vpop.f32.mrf.mxu0
        %v2736 = vadd.f32 %v2647, %v2735
        %v2737 = vpop.f32.mrf.mxu0
        %v2738 = vadd.f32 %v2649, %v2737
        %2739 = vmatmul.bf16.gmra.mxu0 %v690
        %v2740 = vpop.f32.mrf.mxu0
        %v2741 = vadd.f32 %v2652, %v2740
        %v2742 = vpop.f32.mrf.mxu0
        %v2743 = vadd.f32 %v2654, %v2742
        %2744 = vmatmul.bf16.gmra.mxu0 %v698
        %v2745 = vpop.f32.mrf.mxu0
        %v2746 = vadd.f32 %v2657, %v2745
        %v2747 = vpop.f32.mrf.mxu0
        %v2748 = vadd.f32 %v2659, %v2747
        %2749 = vmatmul.bf16.gmra.mxu0 %v706
        %v2750 = vpop.f32.mrf.mxu0
        %v2751 = vadd.f32 %v2662, %v2750
        %v2752 = vpop.f32.mrf.mxu0
        %v2753 = vadd.f32 %v2664, %v2752
        %2754 = vmatmul.bf16.gmra.mxu0 %v714
        %v2755 = vpop.f32.mrf.mxu0
        %v2756 = vadd.f32 %v2667, %v2755
        %v2757 = vpop.f32.mrf.mxu0
        %v2758 = vadd.f32 %v2669, %v2757
        %2759 = vmatmul.bf16.gmra.mxu0 %v722
        %v2760 = vpop.f32.mrf.mxu0
        %v2761 = vadd.f32 %v2672, %v2760
        %v2762 = vpop.f32.mrf.mxu0
        %v2763 = vadd.f32 %v2674, %v2762
        %2764 = vmatmul.bf16.gmra.mxu0 %v730
        %v2765 = vpop.f32.mrf.mxu0
        %v2766 = vadd.f32 %v2677, %v2765
        %v2767 = vpop.f32.mrf.mxu0
        %v2768 = vadd.f32 %v2679, %v2767
        %2769 = vmatmul.bf16.gmra.mxu0 %v738
        %v2770 = vpop.f32.mrf.mxu0
        %v2771 = vadd.f32 %v2682, %v2770
        %v2772 = vpop.f32.mrf.mxu0
        %v2773 = vadd.f32 %v2684, %v2772
        %2774 = vmatmul.bf16.gmra.mxu0 %v746
        %v2775 = vpop.f32.mrf.mxu0
        %v2776 = vadd.f32 %v2687, %v2775
        %v2777 = vpop.f32.mrf.mxu0
        %v2778 = vadd.f32 %v2689, %v2777
        %2779 = vmatmul.bf16.gmra.mxu0 %v754
        %v2780 = vpop.f32.mrf.mxu0
        %v2781 = vadd.f32 %v2692, %v2780
        %v2782 = vpop.f32.mrf.mxu0
        %v2783 = vadd.f32 %v2694, %v2782
        %2784 = vmatmul.bf16.gmra.mxu0 %v762
        %v2785 = vpop.f32.mrf.mxu0
        %v2786 = vadd.f32 %v2697, %v2785
        %v2787 = vpop.f32.mrf.mxu0
        %v2788 = vadd.f32 %v2699, %v2787
        %2789 = vmatmul.bf16.gmra.mxu0 %v770
        %v2790 = vpop.f32.mrf.mxu0
        %v2791 = vadd.f32 %v2702, %v2790
        %v2792 = vpop.f32.mrf.mxu0
        %v2793 = vadd.f32 %v2704, %v2792
        %2794 = vmatmul.bf16.gmra.mxu0 %v778
        %v2795 = vpop.f32.mrf.mxu0
        %v2796 = vadd.f32 %v2707, %v2795
        %v2797 = vpop.f32.mrf.mxu0
        %v2798 = vadd.f32 %v2709, %v2797
        %2799 = vdwg.mxu0
        %2800 = vmatpush.bf16.msra.mxu0 %v1409
        %2801 = vmatpush.bf16.msra.mxu0 %v1407
        %2802 = vmatpush.bf16.msra.mxu0 %v1405
        %2803 = vmatpush.bf16.msra.mxu0 %v1403
        %2804 = vmatpush.bf16.msra.mxu0 %v1401
        %2805 = vmatpush.bf16.msra.mxu0 %v1399
        %2806 = vmatpush.bf16.msra.mxu0 %v1397
        %2807 = vmatpush.bf16.msra.mxu0 %v1395
        %2808 = vmatmul.bf16.gmra.mxu0 %v659
        %v2809 = vpop.f32.mrf.mxu0
        %v2810 = vadd.f32 %v2721, %v2809
        %v2811 = vpop.f32.mrf.mxu0
        %v2812 = vadd.f32 %v2723, %v2811
        %2813 = vmatmul.bf16.gmra.mxu0 %v667
        %v2814 = vpop.f32.mrf.mxu0
        %v2815 = vadd.f32 %v2726, %v2814
        %v2816 = vpop.f32.mrf.mxu0
        %v2817 = vadd.f32 %v2728, %v2816
        %2818 = vmatmul.bf16.gmra.mxu0 %v675
        %v2819 = vpop.f32.mrf.mxu0
        %v2820 = vadd.f32 %v2731, %v2819
        %v2821 = vpop.f32.mrf.mxu0
        %v2822 = vadd.f32 %v2733, %v2821
        %2823 = vmatmul.bf16.gmra.mxu0 %v683
        %v2824 = vpop.f32.mrf.mxu0
        %v2825 = vadd.f32 %v2736, %v2824
        %v2826 = vpop.f32.mrf.mxu0
        %v2827 = vadd.f32 %v2738, %v2826
        %2828 = vmatmul.bf16.gmra.mxu0 %v691
        %v2829 = vpop.f32.mrf.mxu0
        %v2830 = vadd.f32 %v2741, %v2829
        %v2831 = vpop.f32.mrf.mxu0
        %v2832 = vadd.f32 %v2743, %v2831
        %2833 = vmatmul.bf16.gmra.mxu0 %v699
        %v2834 = vpop.f32.mrf.mxu0
        %v2835 = vadd.f32 %v2746, %v2834
        %v2836 = vpop.f32.mrf.mxu0
        %v2837 = vadd.f32 %v2748, %v2836
        %2838 = vmatmul.bf16.gmra.mxu0 %v707
        %v2839 = vpop.f32.mrf.mxu0
        %v2840 = vadd.f32 %v2751, %v2839
        %v2841 = vpop.f32.mrf.mxu0
        %v2842 = vadd.f32 %v2753, %v2841
        %2843 = vmatmul.bf16.gmra.mxu0 %v715
        %v2844 = vpop.f32.mrf.mxu0
        %v2845 = vadd.f32 %v2756, %v2844
        %v2846 = vpop.f32.mrf.mxu0
        %v2847 = vadd.f32 %v2758, %v2846
        %2848 = vmatmul.bf16.gmra.mxu0 %v723
        %v2849 = vpop.f32.mrf.mxu0
        %v2850 = vadd.f32 %v2761, %v2849
        %v2851 = vpop.f32.mrf.mxu0
        %v2852 = vadd.f32 %v2763, %v2851
        %2853 = vmatmul.bf16.gmra.mxu0 %v731
        %v2854 = vpop.f32.mrf.mxu0
        %v2855 = vadd.f32 %v2766, %v2854
        %v2856 = vpop.f32.mrf.mxu0
        %v2857 = vadd.f32 %v2768, %v2856
        %2858 = vmatmul.bf16.gmra.mxu0 %v739
        %v2859 = vpop.f32.mrf.mxu0
        %v2860 = vadd.f32 %v2771, %v2859
        %v2861 = vpop.f32.mrf.mxu0
        %v2862 = vadd.f32 %v2773, %v2861
        %2863 = vmatmul.bf16.gmra.mxu0 %v747
        %v2864 = vpop.f32.mrf.mxu0
        %v2865 = vadd.f32 %v2776, %v2864
        %v2866 = vpop.f32.mrf.mxu0
        %v2867 = vadd.f32 %v2778, %v2866
        %2868 = vmatmul.bf16.gmra.mxu0 %v755
        %v2869 = vpop.f32.mrf.mxu0
        %v2870 = vadd.f32 %v2781, %v2869
        %v2871 = vpop.f32.mrf.mxu0
        %v2872 = vadd.f32 %v2783, %v2871
        %2873 = vmatmul.bf16.gmra.mxu0 %v763
        %v2874 = vpop.f32.mrf.mxu0
        %v2875 = vadd.f32 %v2786, %v2874
        %v2876 = vpop.f32.mrf.mxu0
        %v2877 = vadd.f32 %v2788, %v2876
        %2878 = vmatmul.bf16.gmra.mxu0 %v771
        %v2879 = vpop.f32.mrf.mxu0
        %v2880 = vadd.f32 %v2791, %v2879
        %v2881 = vpop.f32.mrf.mxu0
        %v2882 = vadd.f32 %v2793, %v2881
        %2883 = vmatmul.bf16.gmra.mxu0 %v779
        %v2884 = vpop.f32.mrf.mxu0
        %v2885 = vadd.f32 %v2796, %v2884
        %v2886 = vpop.f32.mrf.mxu0
        %v2887 = vadd.f32 %v2798, %v2886
        %2888 = vdwg.mxu0
        %2889 = vmatpush.bf16.msra.mxu0 %v1425
        %2890 = vmatpush.bf16.msra.mxu0 %v1423
        %2891 = vmatpush.bf16.msra.mxu0 %v1421
        %2892 = vmatpush.bf16.msra.mxu0 %v1419
        %2893 = vmatpush.bf16.msra.mxu0 %v1417
        %2894 = vmatpush.bf16.msra.mxu0 %v1415
        %2895 = vmatpush.bf16.msra.mxu0 %v1413
        %2896 = vmatpush.bf16.msra.mxu0 %v1411
        %2897 = vmatmul.bf16.gmra.mxu0 %v660
        %v2898 = vpop.f32.mrf.mxu0
        %v2899 = vadd.f32 %v2810, %v2898
        %v2900 = vpop.f32.mrf.mxu0
        %v2901 = vadd.f32 %v2812, %v2900
        %2902 = vmatmul.bf16.gmra.mxu0 %v668
        %v2903 = vpop.f32.mrf.mxu0
        %v2904 = vadd.f32 %v2815, %v2903
        %v2905 = vpop.f32.mrf.mxu0
        %v2906 = vadd.f32 %v2817, %v2905
        %2907 = vmatmul.bf16.gmra.mxu0 %v676
        %v2908 = vpop.f32.mrf.mxu0
        %v2909 = vadd.f32 %v2820, %v2908
        %v2910 = vpop.f32.mrf.mxu0
        %v2911 = vadd.f32 %v2822, %v2910
        %2912 = vmatmul.bf16.gmra.mxu0 %v684
        %v2913 = vpop.f32.mrf.mxu0
        %v2914 = vadd.f32 %v2825, %v2913
        %v2915 = vpop.f32.mrf.mxu0
        %v2916 = vadd.f32 %v2827, %v2915
        %2917 = vmatmul.bf16.gmra.mxu0 %v692
        %v2918 = vpop.f32.mrf.mxu0
        %v2919 = vadd.f32 %v2830, %v2918
        %v2920 = vpop.f32.mrf.mxu0
        %v2921 = vadd.f32 %v2832, %v2920
        %2922 = vmatmul.bf16.gmra.mxu0 %v700
        %v2923 = vpop.f32.mrf.mxu0
        %v2924 = vadd.f32 %v2835, %v2923
        %v2925 = vpop.f32.mrf.mxu0
        %v2926 = vadd.f32 %v2837, %v2925
        %2927 = vmatmul.bf16.gmra.mxu0 %v708
        %v2928 = vpop.f32.mrf.mxu0
        %v2929 = vadd.f32 %v2840, %v2928
        %v2930 = vpop.f32.mrf.mxu0
        %v2931 = vadd.f32 %v2842, %v2930
        %2932 = vmatmul.bf16.gmra.mxu0 %v716
        %v2933 = vpop.f32.mrf.mxu0
        %v2934 = vadd.f32 %v2845, %v2933
        %v2935 = vpop.f32.mrf.mxu0
        %v2936 = vadd.f32 %v2847, %v2935
        %2937 = vmatmul.bf16.gmra.mxu0 %v724
        %v2938 = vpop.f32.mrf.mxu0
        %v2939 = vadd.f32 %v2850, %v2938
        %v2940 = vpop.f32.mrf.mxu0
        %v2941 = vadd.f32 %v2852, %v2940
        %2942 = vmatmul.bf16.gmra.mxu0 %v732
        %v2943 = vpop.f32.mrf.mxu0
        %v2944 = vadd.f32 %v2855, %v2943
        %v2945 = vpop.f32.mrf.mxu0
        %v2946 = vadd.f32 %v2857, %v2945
        %2947 = vmatmul.bf16.gmra.mxu0 %v740
        %v2948 = vpop.f32.mrf.mxu0
        %v2949 = vadd.f32 %v2860, %v2948
        %v2950 = vpop.f32.mrf.mxu0
        %v2951 = vadd.f32 %v2862, %v2950
        %2952 = vmatmul.bf16.gmra.mxu0 %v748
        %v2953 = vpop.f32.mrf.mxu0
        %v2954 = vadd.f32 %v2865, %v2953
        %v2955 = vpop.f32.mrf.mxu0
        %v2956 = vadd.f32 %v2867, %v2955
        %2957 = vmatmul.bf16.gmra.mxu0 %v756
        %v2958 = vpop.f32.mrf.mxu0
        %v2959 = vadd.f32 %v2870, %v2958
        %v2960 = vpop.f32.mrf.mxu0
        %v2961 = vadd.f32 %v2872, %v2960
        %2962 = vmatmul.bf16.gmra.mxu0 %v764
        %v2963 = vpop.f32.mrf.mxu0
        %v2964 = vadd.f32 %v2875, %v2963
        %v2965 = vpop.f32.mrf.mxu0
        %v2966 = vadd.f32 %v2877, %v2965
        %2967 = vmatmul.bf16.gmra.mxu0 %v772
        %v2968 = vpop.f32.mrf.mxu0
        %v2969 = vadd.f32 %v2880, %v2968
        %v2970 = vpop.f32.mrf.mxu0
        %v2971 = vadd.f32 %v2882, %v2970
        %2972 = vmatmul.bf16.gmra.mxu0 %v780
        %v2973 = vpop.f32.mrf.mxu0
        %v2974 = vadd.f32 %v2885, %v2973
        %v2975 = vpop.f32.mrf.mxu0
        %v2976 = vadd.f32 %v2887, %v2975
        %2977 = vdwg.mxu0
        %v2978 = vmax.f32 %v2187, 0.0
        %v2979 = vmax.f32 %v2899, 0.0
        %v2980 = vmax.f32 %v2189, 0.0
        %v2981 = vmax.f32 %v2901, 0.0
        %v2982 = vmax.f32 %v2192, 0.0
        %v2983 = vmax.f32 %v2904, 0.0
        %v2984 = vmax.f32 %v2194, 0.0
        %v2985 = vmax.f32 %v2906, 0.0
        %v2986 = vmax.f32 %v2197, 0.0
        %v2987 = vmax.f32 %v2909, 0.0
        %v2988 = vmax.f32 %v2199, 0.0
        %v2989 = vmax.f32 %v2911, 0.0
        %v2990 = vmax.f32 %v2202, 0.0
        %v2991 = vmax.f32 %v2914, 0.0
        %v2992 = vmax.f32 %v2204, 0.0
        %v2993 = vmax.f32 %v2916, 0.0
        %v2994 = vmax.f32 %v2207, 0.0
        %v2995 = vmax.f32 %v2919, 0.0
        %v2996 = vmax.f32 %v2209, 0.0
        %v2997 = vmax.f32 %v2921, 0.0
        %v2998 = vmax.f32 %v2212, 0.0
        %v2999 = vmax.f32 %v2924, 0.0
        %v3000 = vmax.f32 %v2214, 0.0
        %v3001 = vmax.f32 %v2926, 0.0
        %v3002 = vmax.f32 %v2217, 0.0
        %v3003 = vmax.f32 %v2929, 0.0
        %v3004 = vmax.f32 %v2219, 0.0
        %v3005 = vmax.f32 %v2931, 0.0
        %v3006 = vmax.f32 %v2222, 0.0
        %v3007 = vmax.f32 %v2934, 0.0
        %v3008 = vmax.f32 %v2224, 0.0
        %v3009 = vmax.f32 %v2936, 0.0
        %v3010 = vmax.f32 %v2227, 0.0
        %v3011 = vmax.f32 %v2939, 0.0
        %v3012 = vmax.f32 %v2229, 0.0
        %v3013 = vmax.f32 %v2941, 0.0
        %v3014 = vmax.f32 %v2232, 0.0
        %v3015 = vmax.f32 %v2944, 0.0
        %v3016 = vmax.f32 %v2234, 0.0
        %v3017 = vmax.f32 %v2946, 0.0
        %v3018 = vmax.f32 %v2237, 0.0
        %v3019 = vmax.f32 %v2949, 0.0
        %v3020 = vmax.f32 %v2239, 0.0
        %v3021 = vmax.f32 %v2951, 0.0
        %v3022 = vmax.f32 %v2242, 0.0
        %v3023 = vmax.f32 %v2954, 0.0
        %v3024 = vmax.f32 %v2244, 0.0
        %v3025 = vmax.f32 %v2956, 0.0
        %v3026 = vmax.f32 %v2247, 0.0
        %v3027 = vmax.f32 %v2959, 0.0
        %v3028 = vmax.f32 %v2249, 0.0
        %v3029 = vmax.f32 %v2961, 0.0
        %v3030 = vmax.f32 %v2252, 0.0
        %v3031 = vmax.f32 %v2964, 0.0
        %v3032 = vmax.f32 %v2254, 0.0
        %v3033 = vmax.f32 %v2966, 0.0
        %v3034 = vmax.f32 %v2257, 0.0
        %v3035 = vmax.f32 %v2969, 0.0
        %v3036 = vmax.f32 %v2259, 0.0
        %v3037 = vmax.f32 %v2971, 0.0
        %v3038 = vmax.f32 %v2262, 0.0
        %v3039 = vmax.f32 %v2974, 0.0
        %v3040 = vmax.f32 %v2264, 0.0
        %v3041 = vmax.f32 %v2976, 0.0
        %v3042 = vpack.c.bf16 %v2980, %v2978
        %v3043 = vpack.c.bf16 %v2981, %v2979
        %v3044 = vpack.c.bf16 %v2984, %v2982
        %v3045 = vpack.c.bf16 %v2985, %v2983
        %v3046 = vpack.c.bf16 %v2988, %v2986
        %v3047 = vpack.c.bf16 %v2989, %v2987
        %v3048 = vpack.c.bf16 %v2992, %v2990
        %v3049 = vpack.c.bf16 %v2993, %v2991
        %v3050 = vpack.c.bf16 %v2996, %v2994
        %v3051 = vpack.c.bf16 %v2997, %v2995
        %v3052 = vpack.c.bf16 %v3000, %v2998
        %v3053 = vpack.c.bf16 %v3001, %v2999
        %v3054 = vpack.c.bf16 %v3004, %v3002
        %v3055 = vpack.c.bf16 %v3005, %v3003
        %v3056 = vpack.c.bf16 %v3008, %v3006
        %v3057 = vpack.c.bf16 %v3009, %v3007
        %v3058 = vpack.c.bf16 %v3012, %v3010
        %v3059 = vpack.c.bf16 %v3013, %v3011
        %v3060 = vpack.c.bf16 %v3016, %v3014
        %v3061 = vpack.c.bf16 %v3017, %v3015
        %v3062 = vpack.c.bf16 %v3020, %v3018
        %v3063 = vpack.c.bf16 %v3021, %v3019
        %v3064 = vpack.c.bf16 %v3024, %v3022
        %v3065 = vpack.c.bf16 %v3025, %v3023
        %v3066 = vpack.c.bf16 %v3028, %v3026
        %v3067 = vpack.c.bf16 %v3029, %v3027
        %v3068 = vpack.c.bf16 %v3032, %v3030
        %v3069 = vpack.c.bf16 %v3033, %v3031
        %v3070 = vpack.c.bf16 %v3036, %v3034
        %v3071 = vpack.c.bf16 %v3037, %v3035
        %v3072 = vpack.c.bf16 %v3040, %v3038
        %v3073 = vpack.c.bf16 %v3041, %v3039
        %v3074 = vld [vmem:[#allocation8] sm:$0xf]
        %v3075 = vld [vmem:[#allocation8 + $0x4] sm:$0xf]
        %v3076 = vld [vmem:[#allocation8 + $0x8] sm:$0xf]
        %v3077 = vld [vmem:[#allocation8 + $0xc] sm:$0xf]
        %v3078 = vld [vmem:[#allocation8 + $0x10] sm:$0xf]
        %v3079 = vld [vmem:[#allocation8 + $0x14] sm:$0xf]
        %v3080 = vld [vmem:[#allocation8 + $0x18] sm:$0xf]
        %v3081 = vld [vmem:[#allocation8 + $0x1c] sm:$0xf]
        %v3082 = vld [vmem:[#allocation8 + $0x20] sm:$0xf]
        %v3083 = vld [vmem:[#allocation8 + $0x24] sm:$0xf]
        %v3084 = vld [vmem:[#allocation8 + $0x28] sm:$0xf]
        %v3085 = vld [vmem:[#allocation8 + $0x2c] sm:$0xf]
        %v3086 = vld [vmem:[#allocation8 + $0x30] sm:$0xf]
        %v3087 = vld [vmem:[#allocation8 + $0x34] sm:$0xf]
        %v3088 = vld [vmem:[#allocation8 + $0x38] sm:$0xf]
        %v3089 = vld [vmem:[#allocation8 + $0x3c] sm:$0xf]
        %v3090 = vld [vmem:[#allocation8 + $0x40] sm:$0xf]
        %v3091 = vld [vmem:[#allocation8 + $0x44] sm:$0xf]
        %v3092 = vld [vmem:[#allocation8 + $0x48] sm:$0xf]
        %v3093 = vld [vmem:[#allocation8 + $0x4c] sm:$0xf]
        %v3094 = vld [vmem:[#allocation8 + $0x50] sm:$0xf]
        %v3095 = vld [vmem:[#allocation8 + $0x54] sm:$0xf]
        %v3096 = vld [vmem:[#allocation8 + $0x58] sm:$0xf]
        %v3097 = vld [vmem:[#allocation8 + $0x5c] sm:$0xf]
        %v3098 = vld [vmem:[#allocation8 + $0x60] sm:$0xf]
        %v3099 = vld [vmem:[#allocation8 + $0x64] sm:$0xf]
        %v3100 = vld [vmem:[#allocation8 + $0x68] sm:$0xf]
        %v3101 = vld [vmem:[#allocation8 + $0x6c] sm:$0xf]
        %v3102 = vld [vmem:[#allocation8 + $0x70] sm:$0xf]
        %v3103 = vld [vmem:[#allocation8 + $0x74] sm:$0xf]
        %v3104 = vld [vmem:[#allocation8 + $0x78] sm:$0xf]
        %v3105 = vld [vmem:[#allocation8 + $0x7c] sm:$0xf]
        %v3107 = vperm.slane %v394, 0
        %v3141 = vunpack.c.l.b16 %v3074
        %v3142 = vunpack.c.l.b16 %v3075
        %v3143 = vunpack.c.l.b16 %v3076
        %v3144 = vunpack.c.l.b16 %v3077
        %v3145 = vunpack.c.l.b16 %v3078
        %v3146 = vunpack.c.l.b16 %v3079
        %v3147 = vunpack.c.l.b16 %v3080
        %v3148 = vunpack.c.l.b16 %v3081
        %v3149 = vunpack.c.l.b16 %v3082
        %v3150 = vunpack.c.l.b16 %v3083
        %v3151 = vunpack.c.l.b16 %v3084
        %v3152 = vunpack.c.l.b16 %v3085
        %v3153 = vunpack.c.l.b16 %v3086
        %v3154 = vunpack.c.l.b16 %v3087
        %v3155 = vunpack.c.l.b16 %v3088
        %v3156 = vunpack.c.l.b16 %v3089
        %v3157 = vunpack.c.l.b16 %v3090
        %v3158 = vunpack.c.l.b16 %v3091
        %v3159 = vunpack.c.l.b16 %v3092
        %v3160 = vunpack.c.l.b16 %v3093
        %v3161 = vunpack.c.l.b16 %v3094
        %v3162 = vunpack.c.l.b16 %v3095
        %v3163 = vunpack.c.l.b16 %v3096
        %v3164 = vunpack.c.l.b16 %v3097
        %v3165 = vunpack.c.l.b16 %v3098
        %v3166 = vunpack.c.l.b16 %v3099
        %v3167 = vunpack.c.l.b16 %v3100
        %v3168 = vunpack.c.l.b16 %v3101
        %v3169 = vunpack.c.l.b16 %v3102
        %v3170 = vunpack.c.l.b16 %v3103
        %v3171 = vunpack.c.l.b16 %v3104
        %v3172 = vunpack.c.l.b16 %v3105
        %v3173 = vpack.c.b16 %v3142, %v3141
        %v3174 = vpack.c.b16 %v3144, %v3143
        %v3175 = vpack.c.b16 %v3146, %v3145
        %v3176 = vpack.c.b16 %v3148, %v3147
        %v3177 = vpack.c.b16 %v3150, %v3149
        %v3178 = vpack.c.b16 %v3152, %v3151
        %v3179 = vpack.c.b16 %v3154, %v3153
        %v3180 = vpack.c.b16 %v3156, %v3155
        %v3181 = vpack.c.b16 %v3158, %v3157
        %v3182 = vpack.c.b16 %v3160, %v3159
        %v3183 = vpack.c.b16 %v3162, %v3161
        %v3184 = vpack.c.b16 %v3164, %v3163
        %v3185 = vpack.c.b16 %v3166, %v3165
        %v3186 = vpack.c.b16 %v3168, %v3167
        %v3187 = vpack.c.b16 %v3170, %v3169
        %v3188 = vpack.c.b16 %v3172, %v3171
        %3205 = vmatpush.bf16.msra.mxu0 %v3180
        %3206 = vmatpush.bf16.msra.mxu0 %v3179
        %3207 = vmatpush.bf16.msra.mxu0 %v3178
        %3208 = vmatpush.bf16.msra.mxu0 %v3177
        %3209 = vmatpush.bf16.msra.mxu0 %v3176
        %3210 = vmatpush.bf16.msra.mxu0 %v3175
        %3211 = vmatpush.bf16.msra.mxu0 %v3174
        %3212 = vmatpush.bf16.msra.mxu0 %v3173
        %3213 = vmatmul.bf16.gmra.mxu0 %v3042
        %v3214 = vpop.f32.mrf.mxu0
        %v3215 = vadd.f32 %v3107, %v3214
        %v3216 = vpop.f32.mrf.mxu0
        %v3217 = vadd.f32 %v3107, %v3216
        %3218 = vmatmul.bf16.gmra.mxu0 %v3044
        %v3219 = vpop.f32.mrf.mxu0
        %v3220 = vadd.f32 %v3107, %v3219
        %v3221 = vpop.f32.mrf.mxu0
        %v3222 = vadd.f32 %v3107, %v3221
        %3223 = vmatmul.bf16.gmra.mxu0 %v3046
        %v3224 = vpop.f32.mrf.mxu0
        %v3225 = vadd.f32 %v3107, %v3224
        %v3226 = vpop.f32.mrf.mxu0
        %v3227 = vadd.f32 %v3107, %v3226
        %3228 = vmatmul.bf16.gmra.mxu0 %v3048
        %v3229 = vpop.f32.mrf.mxu0
        %v3230 = vadd.f32 %v3107, %v3229
        %v3231 = vpop.f32.mrf.mxu0
        %v3232 = vadd.f32 %v3107, %v3231
        %3233 = vmatmul.bf16.gmra.mxu0 %v3050
        %v3234 = vpop.f32.mrf.mxu0
        %v3235 = vadd.f32 %v3107, %v3234
        %v3236 = vpop.f32.mrf.mxu0
        %v3237 = vadd.f32 %v3107, %v3236
        %3238 = vmatmul.bf16.gmra.mxu0 %v3052
        %v3239 = vpop.f32.mrf.mxu0
        %v3240 = vadd.f32 %v3107, %v3239
        %v3241 = vpop.f32.mrf.mxu0
        %v3242 = vadd.f32 %v3107, %v3241
        %3243 = vmatmul.bf16.gmra.mxu0 %v3054
        %v3244 = vpop.f32.mrf.mxu0
        %v3245 = vadd.f32 %v3107, %v3244
        %v3246 = vpop.f32.mrf.mxu0
        %v3247 = vadd.f32 %v3107, %v3246
        %3248 = vmatmul.bf16.gmra.mxu0 %v3056
        %v3249 = vpop.f32.mrf.mxu0
        %v3250 = vadd.f32 %v3107, %v3249
        %v3251 = vpop.f32.mrf.mxu0
        %v3252 = vadd.f32 %v3107, %v3251
        %3253 = vmatmul.bf16.gmra.mxu0 %v3058
        %v3254 = vpop.f32.mrf.mxu0
        %v3255 = vadd.f32 %v3107, %v3254
        %v3256 = vpop.f32.mrf.mxu0
        %v3257 = vadd.f32 %v3107, %v3256
        %3258 = vmatmul.bf16.gmra.mxu0 %v3060
        %v3259 = vpop.f32.mrf.mxu0
        %v3260 = vadd.f32 %v3107, %v3259
        %v3261 = vpop.f32.mrf.mxu0
        %v3262 = vadd.f32 %v3107, %v3261
        %3263 = vmatmul.bf16.gmra.mxu0 %v3062
        %v3264 = vpop.f32.mrf.mxu0
        %v3265 = vadd.f32 %v3107, %v3264
        %v3266 = vpop.f32.mrf.mxu0
        %v3267 = vadd.f32 %v3107, %v3266
        %3268 = vmatmul.bf16.gmra.mxu0 %v3064
        %v3269 = vpop.f32.mrf.mxu0
        %v3270 = vadd.f32 %v3107, %v3269
        %v3271 = vpop.f32.mrf.mxu0
        %v3272 = vadd.f32 %v3107, %v3271
        %3273 = vmatmul.bf16.gmra.mxu0 %v3066
        %v3274 = vpop.f32.mrf.mxu0
        %v3275 = vadd.f32 %v3107, %v3274
        %v3276 = vpop.f32.mrf.mxu0
        %v3277 = vadd.f32 %v3107, %v3276
        %3278 = vmatmul.bf16.gmra.mxu0 %v3068
        %v3279 = vpop.f32.mrf.mxu0
        %v3280 = vadd.f32 %v3107, %v3279
        %v3281 = vpop.f32.mrf.mxu0
        %v3282 = vadd.f32 %v3107, %v3281
        %3283 = vmatmul.bf16.gmra.mxu0 %v3070
        %v3284 = vpop.f32.mrf.mxu0
        %v3285 = vadd.f32 %v3107, %v3284
        %v3286 = vpop.f32.mrf.mxu0
        %v3287 = vadd.f32 %v3107, %v3286
        %3288 = vmatmul.bf16.gmra.mxu0 %v3072
        %v3289 = vpop.f32.mrf.mxu0
        %v3290 = vadd.f32 %v3107, %v3289
        %v3291 = vpop.f32.mrf.mxu0
        %v3292 = vadd.f32 %v3107, %v3291
        %3293 = vdwg.mxu0
        %3294 = vmatpush.bf16.msra.mxu0 %v3188
        %3295 = vmatpush.bf16.msra.mxu0 %v3187
        %3296 = vmatpush.bf16.msra.mxu0 %v3186
        %3297 = vmatpush.bf16.msra.mxu0 %v3185
        %3298 = vmatpush.bf16.msra.mxu0 %v3184
        %3299 = vmatpush.bf16.msra.mxu0 %v3183
        %3300 = vmatpush.bf16.msra.mxu0 %v3182
        %3301 = vmatpush.bf16.msra.mxu0 %v3181
        %3302 = vmatmul.bf16.gmra.mxu0 %v3043
        %v3303 = vpop.f32.mrf.mxu0
        %v3304 = vadd.f32 %v3215, %v3303
        %v3305 = vpop.f32.mrf.mxu0
        %v3306 = vadd.f32 %v3217, %v3305
        %3307 = vmatmul.bf16.gmra.mxu0 %v3045
        %v3308 = vpop.f32.mrf.mxu0
        %v3309 = vadd.f32 %v3220, %v3308
        %v3310 = vpop.f32.mrf.mxu0
        %v3311 = vadd.f32 %v3222, %v3310
        %3312 = vmatmul.bf16.gmra.mxu0 %v3047
        %v3313 = vpop.f32.mrf.mxu0
        %v3314 = vadd.f32 %v3225, %v3313
        %v3315 = vpop.f32.mrf.mxu0
        %v3316 = vadd.f32 %v3227, %v3315
        %3317 = vmatmul.bf16.gmra.mxu0 %v3049
        %v3318 = vpop.f32.mrf.mxu0
        %v3319 = vadd.f32 %v3230, %v3318
        %v3320 = vpop.f32.mrf.mxu0
        %v3321 = vadd.f32 %v3232, %v3320
        %3322 = vmatmul.bf16.gmra.mxu0 %v3051
        %v3323 = vpop.f32.mrf.mxu0
        %v3324 = vadd.f32 %v3235, %v3323
        %v3325 = vpop.f32.mrf.mxu0
        %v3326 = vadd.f32 %v3237, %v3325
        %3327 = vmatmul.bf16.gmra.mxu0 %v3053
        %v3328 = vpop.f32.mrf.mxu0
        %v3329 = vadd.f32 %v3240, %v3328
        %v3330 = vpop.f32.mrf.mxu0
        %v3331 = vadd.f32 %v3242, %v3330
        %3332 = vmatmul.bf16.gmra.mxu0 %v3055
        %v3333 = vpop.f32.mrf.mxu0
        %v3334 = vadd.f32 %v3245, %v3333
        %v3335 = vpop.f32.mrf.mxu0
        %v3336 = vadd.f32 %v3247, %v3335
        %3337 = vmatmul.bf16.gmra.mxu0 %v3057
        %v3338 = vpop.f32.mrf.mxu0
        %v3339 = vadd.f32 %v3250, %v3338
        %v3340 = vpop.f32.mrf.mxu0
        %v3341 = vadd.f32 %v3252, %v3340
        %3342 = vmatmul.bf16.gmra.mxu0 %v3059
        %v3343 = vpop.f32.mrf.mxu0
        %v3344 = vadd.f32 %v3255, %v3343
        %v3345 = vpop.f32.mrf.mxu0
        %v3346 = vadd.f32 %v3257, %v3345
        %3347 = vmatmul.bf16.gmra.mxu0 %v3061
        %v3348 = vpop.f32.mrf.mxu0
        %v3349 = vadd.f32 %v3260, %v3348
        %v3350 = vpop.f32.mrf.mxu0
        %v3351 = vadd.f32 %v3262, %v3350
        %3352 = vmatmul.bf16.gmra.mxu0 %v3063
        %v3353 = vpop.f32.mrf.mxu0
        %v3354 = vadd.f32 %v3265, %v3353
        %v3355 = vpop.f32.mrf.mxu0
        %v3356 = vadd.f32 %v3267, %v3355
        %3357 = vmatmul.bf16.gmra.mxu0 %v3065
        %v3358 = vpop.f32.mrf.mxu0
        %v3359 = vadd.f32 %v3270, %v3358
        %v3360 = vpop.f32.mrf.mxu0
        %v3361 = vadd.f32 %v3272, %v3360
        %3362 = vmatmul.bf16.gmra.mxu0 %v3067
        %v3363 = vpop.f32.mrf.mxu0
        %v3364 = vadd.f32 %v3275, %v3363
        %v3365 = vpop.f32.mrf.mxu0
        %v3366 = vadd.f32 %v3277, %v3365
        %3367 = vmatmul.bf16.gmra.mxu0 %v3069
        %v3368 = vpop.f32.mrf.mxu0
        %v3369 = vadd.f32 %v3280, %v3368
        %v3370 = vpop.f32.mrf.mxu0
        %v3371 = vadd.f32 %v3282, %v3370
        %3372 = vmatmul.bf16.gmra.mxu0 %v3071
        %v3373 = vpop.f32.mrf.mxu0
        %v3374 = vadd.f32 %v3285, %v3373
        %v3375 = vpop.f32.mrf.mxu0
        %v3376 = vadd.f32 %v3287, %v3375
        %3377 = vmatmul.bf16.gmra.mxu0 %v3073
        %v3378 = vpop.f32.mrf.mxu0
        %v3379 = vadd.f32 %v3290, %v3378
        %v3380 = vpop.f32.mrf.mxu0
        %v3381 = vadd.f32 %v3292, %v3380
        %3382 = vdwg.mxu0
        %3383 = vadd.xlane.f32.xlu0 %v3304
        %v3384 = vpop.xlane.xlu0 %3383
        %3385 = vadd.xlane.f32.xlu0 %v3306
        %v3386 = vpop.xlane.xlu0 %3385
        %3387 = vadd.xlane.f32.xlu0 %v3309
        %v3388 = vpop.xlane.xlu0 %3387
        %3389 = vadd.xlane.f32.xlu0 %v3311
        %v3390 = vpop.xlane.xlu0 %3389
        %3391 = vadd.xlane.f32.xlu0 %v3314
        %v3392 = vpop.xlane.xlu0 %3391
        %3393 = vadd.xlane.f32.xlu0 %v3316
        %v3394 = vpop.xlane.xlu0 %3393
        %3395 = vadd.xlane.f32.xlu0 %v3319
        %v3396 = vpop.xlane.xlu0 %3395
        %3397 = vadd.xlane.f32.xlu0 %v3321
        %v3398 = vpop.xlane.xlu0 %3397
        %3399 = vadd.xlane.f32.xlu0 %v3324
        %v3400 = vpop.xlane.xlu0 %3399
        %3401 = vadd.xlane.f32.xlu0 %v3326
        %v3402 = vpop.xlane.xlu0 %3401
        %3403 = vadd.xlane.f32.xlu0 %v3329
        %v3404 = vpop.xlane.xlu0 %3403
        %3405 = vadd.xlane.f32.xlu0 %v3331
        %v3406 = vpop.xlane.xlu0 %3405
        %3407 = vadd.xlane.f32.xlu0 %v3334
        %v3408 = vpop.xlane.xlu0 %3407
        %3409 = vadd.xlane.f32.xlu0 %v3336
        %v3410 = vpop.xlane.xlu0 %3409
        %3411 = vadd.xlane.f32.xlu0 %v3339
        %v3412 = vpop.xlane.xlu0 %3411
        %3413 = vadd.xlane.f32.xlu0 %v3341
        %v3414 = vpop.xlane.xlu0 %3413
        %3415 = vadd.xlane.f32.xlu0 %v3344
        %v3416 = vpop.xlane.xlu0 %3415
        %3417 = vadd.xlane.f32.xlu0 %v3346
        %v3418 = vpop.xlane.xlu0 %3417
        %3419 = vadd.xlane.f32.xlu0 %v3349
        %v3420 = vpop.xlane.xlu0 %3419
        %3421 = vadd.xlane.f32.xlu0 %v3351
        %v3422 = vpop.xlane.xlu0 %3421
        %3423 = vadd.xlane.f32.xlu0 %v3354
        %v3424 = vpop.xlane.xlu0 %3423
        %3425 = vadd.xlane.f32.xlu0 %v3356
        %v3426 = vpop.xlane.xlu0 %3425
        %3427 = vadd.xlane.f32.xlu0 %v3359
        %v3428 = vpop.xlane.xlu0 %3427
        %3429 = vadd.xlane.f32.xlu0 %v3361
        %v3430 = vpop.xlane.xlu0 %3429
        %3431 = vadd.xlane.f32.xlu0 %v3364
        %v3432 = vpop.xlane.xlu0 %3431
        %3433 = vadd.xlane.f32.xlu0 %v3366
        %v3434 = vpop.xlane.xlu0 %3433
        %3435 = vadd.xlane.f32.xlu0 %v3369
        %v3436 = vpop.xlane.xlu0 %3435
        %3437 = vadd.xlane.f32.xlu0 %v3371
        %v3438 = vpop.xlane.xlu0 %3437
        %3439 = vadd.xlane.f32.xlu0 %v3374
        %v3440 = vpop.xlane.xlu0 %3439
        %3441 = vadd.xlane.f32.xlu0 %v3376
        %v3442 = vpop.xlane.xlu0 %3441
        %3443 = vadd.xlane.f32.xlu0 %v3379
        %v3444 = vpop.xlane.xlu0 %3443
        %3445 = vadd.xlane.f32.xlu0 %v3381
        %v3446 = vpop.xlane.xlu0 %3445
        %v3447 = vrcp.pop 128.0
        %v3448 = vmul.f32 128.0, %v3447
        %v3449 = vsub.f32 1.0, %v3448
        %v3450 = vmul.f32 %v3447, %v3449
        %v3451 = vadd.f32 %v3447, %v3450
        %vm3452 = vweird.f32 %v3447
        %v3453 = vsel %vm3452, %v3447, %v3451
        %v3454 = vmul.f32 %v3384, %v3453
        %v3455 = vmul.f32 %v3386, %v3453
        %v3456 = vmul.f32 %v3388, %v3453
        %v3457 = vmul.f32 %v3390, %v3453
        %v3458 = vmul.f32 %v3392, %v3453
        %v3459 = vmul.f32 %v3394, %v3453
        %v3460 = vmul.f32 %v3396, %v3453
        %v3461 = vmul.f32 %v3398, %v3453
        %v3462 = vmul.f32 %v3400, %v3453
        %v3463 = vmul.f32 %v3402, %v3453
        %v3464 = vmul.f32 %v3404, %v3453
        %v3465 = vmul.f32 %v3406, %v3453
        %v3466 = vmul.f32 %v3408, %v3453
        %v3467 = vmul.f32 %v3410, %v3453
        %v3468 = vmul.f32 %v3412, %v3453
        %v3469 = vmul.f32 %v3414, %v3453
        %v3470 = vmul.f32 %v3416, %v3453
        %v3471 = vmul.f32 %v3418, %v3453
        %v3472 = vmul.f32 %v3420, %v3453
        %v3473 = vmul.f32 %v3422, %v3453
        %v3474 = vmul.f32 %v3424, %v3453
        %v3475 = vmul.f32 %v3426, %v3453
        %v3476 = vmul.f32 %v3428, %v3453
        %v3477 = vmul.f32 %v3430, %v3453
        %v3478 = vmul.f32 %v3432, %v3453
        %v3479 = vmul.f32 %v3434, %v3453
        %v3480 = vmul.f32 %v3436, %v3453
        %v3481 = vmul.f32 %v3438, %v3453
        %v3482 = vmul.f32 %v3440, %v3453
        %v3483 = vmul.f32 %v3442, %v3453
        %v3484 = vmul.f32 %v3444, %v3453
        %v3485 = vmul.f32 %v3446, %v3453
        %v3486 = vsub.f32 %v3304, %v3454
        %v3487 = vsub.f32 %v3306, %v3455
        %v3488 = vsub.f32 %v3309, %v3456
        %v3489 = vsub.f32 %v3311, %v3457
        %v3490 = vsub.f32 %v3314, %v3458
        %v3491 = vsub.f32 %v3316, %v3459
        %v3492 = vsub.f32 %v3319, %v3460
        %v3493 = vsub.f32 %v3321, %v3461
        %v3494 = vsub.f32 %v3324, %v3462
        %v3495 = vsub.f32 %v3326, %v3463
        %v3496 = vsub.f32 %v3329, %v3464
        %v3497 = vsub.f32 %v3331, %v3465
        %v3498 = vsub.f32 %v3334, %v3466
        %v3499 = vsub.f32 %v3336, %v3467
        %v3500 = vsub.f32 %v3339, %v3468
        %v3501 = vsub.f32 %v3341, %v3469
        %v3502 = vsub.f32 %v3344, %v3470
        %v3503 = vsub.f32 %v3346, %v3471
        %v3504 = vsub.f32 %v3349, %v3472
        %v3505 = vsub.f32 %v3351, %v3473
        %v3506 = vsub.f32 %v3354, %v3474
        %v3507 = vsub.f32 %v3356, %v3475
        %v3508 = vsub.f32 %v3359, %v3476
        %v3509 = vsub.f32 %v3361, %v3477
        %v3510 = vsub.f32 %v3364, %v3478
        %v3511 = vsub.f32 %v3366, %v3479
        %v3512 = vsub.f32 %v3369, %v3480
        %v3513 = vsub.f32 %v3371, %v3481
        %v3514 = vsub.f32 %v3374, %v3482
        %v3515 = vsub.f32 %v3376, %v3483
        %v3516 = vsub.f32 %v3379, %v3484
        %v3517 = vsub.f32 %v3381, %v3485
        %v3518 = vmul.f32 %v3486, %v3486
        %v3519 = vmul.f32 %v3487, %v3487
        %v3520 = vmul.f32 %v3488, %v3488
        %v3521 = vmul.f32 %v3489, %v3489
        %v3522 = vmul.f32 %v3490, %v3490
        %v3523 = vmul.f32 %v3491, %v3491
        %v3524 = vmul.f32 %v3492, %v3492
        %v3525 = vmul.f32 %v3493, %v3493
        %v3526 = vmul.f32 %v3494, %v3494
        %v3527 = vmul.f32 %v3495, %v3495
        %v3528 = vmul.f32 %v3496, %v3496
        %v3529 = vmul.f32 %v3497, %v3497
        %v3530 = vmul.f32 %v3498, %v3498
        %v3531 = vmul.f32 %v3499, %v3499
        %v3532 = vmul.f32 %v3500, %v3500
        %v3533 = vmul.f32 %v3501, %v3501
        %v3534 = vmul.f32 %v3502, %v3502
        %v3535 = vmul.f32 %v3503, %v3503
        %v3536 = vmul.f32 %v3504, %v3504
        %v3537 = vmul.f32 %v3505, %v3505
        %v3538 = vmul.f32 %v3506, %v3506
        %v3539 = vmul.f32 %v3507, %v3507
        %v3540 = vmul.f32 %v3508, %v3508
        %v3541 = vmul.f32 %v3509, %v3509
        %v3542 = vmul.f32 %v3510, %v3510
        %v3543 = vmul.f32 %v3511, %v3511
        %v3544 = vmul.f32 %v3512, %v3512
        %v3545 = vmul.f32 %v3513, %v3513
        %v3546 = vmul.f32 %v3514, %v3514
        %v3547 = vmul.f32 %v3515, %v3515
        %v3548 = vmul.f32 %v3516, %v3516
        %v3549 = vmul.f32 %v3517, %v3517
        %3550 = vadd.xlane.f32.xlu0 %v3518
        %v3551 = vpop.xlane.xlu0 %3550
        %3552 = vadd.xlane.f32.xlu0 %v3519
        %v3553 = vpop.xlane.xlu0 %3552
        %3554 = vadd.xlane.f32.xlu0 %v3520
        %v3555 = vpop.xlane.xlu0 %3554
        %3556 = vadd.xlane.f32.xlu0 %v3521
        %v3557 = vpop.xlane.xlu0 %3556
        %3558 = vadd.xlane.f32.xlu0 %v3522
        %v3559 = vpop.xlane.xlu0 %3558
        %3560 = vadd.xlane.f32.xlu0 %v3523
        %v3561 = vpop.xlane.xlu0 %3560
        %3562 = vadd.xlane.f32.xlu0 %v3524
        %v3563 = vpop.xlane.xlu0 %3562
        %3564 = vadd.xlane.f32.xlu0 %v3525
        %v3565 = vpop.xlane.xlu0 %3564
        %3566 = vadd.xlane.f32.xlu0 %v3526
        %v3567 = vpop.xlane.xlu0 %3566
        %3568 = vadd.xlane.f32.xlu0 %v3527
        %v3569 = vpop.xlane.xlu0 %3568
        %3570 = vadd.xlane.f32.xlu0 %v3528
        %v3571 = vpop.xlane.xlu0 %3570
        %3572 = vadd.xlane.f32.xlu0 %v3529
        %v3573 = vpop.xlane.xlu0 %3572
        %3574 = vadd.xlane.f32.xlu0 %v3530
        %v3575 = vpop.xlane.xlu0 %3574
        %3576 = vadd.xlane.f32.xlu0 %v3531
        %v3577 = vpop.xlane.xlu0 %3576
        %3578 = vadd.xlane.f32.xlu0 %v3532
        %v3579 = vpop.xlane.xlu0 %3578
        %3580 = vadd.xlane.f32.xlu0 %v3533
        %v3581 = vpop.xlane.xlu0 %3580
        %3582 = vadd.xlane.f32.xlu0 %v3534
        %v3583 = vpop.xlane.xlu0 %3582
        %3584 = vadd.xlane.f32.xlu0 %v3535
        %v3585 = vpop.xlane.xlu0 %3584
        %3586 = vadd.xlane.f32.xlu0 %v3536
        %v3587 = vpop.xlane.xlu0 %3586
        %3588 = vadd.xlane.f32.xlu0 %v3537
        %v3589 = vpop.xlane.xlu0 %3588
        %3590 = vadd.xlane.f32.xlu0 %v3538
        %v3591 = vpop.xlane.xlu0 %3590
        %3592 = vadd.xlane.f32.xlu0 %v3539
        %v3593 = vpop.xlane.xlu0 %3592
        %3594 = vadd.xlane.f32.xlu0 %v3540
        %v3595 = vpop.xlane.xlu0 %3594
        %3596 = vadd.xlane.f32.xlu0 %v3541
        %v3597 = vpop.xlane.xlu0 %3596
        %3598 = vadd.xlane.f32.xlu0 %v3542
        %v3599 = vpop.xlane.xlu0 %3598
        %3600 = vadd.xlane.f32.xlu0 %v3543
        %v3601 = vpop.xlane.xlu0 %3600
        %3602 = vadd.xlane.f32.xlu0 %v3544
        %v3603 = vpop.xlane.xlu0 %3602
        %3604 = vadd.xlane.f32.xlu0 %v3545
        %v3605 = vpop.xlane.xlu0 %3604
        %3606 = vadd.xlane.f32.xlu0 %v3546
        %v3607 = vpop.xlane.xlu0 %3606
        %3608 = vadd.xlane.f32.xlu0 %v3547
        %v3609 = vpop.xlane.xlu0 %3608
        %3610 = vadd.xlane.f32.xlu0 %v3548
        %v3611 = vpop.xlane.xlu0 %3610
        %3612 = vadd.xlane.f32.xlu0 %v3549
        %v3613 = vpop.xlane.xlu0 %3612
        %v3614 = vmul.f32 %v3551, %v3453
        %v3615 = vmul.f32 %v3553, %v3453
        %v3616 = vmul.f32 %v3555, %v3453
        %v3617 = vmul.f32 %v3557, %v3453
        %v3618 = vmul.f32 %v3559, %v3453
        %v3619 = vmul.f32 %v3561, %v3453
        %v3620 = vmul.f32 %v3563, %v3453
        %v3621 = vmul.f32 %v3565, %v3453
        %v3622 = vmul.f32 %v3567, %v3453
        %v3623 = vmul.f32 %v3569, %v3453
        %v3624 = vmul.f32 %v3571, %v3453
        %v3625 = vmul.f32 %v3573, %v3453
        %v3626 = vmul.f32 %v3575, %v3453
        %v3627 = vmul.f32 %v3577, %v3453
        %v3628 = vmul.f32 %v3579, %v3453
        %v3629 = vmul.f32 %v3581, %v3453
        %v3630 = vmul.f32 %v3583, %v3453
        %v3631 = vmul.f32 %v3585, %v3453
        %v3632 = vmul.f32 %v3587, %v3453
        %v3633 = vmul.f32 %v3589, %v3453
        %v3634 = vmul.f32 %v3591, %v3453
        %v3635 = vmul.f32 %v3593, %v3453
        %v3636 = vmul.f32 %v3595, %v3453
        %v3637 = vmul.f32 %v3597, %v3453
        %v3638 = vmul.f32 %v3599, %v3453
        %v3639 = vmul.f32 %v3601, %v3453
        %v3640 = vmul.f32 %v3603, %v3453
        %v3641 = vmul.f32 %v3605, %v3453
        %v3642 = vmul.f32 %v3607, %v3453
        %v3643 = vmul.f32 %v3609, %v3453
        %v3644 = vmul.f32 %v3611, %v3453
        %v3645 = vmul.f32 %v3613, %v3453
        %v3646 = vadd.f32 %v3614, 1e-05
        %v3647 = vadd.f32 %v3615, 1e-05
        %v3648 = vadd.f32 %v3616, 1e-05
        %v3649 = vadd.f32 %v3617, 1e-05
        %v3650 = vadd.f32 %v3618, 1e-05
        %v3651 = vadd.f32 %v3619, 1e-05
        %v3652 = vadd.f32 %v3620, 1e-05
        %v3653 = vadd.f32 %v3621, 1e-05
        %v3654 = vadd.f32 %v3622, 1e-05
        %v3655 = vadd.f32 %v3623, 1e-05
        %v3656 = vadd.f32 %v3624, 1e-05
        %v3657 = vadd.f32 %v3625, 1e-05
        %v3658 = vadd.f32 %v3626, 1e-05
        %v3659 = vadd.f32 %v3627, 1e-05
        %v3660 = vadd.f32 %v3628, 1e-05
        %v3661 = vadd.f32 %v3629, 1e-05
        %v3662 = vadd.f32 %v3630, 1e-05
        %v3663 = vadd.f32 %v3631, 1e-05
        %v3664 = vadd.f32 %v3632, 1e-05
        %v3665 = vadd.f32 %v3633, 1e-05
        %v3666 = vadd.f32 %v3634, 1e-05
        %v3667 = vadd.f32 %v3635, 1e-05
        %v3668 = vadd.f32 %v3636, 1e-05
        %v3669 = vadd.f32 %v3637, 1e-05
        %v3670 = vadd.f32 %v3638, 1e-05
        %v3671 = vadd.f32 %v3639, 1e-05
        %v3672 = vadd.f32 %v3640, 1e-05
        %v3673 = vadd.f32 %v3641, 1e-05
        %v3674 = vadd.f32 %v3642, 1e-05
        %v3675 = vadd.f32 %v3643, 1e-05
        %v3676 = vadd.f32 %v3644, 1e-05
        %v3677 = vadd.f32 %v3645, 1e-05
        %v3678 = vrsqrt.pop %v3646
        %v3679 = vmul.f32 %v3678, %v3646
        %v3680 = vmul.f32 %v3679, %v3678
        %v3681 = vmul.f32 0.5, %v3680
        %v3682 = vsub.f32 1.5, %v3681
        %v3683 = vmul.f32 %v3678, %v3682
        %vm3684 = vweird.f32 %v3646
        %vm3685 = vweird.f32 %v3678
        %vm3686 = vmor %vm3684, %vm3685
        %v3687 = vsel %vm3686, %v3678, %v3683
        %v3688 = vrsqrt.pop %v3647
        %v3689 = vmul.f32 %v3688, %v3647
        %v3690 = vmul.f32 %v3689, %v3688
        %v3691 = vmul.f32 0.5, %v3690
        %v3692 = vsub.f32 1.5, %v3691
        %v3693 = vmul.f32 %v3688, %v3692
        %vm3694 = vweird.f32 %v3647
        %vm3695 = vweird.f32 %v3688
        %vm3696 = vmor %vm3694, %vm3695
        %v3697 = vsel %vm3696, %v3688, %v3693
        %v3698 = vrsqrt.pop %v3648
        %v3699 = vmul.f32 %v3698, %v3648
        %v3700 = vmul.f32 %v3699, %v3698
        %v3701 = vmul.f32 0.5, %v3700
        %v3702 = vsub.f32 1.5, %v3701
        %v3703 = vmul.f32 %v3698, %v3702
        %vm3704 = vweird.f32 %v3648
        %vm3705 = vweird.f32 %v3698
        %vm3706 = vmor %vm3704, %vm3705
        %v3707 = vsel %vm3706, %v3698, %v3703
        %v3708 = vrsqrt.pop %v3649
        %v3709 = vmul.f32 %v3708, %v3649
        %v3710 = vmul.f32 %v3709, %v3708
        %v3711 = vmul.f32 0.5, %v3710
        %v3712 = vsub.f32 1.5, %v3711
        %v3713 = vmul.f32 %v3708, %v3712
        %vm3714 = vweird.f32 %v3649
        %vm3715 = vweird.f32 %v3708
        %vm3716 = vmor %vm3714, %vm3715
        %v3717 = vsel %vm3716, %v3708, %v3713
        %v3718 = vrsqrt.pop %v3650
        %v3719 = vmul.f32 %v3718, %v3650
        %v3720 = vmul.f32 %v3719, %v3718
        %v3721 = vmul.f32 0.5, %v3720
        %v3722 = vsub.f32 1.5, %v3721
        %v3723 = vmul.f32 %v3718, %v3722
        %vm3724 = vweird.f32 %v3650
        %vm3725 = vweird.f32 %v3718
        %vm3726 = vmor %vm3724, %vm3725
        %v3727 = vsel %vm3726, %v3718, %v3723
        %v3728 = vrsqrt.pop %v3651
        %v3729 = vmul.f32 %v3728, %v3651
        %v3730 = vmul.f32 %v3729, %v3728
        %v3731 = vmul.f32 0.5, %v3730
        %v3732 = vsub.f32 1.5, %v3731
        %v3733 = vmul.f32 %v3728, %v3732
        %vm3734 = vweird.f32 %v3651
        %vm3735 = vweird.f32 %v3728
        %vm3736 = vmor %vm3734, %vm3735
        %v3737 = vsel %vm3736, %v3728, %v3733
        %v3738 = vrsqrt.pop %v3652
        %v3739 = vmul.f32 %v3738, %v3652
        %v3740 = vmul.f32 %v3739, %v3738
        %v3741 = vmul.f32 0.5, %v3740
        %v3742 = vsub.f32 1.5, %v3741
        %v3743 = vmul.f32 %v3738, %v3742
        %vm3744 = vweird.f32 %v3652
        %vm3745 = vweird.f32 %v3738
        %vm3746 = vmor %vm3744, %vm3745
        %v3747 = vsel %vm3746, %v3738, %v3743
        %v3748 = vrsqrt.pop %v3653
        %v3749 = vmul.f32 %v3748, %v3653
        %v3750 = vmul.f32 %v3749, %v3748
        %v3751 = vmul.f32 0.5, %v3750
        %v3752 = vsub.f32 1.5, %v3751
        %v3753 = vmul.f32 %v3748, %v3752
        %vm3754 = vweird.f32 %v3653
        %vm3755 = vweird.f32 %v3748
        %vm3756 = vmor %vm3754, %vm3755
        %v3757 = vsel %vm3756, %v3748, %v3753
        %v3758 = vrsqrt.pop %v3654
        %v3759 = vmul.f32 %v3758, %v3654
        %v3760 = vmul.f32 %v3759, %v3758
        %v3761 = vmul.f32 0.5, %v3760
        %v3762 = vsub.f32 1.5, %v3761
        %v3763 = vmul.f32 %v3758, %v3762
        %vm3764 = vweird.f32 %v3654
        %vm3765 = vweird.f32 %v3758
        %vm3766 = vmor %vm3764, %vm3765
        %v3767 = vsel %vm3766, %v3758, %v3763
        %v3768 = vrsqrt.pop %v3655
        %v3769 = vmul.f32 %v3768, %v3655
        %v3770 = vmul.f32 %v3769, %v3768
        %v3771 = vmul.f32 0.5, %v3770
        %v3772 = vsub.f32 1.5, %v3771
        %v3773 = vmul.f32 %v3768, %v3772
        %vm3774 = vweird.f32 %v3655
        %vm3775 = vweird.f32 %v3768
        %vm3776 = vmor %vm3774, %vm3775
        %v3777 = vsel %vm3776, %v3768, %v3773
        %v3778 = vrsqrt.pop %v3656
        %v3779 = vmul.f32 %v3778, %v3656
        %v3780 = vmul.f32 %v3779, %v3778
        %v3781 = vmul.f32 0.5, %v3780
        %v3782 = vsub.f32 1.5, %v3781
        %v3783 = vmul.f32 %v3778, %v3782
        %vm3784 = vweird.f32 %v3656
        %vm3785 = vweird.f32 %v3778
        %vm3786 = vmor %vm3784, %vm3785
        %v3787 = vsel %vm3786, %v3778, %v3783
        %v3788 = vrsqrt.pop %v3657
        %v3789 = vmul.f32 %v3788, %v3657
        %v3790 = vmul.f32 %v3789, %v3788
        %v3791 = vmul.f32 0.5, %v3790
        %v3792 = vsub.f32 1.5, %v3791
        %v3793 = vmul.f32 %v3788, %v3792
        %vm3794 = vweird.f32 %v3657
        %vm3795 = vweird.f32 %v3788
        %vm3796 = vmor %vm3794, %vm3795
        %v3797 = vsel %vm3796, %v3788, %v3793
        %v3798 = vrsqrt.pop %v3658
        %v3799 = vmul.f32 %v3798, %v3658
        %v3800 = vmul.f32 %v3799, %v3798
        %v3801 = vmul.f32 0.5, %v3800
        %v3802 = vsub.f32 1.5, %v3801
        %v3803 = vmul.f32 %v3798, %v3802
        %vm3804 = vweird.f32 %v3658
        %vm3805 = vweird.f32 %v3798
        %vm3806 = vmor %vm3804, %vm3805
        %v3807 = vsel %vm3806, %v3798, %v3803
        %v3808 = vrsqrt.pop %v3659
        %v3809 = vmul.f32 %v3808, %v3659
        %v3810 = vmul.f32 %v3809, %v3808
        %v3811 = vmul.f32 0.5, %v3810
        %v3812 = vsub.f32 1.5, %v3811
        %v3813 = vmul.f32 %v3808, %v3812
        %vm3814 = vweird.f32 %v3659
        %vm3815 = vweird.f32 %v3808
        %vm3816 = vmor %vm3814, %vm3815
        %v3817 = vsel %vm3816, %v3808, %v3813
        %v3818 = vrsqrt.pop %v3660
        %v3819 = vmul.f32 %v3818, %v3660
        %v3820 = vmul.f32 %v3819, %v3818
        %v3821 = vmul.f32 0.5, %v3820
        %v3822 = vsub.f32 1.5, %v3821
        %v3823 = vmul.f32 %v3818, %v3822
        %vm3824 = vweird.f32 %v3660
        %vm3825 = vweird.f32 %v3818
        %vm3826 = vmor %vm3824, %vm3825
        %v3827 = vsel %vm3826, %v3818, %v3823
        %v3828 = vrsqrt.pop %v3661
        %v3829 = vmul.f32 %v3828, %v3661
        %v3830 = vmul.f32 %v3829, %v3828
        %v3831 = vmul.f32 0.5, %v3830
        %v3832 = vsub.f32 1.5, %v3831
        %v3833 = vmul.f32 %v3828, %v3832
        %vm3834 = vweird.f32 %v3661
        %vm3835 = vweird.f32 %v3828
        %vm3836 = vmor %vm3834, %vm3835
        %v3837 = vsel %vm3836, %v3828, %v3833
        %v3838 = vrsqrt.pop %v3662
        %v3839 = vmul.f32 %v3838, %v3662
        %v3840 = vmul.f32 %v3839, %v3838
        %v3841 = vmul.f32 0.5, %v3840
        %v3842 = vsub.f32 1.5, %v3841
        %v3843 = vmul.f32 %v3838, %v3842
        %vm3844 = vweird.f32 %v3662
        %vm3845 = vweird.f32 %v3838
        %vm3846 = vmor %vm3844, %vm3845
        %v3847 = vsel %vm3846, %v3838, %v3843
        %v3848 = vrsqrt.pop %v3663
        %v3849 = vmul.f32 %v3848, %v3663
        %v3850 = vmul.f32 %v3849, %v3848
        %v3851 = vmul.f32 0.5, %v3850
        %v3852 = vsub.f32 1.5, %v3851
        %v3853 = vmul.f32 %v3848, %v3852
        %vm3854 = vweird.f32 %v3663
        %vm3855 = vweird.f32 %v3848
        %vm3856 = vmor %vm3854, %vm3855
        %v3857 = vsel %vm3856, %v3848, %v3853
        %v3858 = vrsqrt.pop %v3664
        %v3859 = vmul.f32 %v3858, %v3664
        %v3860 = vmul.f32 %v3859, %v3858
        %v3861 = vmul.f32 0.5, %v3860
        %v3862 = vsub.f32 1.5, %v3861
        %v3863 = vmul.f32 %v3858, %v3862
        %vm3864 = vweird.f32 %v3664
        %vm3865 = vweird.f32 %v3858
        %vm3866 = vmor %vm3864, %vm3865
        %v3867 = vsel %vm3866, %v3858, %v3863
        %v3868 = vrsqrt.pop %v3665
        %v3869 = vmul.f32 %v3868, %v3665
        %v3870 = vmul.f32 %v3869, %v3868
        %v3871 = vmul.f32 0.5, %v3870
        %v3872 = vsub.f32 1.5, %v3871
        %v3873 = vmul.f32 %v3868, %v3872
        %vm3874 = vweird.f32 %v3665
        %vm3875 = vweird.f32 %v3868
        %vm3876 = vmor %vm3874, %vm3875
        %v3877 = vsel %vm3876, %v3868, %v3873
        %v3878 = vrsqrt.pop %v3666
        %v3879 = vmul.f32 %v3878, %v3666
        %v3880 = vmul.f32 %v3879, %v3878
        %v3881 = vmul.f32 0.5, %v3880
        %v3882 = vsub.f32 1.5, %v3881
        %v3883 = vmul.f32 %v3878, %v3882
        %vm3884 = vweird.f32 %v3666
        %vm3885 = vweird.f32 %v3878
        %vm3886 = vmor %vm3884, %vm3885
        %v3887 = vsel %vm3886, %v3878, %v3883
        %v3888 = vrsqrt.pop %v3667
        %v3889 = vmul.f32 %v3888, %v3667
        %v3890 = vmul.f32 %v3889, %v3888
        %v3891 = vmul.f32 0.5, %v3890
        %v3892 = vsub.f32 1.5, %v3891
        %v3893 = vmul.f32 %v3888, %v3892
        %vm3894 = vweird.f32 %v3667
        %vm3895 = vweird.f32 %v3888
        %vm3896 = vmor %vm3894, %vm3895
        %v3897 = vsel %vm3896, %v3888, %v3893
        %v3898 = vrsqrt.pop %v3668
        %v3899 = vmul.f32 %v3898, %v3668
        %v3900 = vmul.f32 %v3899, %v3898
        %v3901 = vmul.f32 0.5, %v3900
        %v3902 = vsub.f32 1.5, %v3901
        %v3903 = vmul.f32 %v3898, %v3902
        %vm3904 = vweird.f32 %v3668
        %vm3905 = vweird.f32 %v3898
        %vm3906 = vmor %vm3904, %vm3905
        %v3907 = vsel %vm3906, %v3898, %v3903
        %v3908 = vrsqrt.pop %v3669
        %v3909 = vmul.f32 %v3908, %v3669
        %v3910 = vmul.f32 %v3909, %v3908
        %v3911 = vmul.f32 0.5, %v3910
        %v3912 = vsub.f32 1.5, %v3911
        %v3913 = vmul.f32 %v3908, %v3912
        %vm3914 = vweird.f32 %v3669
        %vm3915 = vweird.f32 %v3908
        %vm3916 = vmor %vm3914, %vm3915
        %v3917 = vsel %vm3916, %v3908, %v3913
        %v3918 = vrsqrt.pop %v3670
        %v3919 = vmul.f32 %v3918, %v3670
        %v3920 = vmul.f32 %v3919, %v3918
        %v3921 = vmul.f32 0.5, %v3920
        %v3922 = vsub.f32 1.5, %v3921
        %v3923 = vmul.f32 %v3918, %v3922
        %vm3924 = vweird.f32 %v3670
        %vm3925 = vweird.f32 %v3918
        %vm3926 = vmor %vm3924, %vm3925
        %v3927 = vsel %vm3926, %v3918, %v3923
        %v3928 = vrsqrt.pop %v3671
        %v3929 = vmul.f32 %v3928, %v3671
        %v3930 = vmul.f32 %v3929, %v3928
        %v3931 = vmul.f32 0.5, %v3930
        %v3932 = vsub.f32 1.5, %v3931
        %v3933 = vmul.f32 %v3928, %v3932
        %vm3934 = vweird.f32 %v3671
        %vm3935 = vweird.f32 %v3928
        %vm3936 = vmor %vm3934, %vm3935
        %v3937 = vsel %vm3936, %v3928, %v3933
        %v3938 = vrsqrt.pop %v3672
        %v3939 = vmul.f32 %v3938, %v3672
        %v3940 = vmul.f32 %v3939, %v3938
        %v3941 = vmul.f32 0.5, %v3940
        %v3942 = vsub.f32 1.5, %v3941
        %v3943 = vmul.f32 %v3938, %v3942
        %vm3944 = vweird.f32 %v3672
        %vm3945 = vweird.f32 %v3938
        %vm3946 = vmor %vm3944, %vm3945
        %v3947 = vsel %vm3946, %v3938, %v3943
        %v3948 = vrsqrt.pop %v3673
        %v3949 = vmul.f32 %v3948, %v3673
        %v3950 = vmul.f32 %v3949, %v3948
        %v3951 = vmul.f32 0.5, %v3950
        %v3952 = vsub.f32 1.5, %v3951
        %v3953 = vmul.f32 %v3948, %v3952
        %vm3954 = vweird.f32 %v3673
        %vm3955 = vweird.f32 %v3948
        %vm3956 = vmor %vm3954, %vm3955
        %v3957 = vsel %vm3956, %v3948, %v3953
        %v3958 = vrsqrt.pop %v3674
        %v3959 = vmul.f32 %v3958, %v3674
        %v3960 = vmul.f32 %v3959, %v3958
        %v3961 = vmul.f32 0.5, %v3960
        %v3962 = vsub.f32 1.5, %v3961
        %v3963 = vmul.f32 %v3958, %v3962
        %vm3964 = vweird.f32 %v3674
        %vm3965 = vweird.f32 %v3958
        %vm3966 = vmor %vm3964, %vm3965
        %v3967 = vsel %vm3966, %v3958, %v3963
        %v3968 = vrsqrt.pop %v3675
        %v3969 = vmul.f32 %v3968, %v3675
        %v3970 = vmul.f32 %v3969, %v3968
        %v3971 = vmul.f32 0.5, %v3970
        %v3972 = vsub.f32 1.5, %v3971
        %v3973 = vmul.f32 %v3968, %v3972
        %vm3974 = vweird.f32 %v3675
        %vm3975 = vweird.f32 %v3968
        %vm3976 = vmor %vm3974, %vm3975
        %v3977 = vsel %vm3976, %v3968, %v3973
        %v3978 = vrsqrt.pop %v3676
        %v3979 = vmul.f32 %v3978, %v3676
        %v3980 = vmul.f32 %v3979, %v3978
        %v3981 = vmul.f32 0.5, %v3980
        %v3982 = vsub.f32 1.5, %v3981
        %v3983 = vmul.f32 %v3978, %v3982
        %vm3984 = vweird.f32 %v3676
        %vm3985 = vweird.f32 %v3978
        %vm3986 = vmor %vm3984, %vm3985
        %v3987 = vsel %vm3986, %v3978, %v3983
        %v3988 = vrsqrt.pop %v3677
        %v3989 = vmul.f32 %v3988, %v3677
        %v3990 = vmul.f32 %v3989, %v3988
        %v3991 = vmul.f32 0.5, %v3990
        %v3992 = vsub.f32 1.5, %v3991
        %v3993 = vmul.f32 %v3988, %v3992
        %vm3994 = vweird.f32 %v3677
        %vm3995 = vweird.f32 %v3988
        %vm3996 = vmor %vm3994, %vm3995
        %v3997 = vsel %vm3996, %v3988, %v3993
        %v3999 = vperm.slane %v395, 0
        %v4001 = vmul.f32 %v3687, %v3999
        %v4002 = vmul.f32 %v3697, %v3999
        %v4003 = vmul.f32 %v3707, %v3999
        %v4004 = vmul.f32 %v3717, %v3999
        %v4005 = vmul.f32 %v3727, %v3999
        %v4006 = vmul.f32 %v3737, %v3999
        %v4007 = vmul.f32 %v3747, %v3999
        %v4008 = vmul.f32 %v3757, %v3999
        %v4009 = vmul.f32 %v3767, %v3999
        %v4010 = vmul.f32 %v3777, %v3999
        %v4011 = vmul.f32 %v3787, %v3999
        %v4012 = vmul.f32 %v3797, %v3999
        %v4013 = vmul.f32 %v3807, %v3999
        %v4014 = vmul.f32 %v3817, %v3999
        %v4015 = vmul.f32 %v3827, %v3999
        %v4016 = vmul.f32 %v3837, %v3999
        %v4017 = vmul.f32 %v3847, %v3999
        %v4018 = vmul.f32 %v3857, %v3999
        %v4019 = vmul.f32 %v3867, %v3999
        %v4020 = vmul.f32 %v3877, %v3999
        %v4021 = vmul.f32 %v3887, %v3999
        %v4022 = vmul.f32 %v3897, %v3999
        %v4023 = vmul.f32 %v3907, %v3999
        %v4024 = vmul.f32 %v3917, %v3999
        %v4025 = vmul.f32 %v3927, %v3999
        %v4026 = vmul.f32 %v3937, %v3999
        %v4027 = vmul.f32 %v3947, %v3999
        %v4028 = vmul.f32 %v3957, %v3999
        %v4029 = vmul.f32 %v3967, %v3999
        %v4030 = vmul.f32 %v3977, %v3999
        %v4031 = vmul.f32 %v3987, %v3999
        %v4032 = vmul.f32 %v3997, %v3999
        %v4033 = vmul.f32 %v3486, %v4001
        %v4034 = vmul.f32 %v3487, %v4002
        %v4035 = vmul.f32 %v3488, %v4003
        %v4036 = vmul.f32 %v3489, %v4004
        %v4037 = vmul.f32 %v3490, %v4005
        %v4038 = vmul.f32 %v3491, %v4006
        %v4039 = vmul.f32 %v3492, %v4007
        %v4040 = vmul.f32 %v3493, %v4008
        %v4041 = vmul.f32 %v3494, %v4009
        %v4042 = vmul.f32 %v3495, %v4010
        %v4043 = vmul.f32 %v3496, %v4011
        %v4044 = vmul.f32 %v3497, %v4012
        %v4045 = vmul.f32 %v3498, %v4013
        %v4046 = vmul.f32 %v3499, %v4014
        %v4047 = vmul.f32 %v3500, %v4015
        %v4048 = vmul.f32 %v3501, %v4016
        %v4049 = vmul.f32 %v3502, %v4017
        %v4050 = vmul.f32 %v3503, %v4018
        %v4051 = vmul.f32 %v3504, %v4019
        %v4052 = vmul.f32 %v3505, %v4020
        %v4053 = vmul.f32 %v3506, %v4021
        %v4054 = vmul.f32 %v3507, %v4022
        %v4055 = vmul.f32 %v3508, %v4023
        %v4056 = vmul.f32 %v3509, %v4024
        %v4057 = vmul.f32 %v3510, %v4025
        %v4058 = vmul.f32 %v3511, %v4026
        %v4059 = vmul.f32 %v3512, %v4027
        %v4060 = vmul.f32 %v3513, %v4028
        %v4061 = vmul.f32 %v3514, %v4029
        %v4062 = vmul.f32 %v3515, %v4030
        %v4063 = vmul.f32 %v3516, %v4031
        %v4064 = vmul.f32 %v3517, %v4032
        %v4065 = vadd.f32 %v3304, %v4033
        %v4066 = vadd.f32 %v3306, %v4034
        %v4067 = vadd.f32 %v3309, %v4035
        %v4068 = vadd.f32 %v3311, %v4036
        %v4069 = vadd.f32 %v3314, %v4037
        %v4070 = vadd.f32 %v3316, %v4038
        %v4071 = vadd.f32 %v3319, %v4039
        %v4072 = vadd.f32 %v3321, %v4040
        %v4073 = vadd.f32 %v3324, %v4041
        %v4074 = vadd.f32 %v3326, %v4042
        %v4075 = vadd.f32 %v3329, %v4043
        %v4076 = vadd.f32 %v3331, %v4044
        %v4077 = vadd.f32 %v3334, %v4045
        %v4078 = vadd.f32 %v3336, %v4046
        %v4079 = vadd.f32 %v3339, %v4047
        %v4080 = vadd.f32 %v3341, %v4048
        %v4081 = vadd.f32 %v3344, %v4049
        %v4082 = vadd.f32 %v3346, %v4050
        %v4083 = vadd.f32 %v3349, %v4051
        %v4084 = vadd.f32 %v3351, %v4052
        %v4085 = vadd.f32 %v3354, %v4053
        %v4086 = vadd.f32 %v3356, %v4054
        %v4087 = vadd.f32 %v3359, %v4055
        %v4088 = vadd.f32 %v3361, %v4056
        %v4089 = vadd.f32 %v3364, %v4057
        %v4090 = vadd.f32 %v3366, %v4058
        %v4091 = vadd.f32 %v3369, %v4059
        %v4092 = vadd.f32 %v3371, %v4060
        %v4093 = vadd.f32 %v3374, %v4061
        %v4094 = vadd.f32 %v3376, %v4062
        %v4095 = vadd.f32 %v3379, %v4063
        %v4096 = vadd.f32 %v3381, %v4064
        %v4098 = vperm.slane %v396, 0
        %v4100 = vadd.f32 %v4065, %v4098
        %v4101 = vadd.f32 %v4066, %v4098
        %v4102 = vadd.f32 %v4067, %v4098
        %v4103 = vadd.f32 %v4068, %v4098
        %v4104 = vadd.f32 %v4069, %v4098
        %v4105 = vadd.f32 %v4070, %v4098
        %v4106 = vadd.f32 %v4071, %v4098
        %v4107 = vadd.f32 %v4072, %v4098
        %v4108 = vadd.f32 %v4073, %v4098
        %v4109 = vadd.f32 %v4074, %v4098
        %v4110 = vadd.f32 %v4075, %v4098
        %v4111 = vadd.f32 %v4076, %v4098
        %v4112 = vadd.f32 %v4077, %v4098
        %v4113 = vadd.f32 %v4078, %v4098
        %v4114 = vadd.f32 %v4079, %v4098
        %v4115 = vadd.f32 %v4080, %v4098
        %v4116 = vadd.f32 %v4081, %v4098
        %v4117 = vadd.f32 %v4082, %v4098
        %v4118 = vadd.f32 %v4083, %v4098
        %v4119 = vadd.f32 %v4084, %v4098
        %v4120 = vadd.f32 %v4085, %v4098
        %v4121 = vadd.f32 %v4086, %v4098
        %v4122 = vadd.f32 %v4087, %v4098
        %v4123 = vadd.f32 %v4088, %v4098
        %v4124 = vadd.f32 %v4089, %v4098
        %v4125 = vadd.f32 %v4090, %v4098
        %v4126 = vadd.f32 %v4091, %v4098
        %v4127 = vadd.f32 %v4092, %v4098
        %v4128 = vadd.f32 %v4093, %v4098
        %v4129 = vadd.f32 %v4094, %v4098
        %v4130 = vadd.f32 %v4095, %v4098
        %v4131 = vadd.f32 %v4096, %v4098
        %4132 = vst [vmem:[%s390] sm:$0xff] %v4100
        %4133 = vst [vmem:[%s390 + $0x8] sm:$0xff] %v4101
        %4134 = vst [vmem:[%s390 + $0x10] sm:$0xff] %v4102
        %4135 = vst [vmem:[%s390 + $0x18] sm:$0xff] %v4103
        %4136 = vst [vmem:[%s390 + $0x20] sm:$0xff] %v4104
        %4137 = vst [vmem:[%s390 + $0x28] sm:$0xff] %v4105
        %4138 = vst [vmem:[%s390 + $0x30] sm:$0xff] %v4106
        %4139 = vst [vmem:[%s390 + $0x38] sm:$0xff] %v4107
        %4140 = vst [vmem:[%s390 + $0x40] sm:$0xff] %v4108
        %4141 = vst [vmem:[%s390 + $0x48] sm:$0xff] %v4109
        %4142 = vst [vmem:[%s390 + $0x50] sm:$0xff] %v4110
        %4143 = vst [vmem:[%s390 + $0x58] sm:$0xff] %v4111
        %4144 = vst [vmem:[%s390 + $0x60] sm:$0xff] %v4112
        %4145 = vst [vmem:[%s390 + $0x68] sm:$0xff] %v4113
        %4146 = vst [vmem:[%s390 + $0x70] sm:$0xff] %v4114
        %4147 = vst [vmem:[%s390 + $0x78] sm:$0xff] %v4115
        %4148 = vst [vmem:[%s390 + $0x80] sm:$0xff] %v4116
        %4149 = vst [vmem:[%s390 + $0x88] sm:$0xff] %v4117
        %4150 = vst [vmem:[%s390 + $0x90] sm:$0xff] %v4118
        %4151 = vst [vmem:[%s390 + $0x98] sm:$0xff] %v4119
        %4152 = vst [vmem:[%s390 + $0xa0] sm:$0xff] %v4120
        %4153 = vst [vmem:[%s390 + $0xa8] sm:$0xff] %v4121
        %4154 = vst [vmem:[%s390 + $0xb0] sm:$0xff] %v4122
        %4155 = vst [vmem:[%s390 + $0xb8] sm:$0xff] %v4123
        %4156 = vst [vmem:[%s390 + $0xc0] sm:$0xff] %v4124
        %4157 = vst [vmem:[%s390 + $0xc8] sm:$0xff] %v4125
        %4158 = vst [vmem:[%s390 + $0xd0] sm:$0xff] %v4126
        %4159 = vst [vmem:[%s390 + $0xd8] sm:$0xff] %v4127
        %4160 = vst [vmem:[%s390 + $0xe0] sm:$0xff] %v4128
        %4161 = vst [vmem:[%s390 + $0xe8] sm:$0xff] %v4129
        %4162 = vst [vmem:[%s390 + $0xf0] sm:$0xff] %v4130
        %4163 = vst [vmem:[%s390 + $0xf8] sm:$0xff] %v4131
        %s4164 = sand.u32 %s187, 1
        %s4165 = scalar_lea.sflag [#allocation4], %s4164
        %s4166 = sand.u32 %s187, 1
        %s4167 = smul.addr %s4166, 256
        %s4168 = scalar_lea.vmem [#allocation14], %s4167
        // Predicated region
        $region77: #{tpu_custom_call.1} parent=47 // pred_check
          %p4169 = pneg %p197
        $region78: #{tpu_custom_call.1} parent=47 // pred_check_branch
          %4171 = sbr.rel (%p4169) target = $region80
        $region79: #{tpu_custom_call.1} parent=47 // pred_region
          %s4172 = smul.u32 32, %s27
          %4174 = vsyncadd %s4165, 0
          %s4175 = smul.addr %s4172, 8
          %s4176 = scalar_lea.hbm %s7, %s4175
          %s4177 = sshll.u32 %s4168, 4
          %s4178 = int_to_ptr.vmem [resolvable:$true] %s4177
          %s4179 = sshll.u32 %s4176, 4
          %s4180 = int_to_ptr.hbm [resolvable:$true] %s4179
          %4185 = dma.vmem_to_hbm [thread:$0]  %s4178, 4096, %s4180, %s4165, 128, 128, 8
        $region80: #{tpu_custom_call.1} parent=47 // pred_fallthru
          _
      $region48: #{tpu_custom_call.1} parent=5 // pred_fallthru
        _
      %p4186 = scmp.le.s32.totalorder 2, %s22
      // Predicated region
      $region81: #{tpu_custom_call.1} parent=5 // pred_check
        %p4187 = pneg %p4186
      $region82: #{tpu_custom_call.1} parent=5 // pred_check_branch
        %4189 = sbr.rel (%p4187) target = $region84
      $region83: #{tpu_custom_call.1} parent=5 // pred_region
        %s4190 = ssub.s32 %s22, 2
        // Predicated region
        $region85: #{tpu_custom_call.1} parent=83 // pred_check
          %p4191 = pneg %p203
        $region86: #{tpu_custom_call.1} parent=83 // pred_check_branch
          %4193 = sbr.rel (%p4191) target = $region88
        $region87: #{tpu_custom_call.1} parent=83 // pred_region
          %s4194 = sand.u32 %s188, 1
          %s4195 = scalar_lea.sflag [#allocation4], %s4194
          %s4196 = sand.u32 %s188, 1
          %s4197 = smul.addr %s4196, 256
          %s4198 = scalar_lea.vmem [#allocation14], %s4197
          %4200 = dma.done %s4195, 4096
        $region88: #{tpu_custom_call.1} parent=83 // pred_fallthru
          _
      $region84: #{tpu_custom_call.1} parent=5 // pred_fallthru
        _
    $region6: #{tpu_custom_call.1} parent=1 // loop_footer
      %s26 = sadd.s32 1, %s22
    $region7: #{tpu_custom_call.1} parent=1 // loop_footer_branch
      %21 = sbr.rel target = $region3
    $region8: #{tpu_custom_call.1} parent=1 // loop_exit
      _
    %4201 = vsyncpa [#allocation3], 1
    %s4202 = scalar_lea.sflag [#allocation3], 1
    %4203 = vsyncpa %s4202, 1
    %4204 = vsyncpa [#allocation6], 1
    %4205 = vsyncpa [#allocation9], 1
    %4206 = vsyncpa [#allocation12], 1
    %4207 = vsyncpa [#allocation4], 1
    %s4208 = scalar_lea.sflag [#allocation4], 1
    %4209 = vsyncpa %s4208, 1

</llo_original>
